<compile_context>
chip_gen: v5e
topology: v5e:2x2
jax: 0.10.0
libtpu: 0.0.40
codegen_flags: <defaults>
</compile_context>

<pallas_src>
import jax
import jax.numpy as jnp
from jax.experimental import pallas as pl
from jax.experimental.pallas import tpu as pltpu

OUT_DIM = 28 * 28        # 784
OUT_DIM_PAD = 896        # 7 * 128 — lane-dense output width


def _round_up(n, m):
    return (n + m - 1) // m * m


def _leaky_relu(x, slope=0.2):
    # max(x, slope*x) == LeakyReLU(slope) for 0 < slope < 1 (one VALU op fewer
    # than cmp+select).
    return jnp.maximum(x, slope * x)


def generator_kernel(x_ref,
                     w1_ref, b1_ref,
                     w2_ref, b2_ref,
                     w3_ref, b3_ref,
                     w4_ref, b4_ref,
                     o_ref):
    """Fused 4-layer MLP on one batch tile.

    x / weights are bf16 (MXU-native); biases, accumulation, tanh and the
    output are f32.
    """
    x = x_ref[...]  # already bf16 (cast once in the wrapper)

    h1 = jnp.dot(x, w1_ref[...], preferred_element_type=jnp.float32) + b1_ref[...]
    h1 = _leaky_relu(h1).astype(jnp.bfloat16)

    h2 = jnp.dot(h1, w2_ref[...], preferred_element_type=jnp.float32) + b2_ref[...]
    h2 = _leaky_relu(h2).astype(jnp.bfloat16)

    h3 = jnp.dot(h2, w3_ref[...], preferred_element_type=jnp.float32) + b3_ref[...]
    h3 = _leaky_relu(h3).astype(jnp.bfloat16)

    h4 = jnp.dot(h3, w4_ref[...], preferred_element_type=jnp.float32) + b4_ref[...]
    o_ref[...] = jnp.tanh(h4)


def prepare_generator_params(params):
    """One-time prep: cast weights to bf16, lane-pad last layer 784 -> 896.

    # TODO(synk): optional int8 (v5e/v6e) / fp8 (v7x) weight quantization for
    # the small-batch, weight-DMA-bound regime was not implemented (needs
    # per-channel scales + re-validated tolerances).
    """
    (w1, b1), (w2, b2), (w3, b3), (w4, b4) = params
    pad = OUT_DIM_PAD - w4.shape[1]
    w4p = jnp.pad(w4, ((0, 0), (0, pad)))
    b4p = jnp.pad(b4, ((0, 0), (0, pad)))
    return ((w1.astype(jnp.bfloat16), b1.astype(jnp.float32)),
            (w2.astype(jnp.bfloat16), b2.astype(jnp.float32)),
            (w3.astype(jnp.bfloat16), b3.astype(jnp.float32)),
            (w4p.astype(jnp.bfloat16), b4p.astype(jnp.float32)))


def generator_forward(x, prepared_params, *, tile_b=None):
    """x: (B, latent_dim). Returns (B, 1, 28, 28) f32."""
    (w1, b1), (w2, b2), (w3, b3), (w4, b4) = prepared_params
    B, latent = x.shape

    # ---- batch-tile selection -------------------------------------------
    B8 = _round_up(B, 8)
    if tile_b is None:
        # 256 fills a 256-row MXU pass on v6e/v7x; go to 512 for large batches.
        tile_b = 512 if B8 >= 1024 else 256
    TB = min(tile_b, B8)
    # Keep >= 2 batch tiles when the batch allows it so the "parallel" grid
    # axis can shard across v7x's two TensorCores (harmless on v5e/v6e).
    if B8 >= 16 and _round_up(B8, TB) // TB < 2:
        TB = _round_up((B8 + 1) // 2, 8)
    B_pad = _round_up(B8, TB)
    grid_b = B_pad // TB

    # Input streamed as bf16 (MXU consumes bf16 anyway) -> half the x DMA.
    x = x.astype(jnp.bfloat16)
    if B_pad != B:
        x = jnp.pad(x, ((0, B_pad - B), (0, 0)))

    # Weight / bias blocks are the full array with a constant index map, so
    # they are fetched once and stay resident in VMEM across batch tiles.
    def resident(shape):
        return pl.BlockSpec(shape, lambda i: tuple(0 for _ in shape))

    in_specs = [
        pl.BlockSpec((TB, latent), lambda i: (i, 0)),      # x: tiled over batch
        resident(w1.shape), resident(b1.shape),
        resident(w2.shape), resident(b2.shape),
        resident(w3.shape), resident(b3.shape),
        resident(w4.shape), resident(b4.shape),
    ]
    out_spec = pl.BlockSpec((TB, OUT_DIM_PAD), lambda i: (i, 0))

    # 32 MiB is v7x-safe and ample for TB <= 512; only very large tiles
    # (v5e/v6e, 128 MiB physical VMEM) need more.
    vmem_limit = (64 if TB >= 1024 else 32) * 1024 * 1024

    flat = pl.pallas_call(
        generator_kernel,
        out_shape=jax.ShapeDtypeStruct((B_pad, OUT_DIM_PAD), jnp.float32),
        grid_spec=pltpu.PrefetchScalarGridSpec(
            num_scalar_prefetch=0,
            grid=(grid_b,),
            in_specs=in_specs,
            out_specs=out_spec,
        ),
        compiler_params=pltpu.CompilerParams(
            dimension_semantics=("parallel",),     # shard batch tiles on v7x
            vmem_limit_bytes=vmem_limit,
        ),
    )(x, w1, b1, w2, b2, w3, b3, w4, b4)

    # Drop lane padding + batch padding; equivalent of torch .view(-1,1,28,28).
    return flat[:B, :OUT_DIM].reshape(B, 1, 28, 28)


def init_generator_params(key, latent_dim):
    """Deterministic init mimicking torch.nn.Linear default (Kaiming uniform)."""
    dims = [latent_dim, 256, 512, 1024, OUT_DIM]
    params = []
    for i in range(4):
        fan_in, fan_out = dims[i], dims[i + 1]
        key, kw, kb = jax.random.split(key, 3)
        bound = 1.0 / jnp.sqrt(jnp.float32(fan_in))
        # Stored as (in, out): transpose of PyTorch's (out, in) weight.
        w = jax.random.uniform(kw, (fan_in, fan_out), jnp.float32, -bound, bound)
        b = jax.random.uniform(kb, (1, fan_out), jnp.float32, -bound, bound)
        params.append((w, b))
    return params


if __name__ == "__main__":
    latent_dim = 64
    batch = 8

    key = jax.random.PRNGKey(0)
    key_x, key_p = jax.random.split(key)

    params = init_generator_params(key_p, latent_dim)
    prepared = prepare_generator_params(params)
    x = jax.random.normal(key_x, (batch, latent_dim), dtype=jnp.float32)

    out = generator_forward(x, prepared)
    out = jax.block_until_ready(out)

    # Reference 1: same math with bf16 weight/activation streaming (tight tol).
    def ref_forward_bf16(x, params):
        h = x
        for i, (w, b) in enumerate(params):
            h = jnp.dot(h.astype(jnp.bfloat16), w.astype(jnp.bfloat16),
                        preferred_element_type=jnp.float32) + b
            h = jnp.where(h > 0, h, 0.2 * h) if i < 3 else jnp.tanh(h)
        return h.reshape(-1, 1, 28, 28)

    # Reference 2: full-f32 math (loose tol — bf16 streaming quantization).
    def ref_forward_f32(x, params):
        h = x
        for i, (w, b) in enumerate(params):
            h = h @ w + b
            h = jnp.where(h > 0, h, 0.2 * h) if i < 3 else jnp.tanh(h)
        return h.reshape(-1, 1, 28, 28)

    ref_bf16 = ref_forward_bf16(x, params)
    ref_f32 = ref_forward_f32(x, params)

    assert out.shape == (batch, 1, 28, 28), out.shape
    assert out.dtype == jnp.float32
    assert bool(jnp.all(jnp.isfinite(out)))
    assert float(jnp.max(jnp.abs(out - ref_bf16))) < 5e-3
    assert float(jnp.max(jnp.abs(out - ref_f32))) < 5e-2

    # Sanity-check the tiling path with a larger batch (multi-tile grid).
    x_big = jax.random.normal(key_x, (300, latent_dim), dtype=jnp.float32)
    out_big = jax.block_until_ready(generator_forward(x_big, prepared))
    ref_big = ref_forward_bf16(x_big, params)
    assert out_big.shape == (300, 1, 28, 28)
    assert float(jnp.max(jnp.abs(out_big - ref_big))) < 5e-3

    print("KERNEL_OK")
</pallas_src>

<mosaic_0001>
module attributes {stable_mosaic.version = 11 : i64} {
  func.func @generator_kernel(%arg0: i32, %arg1: memref<8x64xbf16, #tpu.memory_space<vmem>>, %arg2: memref<64x256xbf16, #tpu.memory_space<vmem>>, %arg3: memref<1x256xf32, #tpu.memory_space<vmem>>, %arg4: memref<256x512xbf16, #tpu.memory_space<vmem>>, %arg5: memref<1x512xf32, #tpu.memory_space<vmem>>, %arg6: memref<512x1024xbf16, #tpu.memory_space<vmem>>, %arg7: memref<1x1024xf32, #tpu.memory_space<vmem>>, %arg8: memref<1024x896xbf16, #tpu.memory_space<vmem>>, %arg9: memref<1x896xf32, #tpu.memory_space<vmem>>, %arg10: memref<8x896xf32, #tpu.memory_space<vmem>>) attributes {dimension_semantics = [#tpu.dimension_semantics<parallel>], iteration_bounds = array<i64: 1>, scalar_prefetch = 0 : i64, scratch_operands = 0 : i64, tpu.core_type = #tpu.core_type<tc>, window_params = [{transform_indices = @transform_0, window_bounds = array<i64: 8, 64>}, {pipeline_mode = #tpu.pipeline_mode<synchronous>, transform_indices = @transform_1, window_bounds = array<i64: 64, 256>}, {pipeline_mode = #tpu.pipeline_mode<synchronous>, transform_indices = @transform_2, window_bounds = array<i64: 1, 256>}, {pipeline_mode = #tpu.pipeline_mode<synchronous>, transform_indices = @transform_3, window_bounds = array<i64: 256, 512>}, {pipeline_mode = #tpu.pipeline_mode<synchronous>, transform_indices = @transform_4, window_bounds = array<i64: 1, 512>}, {pipeline_mode = #tpu.pipeline_mode<synchronous>, transform_indices = @transform_5, window_bounds = array<i64: 512, 1024>}, {pipeline_mode = #tpu.pipeline_mode<synchronous>, transform_indices = @transform_6, window_bounds = array<i64: 1, 1024>}, {pipeline_mode = #tpu.pipeline_mode<synchronous>, transform_indices = @transform_7, window_bounds = array<i64: 1024, 896>}, {pipeline_mode = #tpu.pipeline_mode<synchronous>, transform_indices = @transform_8, window_bounds = array<i64: 1, 896>}, {transform_indices = @transform_9, window_bounds = array<i64: 8, 896>}]} {
    %c0 = arith.constant 0 : index
    %c0_0 = arith.constant 0 : index
    %0 = vector.load %arg1[%c0, %c0_0] : memref<8x64xbf16, #tpu.memory_space<vmem>>, vector<8x64xbf16>
    %c0_1 = arith.constant 0 : index
    %c0_2 = arith.constant 0 : index
    %1 = vector.load %arg2[%c0_1, %c0_2] : memref<64x256xbf16, #tpu.memory_space<vmem>>, vector<64x256xbf16>
    %cst = arith.constant dense<0.000000e+00> : vector<8x256xf32>
    %2 = tpu.matmul %0, %1, %cst {dimension_numbers = #tpu.dot_dimension_numbers<[1], [0], [0], [1], [0, 0, 1, 1], [], []>} : vector<8x64xbf16>, vector<64x256xbf16>, vector<8x256xf32> -> vector<8x256xf32>
    %c0_3 = arith.constant 0 : index
    %c0_4 = arith.constant 0 : index
    %3 = vector.load %arg3[%c0_3, %c0_4] : memref<1x256xf32, #tpu.memory_space<vmem>>, vector<1x256xf32>
    %4 = vector.broadcast %3 : vector<1x256xf32> to vector<8x256xf32>
    %5 = arith.addf %2, %4 : vector<8x256xf32>
    %cst_5 = arith.constant 2.000000e-01 : f32
    %6 = vector.broadcast %cst_5 : f32 to vector<8x256xf32>
    %7 = arith.mulf %6, %5 : vector<8x256xf32>
    %8 = arith.maximumf %5, %7 : vector<8x256xf32>
    %9 = arith.truncf %8 : vector<8x256xf32> to vector<8x256xbf16>
    %c0_6 = arith.constant 0 : index
    %c0_7 = arith.constant 0 : index
    %10 = vector.load %arg4[%c0_6, %c0_7] : memref<256x512xbf16, #tpu.memory_space<vmem>>, vector<256x512xbf16>
    %cst_8 = arith.constant dense<0.000000e+00> : vector<8x512xf32>
    %11 = tpu.matmul %9, %10, %cst_8 {dimension_numbers = #tpu.dot_dimension_numbers<[1], [0], [0], [1], [0, 0, 1, 1], [], []>} : vector<8x256xbf16>, vector<256x512xbf16>, vector<8x512xf32> -> vector<8x512xf32>
    %c0_9 = arith.constant 0 : index
    %c0_10 = arith.constant 0 : index
    %12 = vector.load %arg5[%c0_9, %c0_10] : memref<1x512xf32, #tpu.memory_space<vmem>>, vector<1x512xf32>
    %13 = vector.broadcast %12 : vector<1x512xf32> to vector<8x512xf32>
    %14 = arith.addf %11, %13 : vector<8x512xf32>
    %cst_11 = arith.constant 2.000000e-01 : f32
    %15 = vector.broadcast %cst_11 : f32 to vector<8x512xf32>
    %16 = arith.mulf %15, %14 : vector<8x512xf32>
    %17 = arith.maximumf %14, %16 : vector<8x512xf32>
    %18 = arith.truncf %17 : vector<8x512xf32> to vector<8x512xbf16>
    %c0_12 = arith.constant 0 : index
    %c0_13 = arith.constant 0 : index
    %19 = vector.load %arg6[%c0_12, %c0_13] : memref<512x1024xbf16, #tpu.memory_space<vmem>>, vector<512x1024xbf16>
    %cst_14 = arith.constant dense<0.000000e+00> : vector<8x1024xf32>
    %20 = tpu.matmul %18, %19, %cst_14 {dimension_numbers = #tpu.dot_dimension_numbers<[1], [0], [0], [1], [0, 0, 1, 1], [], []>} : vector<8x512xbf16>, vector<512x1024xbf16>, vector<8x1024xf32> -> vector<8x1024xf32>
    %c0_15 = arith.constant 0 : index
    %c0_16 = arith.constant 0 : index
    %21 = vector.load %arg7[%c0_15, %c0_16] : memref<1x1024xf32, #tpu.memory_space<vmem>>, vector<1x1024xf32>
    %22 = vector.broadcast %21 : vector<1x1024xf32> to vector<8x1024xf32>
    %23 = arith.addf %20, %22 : vector<8x1024xf32>
    %cst_17 = arith.constant 2.000000e-01 : f32
    %24 = vector.broadcast %cst_17 : f32 to vector<8x1024xf32>
    %25 = arith.mulf %24, %23 : vector<8x1024xf32>
    %26 = arith.maximumf %23, %25 : vector<8x1024xf32>
    %27 = arith.truncf %26 : vector<8x1024xf32> to vector<8x1024xbf16>
    %c0_18 = arith.constant 0 : index
    %c0_19 = arith.constant 0 : index
    %28 = vector.load %arg8[%c0_18, %c0_19] : memref<1024x896xbf16, #tpu.memory_space<vmem>>, vector<1024x896xbf16>
    %cst_20 = arith.constant dense<0.000000e+00> : vector<8x896xf32>
    %29 = tpu.matmul %27, %28, %cst_20 {dimension_numbers = #tpu.dot_dimension_numbers<[1], [0], [0], [1], [0, 0, 1, 1], [], []>} : vector<8x1024xbf16>, vector<1024x896xbf16>, vector<8x896xf32> -> vector<8x896xf32>
    %c0_21 = arith.constant 0 : index
    %c0_22 = arith.constant 0 : index
    %30 = vector.load %arg9[%c0_21, %c0_22] : memref<1x896xf32, #tpu.memory_space<vmem>>, vector<1x896xf32>
    %31 = vector.broadcast %30 : vector<1x896xf32> to vector<8x896xf32>
    %32 = arith.addf %29, %31 : vector<8x896xf32>
    %33 = math.tanh %32 : vector<8x896xf32>
    %c0_23 = arith.constant 0 : index
    %c0_24 = arith.constant 0 : index
    %34 = vector.load %arg10[%c0_23, %c0_24] : memref<8x896xf32, #tpu.memory_space<vmem>>, vector<8x896xf32>
    tpu.vector_store %arg10[%c0_23, %c0_24], %33 {strides = array<i32>} : memref<8x896xf32, #tpu.memory_space<vmem>>, vector<8x896xf32>,
    return
  }
  func.func @transform_0(%arg0: i32) -> (i32, i32) {
    %c0_i32 = arith.constant 0 : i32
    %c0_i32_0 = arith.constant 0 : i32
    return %arg0, %c0_i32 : i32, i32
  }
  func.func @transform_1(%arg0: i32) -> (i32, i32) {
    %c0_i32 = arith.constant 0 : i32
    %c0_i32_0 = arith.constant 0 : i32
    %c0_i32_1 = arith.constant 0 : i32
    return %c0_i32, %c0_i32_0 : i32, i32
  }
  func.func @transform_2(%arg0: i32) -> (i32, i32) {
    %c0_i32 = arith.constant 0 : i32
    %c0_i32_0 = arith.constant 0 : i32
    %c0_i32_1 = arith.constant 0 : i32
    return %c0_i32, %c0_i32_0 : i32, i32
  }
  func.func @transform_3(%arg0: i32) -> (i32, i32) {
    %c0_i32 = arith.constant 0 : i32
    %c0_i32_0 = arith.constant 0 : i32
    %c0_i32_1 = arith.constant 0 : i32
    return %c0_i32, %c0_i32_0 : i32, i32
  }
  func.func @transform_4(%arg0: i32) -> (i32, i32) {
    %c0_i32 = arith.constant 0 : i32
    %c0_i32_0 = arith.constant 0 : i32
    %c0_i32_1 = arith.constant 0 : i32
    return %c0_i32, %c0_i32_0 : i32, i32
  }
  func.func @transform_5(%arg0: i32) -> (i32, i32) {
    %c0_i32 = arith.constant 0 : i32
    %c0_i32_0 = arith.constant 0 : i32
    %c0_i32_1 = arith.constant 0 : i32
    return %c0_i32, %c0_i32_0 : i32, i32
  }
  func.func @transform_6(%arg0: i32) -> (i32, i32) {
    %c0_i32 = arith.constant 0 : i32
    %c0_i32_0 = arith.constant 0 : i32
    %c0_i32_1 = arith.constant 0 : i32
    return %c0_i32, %c0_i32_0 : i32, i32
  }
  func.func @transform_7(%arg0: i32) -> (i32, i32) {
    %c0_i32 = arith.constant 0 : i32
    %c0_i32_0 = arith.constant 0 : i32
    %c0_i32_1 = arith.constant 0 : i32
    return %c0_i32, %c0_i32_0 : i32, i32
  }
  func.func @transform_8(%arg0: i32) -> (i32, i32) {
    %c0_i32 = arith.constant 0 : i32
    %c0_i32_0 = arith.constant 0 : i32
    %c0_i32_1 = arith.constant 0 : i32
    return %c0_i32, %c0_i32_0 : i32, i32
  }
  func.func @transform_9(%arg0: i32) -> (i32, i32) {
    %c0_i32 = arith.constant 0 : i32
    %c0_i32_0 = arith.constant 0 : i32
    return %arg0, %c0_i32 : i32, i32
  }
}

</mosaic_0001>

<llo_original>
// kernel: tpu_custom_call.1
$region0: #{tpu_custom_call.1}
  #allocation0 [shape = 'u32[]', space=smem, size = 0x4, offset = 0x4, fixed_abs, tag = 'smem constant byte address 0x4 - core index']
  #allocation1 [shape = 'u32[72,128]{1,0:T(1,128)}', space=vmem, size = 0x9000, scoped, tag = 'internal scratch']
  %s0 = inlined_call_operand.hbm [shape: bf16[8,64], index: 0, kind: input, shape index: {}]
  %s1 = inlined_call_operand.hbm [shape: bf16[64,256], index: 1, kind: input, shape index: {}]
  %s2 = inlined_call_operand.hbm [shape: f32[1,256], index: 2, kind: input, shape index: {}]
  %s3 = inlined_call_operand.hbm [shape: bf16[256,512], index: 3, kind: input, shape index: {}]
  %s4 = inlined_call_operand.hbm [shape: f32[1,512], index: 4, kind: input, shape index: {}]
  %s5 = inlined_call_operand.hbm [shape: bf16[512,1024], index: 5, kind: input, shape index: {}]
  %s6 = inlined_call_operand.hbm [shape: f32[1,1024], index: 6, kind: input, shape index: {}]
  %s7 = inlined_call_operand.hbm [shape: bf16[1024,896], index: 7, kind: input, shape index: {}]
  %s8 = inlined_call_operand.hbm [shape: f32[1,896], index: 8, kind: input, shape index: {}]
  %s9 = inlined_call_operand.hbm [shape: f32[8,896], index: 9, kind: output, shape index: {}]
  %s10 = sld [smem:[#allocation0]]
  $region82: #{tpu_custom_call.1} parent=0
    _
  %s12 = ssub.s32 1, %s10
  %s13 = scalar_select 0, %s12, %s10
  $region1: #{tpu_custom_call.1} parent=0
    #allocation2 [shape = 'u8[2048]{0}', space=vmem, size = 0x800, scoped, tag = 'input window, operand 0, single buffered']
    #allocation3 [shape = 's32[1]{0}', space=sflag, size = 0x4, scoped, tag = 'scoped memory for tpu_custom_call.1']
    #allocation4 [shape = 's32[1]{0}', space=sflag, size = 0x4, scoped, tag = 'scoped memory for tpu_custom_call.1']
    #allocation5 [shape = 'u8[32768]{0}', space=vmem, size = 0x8000, scoped, tag = 'input window, operand 1, single buffered']
    #allocation6 [shape = 's32[1]{0}', space=sflag, size = 0x4, scoped, tag = 'scoped memory for tpu_custom_call.1']
    #allocation7 [shape = 'u8[1024]{0}', space=vmem, size = 0x400, scoped, tag = 'input window, operand 2, single buffered']
    #allocation8 [shape = 'u8[262144]{0}', space=vmem, size = 0x40000, scoped, tag = 'input window, operand 3, single buffered']
    #allocation9 [shape = 's32[1]{0}', space=sflag, size = 0x4, scoped, tag = 'scoped memory for tpu_custom_call.1']
    #allocation10 [shape = 'u8[2048]{0}', space=vmem, size = 0x800, scoped, tag = 'input window, operand 4, single buffered']
    #allocation11 [shape = 'u8[1048576]{0}', space=vmem, size = 0x100000, scoped, tag = 'input window, operand 5, single buffered']
    #allocation12 [shape = 's32[1]{0}', space=sflag, size = 0x4, scoped, tag = 'scoped memory for tpu_custom_call.1']
    #allocation13 [shape = 'u8[4096]{0}', space=vmem, size = 0x1000, scoped, tag = 'input window, operand 6, single buffered']
    #allocation14 [shape = 'u8[1835008]{0}', space=vmem, size = 0x1c0000, scoped, tag = 'input window, operand 7, single buffered']
    #allocation15 [shape = 's32[1]{0}', space=sflag, size = 0x4, scoped, tag = 'scoped memory for tpu_custom_call.1']
    #allocation16 [shape = 'u8[3584]{0}', space=vmem, size = 0x1000, scoped, tag = 'input window, operand 8, single buffered']
    #allocation17 [shape = 'u8[28672]{0}', space=vmem, size = 0x7000, scoped, tag = 'output window, operand 0, single buffered']
    %14 = vsyncpa [#allocation3], 0
    %15 = vsyncpa [#allocation6], 0
    %16 = vsyncpa [#allocation9], 0
    %17 = vsyncpa [#allocation12], 0
    %18 = vsyncpa [#allocation15], 0
    %19 = vsyncpa [#allocation4], 0
    // Predicated region
    $region2: #{tpu_custom_call.1} parent=1 // pred_check
      _
    $region3: #{tpu_custom_call.1} parent=1 // pred_check_branch
      %21 = sbr.rel (0) target = $region5
    $region4: #{tpu_custom_call.1} parent=1 // pred_region
      %23 = vsyncadd [#allocation3], 0
      %s25 = sshll.u32 %s0, 4
      %s26 = int_to_ptr.hbm [resolvable:$true] %s25
      %s27 = sshll.u32 [#allocation2], 4
      %s28 = int_to_ptr.vmem [resolvable:$true] %s27
      %30 = dma.hbm_to_vmem [thread:$0]  %s26, 64, %s28, [#allocation3]
    $region5: #{tpu_custom_call.1} parent=1 // pred_fallthru
      _
    // Predicated region
    $region6: #{tpu_custom_call.1} parent=1 // pred_check
      _
    $region7: #{tpu_custom_call.1} parent=1 // pred_check_branch
      %32 = sbr.rel (0) target = $region9
    $region8: #{tpu_custom_call.1} parent=1 // pred_region
      %34 = vsyncadd [#allocation6], 0
      %s35 = sshll.u32 %s1, 4
      %s36 = int_to_ptr.hbm [resolvable:$true] %s35
      %s37 = sshll.u32 [#allocation5], 4
      %s38 = int_to_ptr.vmem [resolvable:$true] %s37
      %43 = dma.hbm_to_vmem [thread:$0]  %s36, 1024, %s38, [#allocation6], 128, 128, 8
    $region9: #{tpu_custom_call.1} parent=1 // pred_fallthru
      _
    // Predicated region
    $region10: #{tpu_custom_call.1} parent=1 // pred_check
      _
    $region11: #{tpu_custom_call.1} parent=1 // pred_check_branch
      %45 = sbr.rel (0) target = $region13
    $region12: #{tpu_custom_call.1} parent=1 // pred_region
      %47 = vsyncadd [#allocation6], 0
      %s49 = sshll.u32 %s2, 4
      %s50 = int_to_ptr.hbm [resolvable:$true] %s49
      %s51 = sshll.u32 [#allocation7], 4
      %s52 = int_to_ptr.vmem [resolvable:$true] %s51
      %54 = dma.hbm_to_vmem [thread:$0]  %s50, 32, %s52, [#allocation6]
    $region13: #{tpu_custom_call.1} parent=1 // pred_fallthru
      _
    // Predicated region
    $region14: #{tpu_custom_call.1} parent=1 // pred_check
      _
    $region15: #{tpu_custom_call.1} parent=1 // pred_check_branch
      %56 = sbr.rel (0) target = $region17
    $region16: #{tpu_custom_call.1} parent=1 // pred_region
      %58 = vsyncadd [#allocation9], 0
      %s59 = sshll.u32 %s3, 4
      %s60 = int_to_ptr.hbm [resolvable:$true] %s59
      %s61 = sshll.u32 [#allocation8], 4
      %s62 = int_to_ptr.vmem [resolvable:$true] %s61
      %67 = dma.hbm_to_vmem [thread:$0]  %s60, 8192, %s62, [#allocation9], 256, 256, 16
    $region17: #{tpu_custom_call.1} parent=1 // pred_fallthru
      _
    // Predicated region
    $region18: #{tpu_custom_call.1} parent=1 // pred_check
      _
    $region19: #{tpu_custom_call.1} parent=1 // pred_check_branch
      %69 = sbr.rel (0) target = $region21
    $region20: #{tpu_custom_call.1} parent=1 // pred_region
      %71 = vsyncadd [#allocation9], 0
      %s73 = sshll.u32 %s4, 4
      %s74 = int_to_ptr.hbm [resolvable:$true] %s73
      %s75 = sshll.u32 [#allocation10], 4
      %s76 = int_to_ptr.vmem [resolvable:$true] %s75
      %78 = dma.hbm_to_vmem [thread:$0]  %s74, 64, %s76, [#allocation9]
    $region21: #{tpu_custom_call.1} parent=1 // pred_fallthru
      _
    // Predicated region
    $region22: #{tpu_custom_call.1} parent=1 // pred_check
      _
    $region23: #{tpu_custom_call.1} parent=1 // pred_check_branch
      %80 = sbr.rel (0) target = $region25
    $region24: #{tpu_custom_call.1} parent=1 // pred_region
      %82 = vsyncadd [#allocation12], 0
      %s83 = sshll.u32 %s5, 4
      %s84 = int_to_ptr.hbm [resolvable:$true] %s83
      %s85 = sshll.u32 [#allocation11], 4
      %s86 = int_to_ptr.vmem [resolvable:$true] %s85
      %91 = dma.hbm_to_vmem [thread:$0]  %s84, 32768, %s86, [#allocation12], 512, 512, 32
    $region25: #{tpu_custom_call.1} parent=1 // pred_fallthru
      _
    // Predicated region
    $region26: #{tpu_custom_call.1} parent=1 // pred_check
      _
    $region27: #{tpu_custom_call.1} parent=1 // pred_check_branch
      %93 = sbr.rel (0) target = $region29
    $region28: #{tpu_custom_call.1} parent=1 // pred_region
      %95 = vsyncadd [#allocation12], 0
      %s97 = sshll.u32 %s6, 4
      %s98 = int_to_ptr.hbm [resolvable:$true] %s97
      %s99 = sshll.u32 [#allocation13], 4
      %s100 = int_to_ptr.vmem [resolvable:$true] %s99
      %102 = dma.hbm_to_vmem [thread:$0]  %s98, 128, %s100, [#allocation12]
    $region29: #{tpu_custom_call.1} parent=1 // pred_fallthru
      _
    // Predicated region
    $region30: #{tpu_custom_call.1} parent=1 // pred_check
      _
    $region31: #{tpu_custom_call.1} parent=1 // pred_check_branch
      %104 = sbr.rel (0) target = $region33
    $region32: #{tpu_custom_call.1} parent=1 // pred_region
      %106 = vsyncadd [#allocation15], 0
      %s107 = sshll.u32 %s7, 4
      %s108 = int_to_ptr.hbm [resolvable:$true] %s107
      %s109 = sshll.u32 [#allocation14], 4
      %s110 = int_to_ptr.vmem [resolvable:$true] %s109
      %115 = dma.hbm_to_vmem [thread:$0]  %s108, 57344, %s110, [#allocation15], 448, 448, 28
    $region33: #{tpu_custom_call.1} parent=1 // pred_fallthru
      _
    // Predicated region
    $region34: #{tpu_custom_call.1} parent=1 // pred_check
      _
    $region35: #{tpu_custom_call.1} parent=1 // pred_check_branch
      %117 = sbr.rel (0) target = $region37
    $region36: #{tpu_custom_call.1} parent=1 // pred_region
      %119 = vsyncadd [#allocation15], 0
      %s121 = sshll.u32 %s8, 4
      %s122 = int_to_ptr.hbm [resolvable:$true] %s121
      %s123 = sshll.u32 [#allocation16], 4
      %s124 = int_to_ptr.vmem [resolvable:$true] %s123
      %126 = dma.hbm_to_vmem [thread:$0]  %s122, 112, %s124, [#allocation15]
    $region37: #{tpu_custom_call.1} parent=1 // pred_fallthru
      _
    // Predicated region
    $region38: #{tpu_custom_call.1} parent=1 // pred_check
      _
    $region39: #{tpu_custom_call.1} parent=1 // pred_check_branch
      %128 = sbr.rel (0) target = $region41
    $region40: #{tpu_custom_call.1} parent=1 // pred_region
      %130 = dma.done [#allocation3], 64
    $region41: #{tpu_custom_call.1} parent=1 // pred_fallthru
      _
    // Predicated region
    $region42: #{tpu_custom_call.1} parent=1 // pred_check
      _
    $region43: #{tpu_custom_call.1} parent=1 // pred_check_branch
      %132 = sbr.rel (0) target = $region45
    $region44: #{tpu_custom_call.1} parent=1 // pred_region
      %134 = dma.done [#allocation6], 1024
    $region45: #{tpu_custom_call.1} parent=1 // pred_fallthru
      _
    // Predicated region
    $region46: #{tpu_custom_call.1} parent=1 // pred_check
      _
    $region47: #{tpu_custom_call.1} parent=1 // pred_check_branch
      %136 = sbr.rel (0) target = $region49
    $region48: #{tpu_custom_call.1} parent=1 // pred_region
      %138 = dma.done [#allocation6], 32
    $region49: #{tpu_custom_call.1} parent=1 // pred_fallthru
      _
    // Predicated region
    $region50: #{tpu_custom_call.1} parent=1 // pred_check
      _
    $region51: #{tpu_custom_call.1} parent=1 // pred_check_branch
      %140 = sbr.rel (0) target = $region53
    $region52: #{tpu_custom_call.1} parent=1 // pred_region
      %142 = dma.done [#allocation9], 8192
    $region53: #{tpu_custom_call.1} parent=1 // pred_fallthru
      _
    // Predicated region
    $region54: #{tpu_custom_call.1} parent=1 // pred_check
      _
    $region55: #{tpu_custom_call.1} parent=1 // pred_check_branch
      %144 = sbr.rel (0) target = $region57
    $region56: #{tpu_custom_call.1} parent=1 // pred_region
      %146 = dma.done [#allocation9], 64
    $region57: #{tpu_custom_call.1} parent=1 // pred_fallthru
      _
    // Predicated region
    $region58: #{tpu_custom_call.1} parent=1 // pred_check
      _
    $region59: #{tpu_custom_call.1} parent=1 // pred_check_branch
      %148 = sbr.rel (0) target = $region61
    $region60: #{tpu_custom_call.1} parent=1 // pred_region
      %150 = dma.done [#allocation12], 32768
    $region61: #{tpu_custom_call.1} parent=1 // pred_fallthru
      _
    // Predicated region
    $region62: #{tpu_custom_call.1} parent=1 // pred_check
      _
    $region63: #{tpu_custom_call.1} parent=1 // pred_check_branch
      %152 = sbr.rel (0) target = $region65
    $region64: #{tpu_custom_call.1} parent=1 // pred_region
      %154 = dma.done [#allocation12], 128
    $region65: #{tpu_custom_call.1} parent=1 // pred_fallthru
      _
    // Predicated region
    $region66: #{tpu_custom_call.1} parent=1 // pred_check
      _
    $region67: #{tpu_custom_call.1} parent=1 // pred_check_branch
      %156 = sbr.rel (0) target = $region69
    $region68: #{tpu_custom_call.1} parent=1 // pred_region
      %158 = dma.done [#allocation15], 57344
    $region69: #{tpu_custom_call.1} parent=1 // pred_fallthru
      _
    // Predicated region
    $region70: #{tpu_custom_call.1} parent=1 // pred_check
      _
    $region71: #{tpu_custom_call.1} parent=1 // pred_check_branch
      %160 = sbr.rel (0) target = $region73
    $region72: #{tpu_custom_call.1} parent=1 // pred_region
      %162 = dma.done [#allocation15], 112
    $region73: #{tpu_custom_call.1} parent=1 // pred_fallthru
      _
    %v164 = vld [vmem:[#allocation2] sm:$0xf]
    %v165 = vld [vmem:[#allocation5] sm:$0xff]
    %v166 = vld [vmem:[#allocation5 + $0x8] sm:$0xff]
    %v167 = vld [vmem:[#allocation5 + $0x10] sm:$0xff]
    %v168 = vld [vmem:[#allocation5 + $0x18] sm:$0xff]
    %v169 = vld [vmem:[#allocation5 + $0x20] sm:$0xff]
    %v170 = vld [vmem:[#allocation5 + $0x28] sm:$0xff]
    %v171 = vld [vmem:[#allocation5 + $0x30] sm:$0xff]
    %v172 = vld [vmem:[#allocation5 + $0x38] sm:$0xff]
    %v173 = vld [vmem:[#allocation7] sm:$0x3]
    %v175 = vperm.slane %v173, 0
    %v176 = vperm.slane %v173, 1
    %v187 = vunpack.c.l.b16 %v165
    %v188 = vunpack.c.h.b16 %v165
    %v189 = vunpack.c.l.b16 %v166
    %v190 = vunpack.c.h.b16 %v166
    %v191 = vunpack.c.l.b16 %v167
    %v192 = vunpack.c.h.b16 %v167
    %v193 = vunpack.c.l.b16 %v168
    %v194 = vunpack.c.h.b16 %v168
    %v195 = vunpack.c.l.b16 %v169
    %v196 = vunpack.c.h.b16 %v169
    %v197 = vunpack.c.l.b16 %v170
    %v198 = vunpack.c.h.b16 %v170
    %v199 = vunpack.c.l.b16 %v171
    %v200 = vunpack.c.h.b16 %v171
    %v201 = vunpack.c.l.b16 %v172
    %v202 = vunpack.c.h.b16 %v172
    %v203 = vpack.c.b16 %v189, %v187
    %v204 = vpack.c.b16 %v190, %v188
    %v205 = vpack.c.b16 %v193, %v191
    %v206 = vpack.c.b16 %v194, %v192
    %v207 = vpack.c.b16 %v197, %v195
    %v208 = vpack.c.b16 %v198, %v196
    %v209 = vpack.c.b16 %v201, %v199
    %v210 = vpack.c.b16 %v202, %v200
    %vm219 = vcmask 523264
    %v221 = vsel %vm219, %v164, 0
    %223 = vmatpush.bf16.msra.mxu0 0
    %224 = vmatpush.bf16.msra.mxu0 0
    %225 = vmatpush.bf16.msra.mxu0 0
    %226 = vmatpush.bf16.msra.mxu0 0
    %227 = vmatpush.bf16.msra.mxu0 %v209
    %228 = vmatpush.bf16.msra.mxu0 %v207
    %229 = vmatpush.bf16.msra.mxu0 %v205
    %230 = vmatpush.bf16.msra.mxu0 %v203
    %231 = vmatmul.bf16.gmra.mxu0 %v221
    %v232 = vpop.f32.mrf.mxu0
    %v233 = vadd.f32 %v175, %v232
    %v234 = vpop.f32.mrf.mxu0
    %235 = vdwg.mxu0
    %236 = vmatpush.bf16.msra.mxu0 0
    %237 = vmatpush.bf16.msra.mxu0 0
    %238 = vmatpush.bf16.msra.mxu0 0
    %239 = vmatpush.bf16.msra.mxu0 0
    %240 = vmatpush.bf16.msra.mxu0 %v210
    %241 = vmatpush.bf16.msra.mxu0 %v208
    %242 = vmatpush.bf16.msra.mxu0 %v206
    %243 = vmatpush.bf16.msra.mxu0 %v204
    %244 = vmatmul.bf16.gmra.mxu0 %v221
    %v245 = vpop.f32.mrf.mxu0
    %v246 = vadd.f32 %v176, %v245
    %v247 = vpop.f32.mrf.mxu0
    %248 = vdwg.mxu0
    %v249 = vmul.f32 %v233, 0.2
    %v250 = vmul.f32 %v246, 0.2
    %v251 = vmax.f32 %v233, %v249
    %v252 = vmax.f32 %v246, %v250
    %v253 = vpack.c.bf16 %v251, %v251
    %v254 = vpack.c.bf16 %v252, %v252
    %v255 = vld [vmem:[#allocation8] sm:$0xff]
    %v256 = vld [vmem:[#allocation8 + $0x8] sm:$0xff]
    %v257 = vld [vmem:[#allocation8 + $0x10] sm:$0xff]
    %v258 = vld [vmem:[#allocation8 + $0x18] sm:$0xff]
    %v259 = vld [vmem:[#allocation8 + $0x20] sm:$0xff]
    %v260 = vld [vmem:[#allocation8 + $0x28] sm:$0xff]
    %v261 = vld [vmem:[#allocation8 + $0x30] sm:$0xff]
    %v262 = vld [vmem:[#allocation8 + $0x38] sm:$0xff]
    %v263 = vld [vmem:[#allocation8 + $0x40] sm:$0xff]
    %v264 = vld [vmem:[#allocation8 + $0x48] sm:$0xff]
    %v265 = vld [vmem:[#allocation8 + $0x50] sm:$0xff]
    %v266 = vld [vmem:[#allocation8 + $0x58] sm:$0xff]
    %v267 = vld [vmem:[#allocation8 + $0x60] sm:$0xff]
    %v268 = vld [vmem:[#allocation8 + $0x68] sm:$0xff]
    %v269 = vld [vmem:[#allocation8 + $0x70] sm:$0xff]
    %v270 = vld [vmem:[#allocation8 + $0x78] sm:$0xff]
    %v271 = vld [vmem:[#allocation8 + $0x80] sm:$0xff]
    %v272 = vld [vmem:[#allocation8 + $0x88] sm:$0xff]
    %v273 = vld [vmem:[#allocation8 + $0x90] sm:$0xff]
    %v274 = vld [vmem:[#allocation8 + $0x98] sm:$0xff]
    %v275 = vld [vmem:[#allocation8 + $0xa0] sm:$0xff]
    %v276 = vld [vmem:[#allocation8 + $0xa8] sm:$0xff]
    %v277 = vld [vmem:[#allocation8 + $0xb0] sm:$0xff]
    %v278 = vld [vmem:[#allocation8 + $0xb8] sm:$0xff]
    %v279 = vld [vmem:[#allocation8 + $0xc0] sm:$0xff]
    %v280 = vld [vmem:[#allocation8 + $0xc8] sm:$0xff]
    %v281 = vld [vmem:[#allocation8 + $0xd0] sm:$0xff]
    %v282 = vld [vmem:[#allocation8 + $0xd8] sm:$0xff]
    %v283 = vld [vmem:[#allocation8 + $0xe0] sm:$0xff]
    %v284 = vld [vmem:[#allocation8 + $0xe8] sm:$0xff]
    %v285 = vld [vmem:[#allocation8 + $0xf0] sm:$0xff]
    %v286 = vld [vmem:[#allocation8 + $0xf8] sm:$0xff]
    %v287 = vld [vmem:[#allocation8 + $0x100] sm:$0xff]
    %v288 = vld [vmem:[#allocation8 + $0x108] sm:$0xff]
    %v289 = vld [vmem:[#allocation8 + $0x110] sm:$0xff]
    %v290 = vld [vmem:[#allocation8 + $0x118] sm:$0xff]
    %v291 = vld [vmem:[#allocation8 + $0x120] sm:$0xff]
    %v292 = vld [vmem:[#allocation8 + $0x128] sm:$0xff]
    %v293 = vld [vmem:[#allocation8 + $0x130] sm:$0xff]
    %v294 = vld [vmem:[#allocation8 + $0x138] sm:$0xff]
    %v295 = vld [vmem:[#allocation8 + $0x140] sm:$0xff]
    %v296 = vld [vmem:[#allocation8 + $0x148] sm:$0xff]
    %v297 = vld [vmem:[#allocation8 + $0x150] sm:$0xff]
    %v298 = vld [vmem:[#allocation8 + $0x158] sm:$0xff]
    %v299 = vld [vmem:[#allocation8 + $0x160] sm:$0xff]
    %v300 = vld [vmem:[#allocation8 + $0x168] sm:$0xff]
    %v301 = vld [vmem:[#allocation8 + $0x170] sm:$0xff]
    %v302 = vld [vmem:[#allocation8 + $0x178] sm:$0xff]
    %v303 = vld [vmem:[#allocation8 + $0x180] sm:$0xff]
    %v304 = vld [vmem:[#allocation8 + $0x188] sm:$0xff]
    %v305 = vld [vmem:[#allocation8 + $0x190] sm:$0xff]
    %v306 = vld [vmem:[#allocation8 + $0x198] sm:$0xff]
    %v307 = vld [vmem:[#allocation8 + $0x1a0] sm:$0xff]
    %v308 = vld [vmem:[#allocation8 + $0x1a8] sm:$0xff]
    %v309 = vld [vmem:[#allocation8 + $0x1b0] sm:$0xff]
    %v310 = vld [vmem:[#allocation8 + $0x1b8] sm:$0xff]
    %v311 = vld [vmem:[#allocation8 + $0x1c0] sm:$0xff]
    %v312 = vld [vmem:[#allocation8 + $0x1c8] sm:$0xff]
    %v313 = vld [vmem:[#allocation8 + $0x1d0] sm:$0xff]
    %v314 = vld [vmem:[#allocation8 + $0x1d8] sm:$0xff]
    %v315 = vld [vmem:[#allocation8 + $0x1e0] sm:$0xff]
    %v316 = vld [vmem:[#allocation8 + $0x1e8] sm:$0xff]
    %v317 = vld [vmem:[#allocation8 + $0x1f0] sm:$0xff]
    %v318 = vld [vmem:[#allocation8 + $0x1f8] sm:$0xff]
    %v319 = vld [vmem:[#allocation10] sm:$0xf]
    %v321 = vperm.slane %v319, 0
    %v322 = vperm.slane %v319, 1
    %v323 = vperm.slane %v319, 2
    %v324 = vperm.slane %v319, 3
    %v393 = vunpack.c.l.b16 %v255
    %v394 = vunpack.c.h.b16 %v255
    %v395 = vunpack.c.l.b16 %v256
    %v396 = vunpack.c.h.b16 %v256
    %v397 = vunpack.c.l.b16 %v257
    %v398 = vunpack.c.h.b16 %v257
    %v399 = vunpack.c.l.b16 %v258
    %v400 = vunpack.c.h.b16 %v258
    %v401 = vunpack.c.l.b16 %v259
    %v402 = vunpack.c.h.b16 %v259
    %v403 = vunpack.c.l.b16 %v260
    %v404 = vunpack.c.h.b16 %v260
    %v405 = vunpack.c.l.b16 %v261
    %v406 = vunpack.c.h.b16 %v261
    %v407 = vunpack.c.l.b16 %v262
    %v408 = vunpack.c.h.b16 %v262
    %v409 = vunpack.c.l.b16 %v263
    %v410 = vunpack.c.h.b16 %v263
    %v411 = vunpack.c.l.b16 %v264
    %v412 = vunpack.c.h.b16 %v264
    %v413 = vunpack.c.l.b16 %v265
    %v414 = vunpack.c.h.b16 %v265
    %v415 = vunpack.c.l.b16 %v266
    %v416 = vunpack.c.h.b16 %v266
    %v417 = vunpack.c.l.b16 %v267
    %v418 = vunpack.c.h.b16 %v267
    %v419 = vunpack.c.l.b16 %v268
    %v420 = vunpack.c.h.b16 %v268
    %v421 = vunpack.c.l.b16 %v269
    %v422 = vunpack.c.h.b16 %v269
    %v423 = vunpack.c.l.b16 %v270
    %v424 = vunpack.c.h.b16 %v270
    %v425 = vunpack.c.l.b16 %v271
    %v426 = vunpack.c.h.b16 %v271
    %v427 = vunpack.c.l.b16 %v272
    %v428 = vunpack.c.h.b16 %v272
    %v429 = vunpack.c.l.b16 %v273
    %v430 = vunpack.c.h.b16 %v273
    %v431 = vunpack.c.l.b16 %v274
    %v432 = vunpack.c.h.b16 %v274
    %v433 = vunpack.c.l.b16 %v275
    %v434 = vunpack.c.h.b16 %v275
    %v435 = vunpack.c.l.b16 %v276
    %v436 = vunpack.c.h.b16 %v276
    %v437 = vunpack.c.l.b16 %v277
    %v438 = vunpack.c.h.b16 %v277
    %v439 = vunpack.c.l.b16 %v278
    %v440 = vunpack.c.h.b16 %v278
    %v441 = vunpack.c.l.b16 %v279
    %v442 = vunpack.c.h.b16 %v279
    %v443 = vunpack.c.l.b16 %v280
    %v444 = vunpack.c.h.b16 %v280
    %v445 = vunpack.c.l.b16 %v281
    %v446 = vunpack.c.h.b16 %v281
    %v447 = vunpack.c.l.b16 %v282
    %v448 = vunpack.c.h.b16 %v282
    %v449 = vunpack.c.l.b16 %v283
    %v450 = vunpack.c.h.b16 %v283
    %v451 = vunpack.c.l.b16 %v284
    %v452 = vunpack.c.h.b16 %v284
    %v453 = vunpack.c.l.b16 %v285
    %v454 = vunpack.c.h.b16 %v285
    %v455 = vunpack.c.l.b16 %v286
    %v456 = vunpack.c.h.b16 %v286
    %v457 = vunpack.c.l.b16 %v287
    %v458 = vunpack.c.h.b16 %v287
    %v459 = vunpack.c.l.b16 %v288
    %v460 = vunpack.c.h.b16 %v288
    %v461 = vunpack.c.l.b16 %v289
    %v462 = vunpack.c.h.b16 %v289
    %v463 = vunpack.c.l.b16 %v290
    %v464 = vunpack.c.h.b16 %v290
    %v465 = vunpack.c.l.b16 %v291
    %v466 = vunpack.c.h.b16 %v291
    %v467 = vunpack.c.l.b16 %v292
    %v468 = vunpack.c.h.b16 %v292
    %v469 = vunpack.c.l.b16 %v293
    %v470 = vunpack.c.h.b16 %v293
    %v471 = vunpack.c.l.b16 %v294
    %v472 = vunpack.c.h.b16 %v294
    %v473 = vunpack.c.l.b16 %v295
    %v474 = vunpack.c.h.b16 %v295
    %v475 = vunpack.c.l.b16 %v296
    %v476 = vunpack.c.h.b16 %v296
    %v477 = vunpack.c.l.b16 %v297
    %v478 = vunpack.c.h.b16 %v297
    %v479 = vunpack.c.l.b16 %v298
    %v480 = vunpack.c.h.b16 %v298
    %v481 = vunpack.c.l.b16 %v299
    %v482 = vunpack.c.h.b16 %v299
    %v483 = vunpack.c.l.b16 %v300
    %v484 = vunpack.c.h.b16 %v300
    %v485 = vunpack.c.l.b16 %v301
    %v486 = vunpack.c.h.b16 %v301
    %v487 = vunpack.c.l.b16 %v302
    %v488 = vunpack.c.h.b16 %v302
    %v489 = vunpack.c.l.b16 %v303
    %v490 = vunpack.c.h.b16 %v303
    %v491 = vunpack.c.l.b16 %v304
    %v492 = vunpack.c.h.b16 %v304
    %v493 = vunpack.c.l.b16 %v305
    %v494 = vunpack.c.h.b16 %v305
    %v495 = vunpack.c.l.b16 %v306
    %v496 = vunpack.c.h.b16 %v306
    %v497 = vunpack.c.l.b16 %v307
    %v498 = vunpack.c.h.b16 %v307
    %v499 = vunpack.c.l.b16 %v308
    %v500 = vunpack.c.h.b16 %v308
    %v501 = vunpack.c.l.b16 %v309
    %v502 = vunpack.c.h.b16 %v309
    %v503 = vunpack.c.l.b16 %v310
    %v504 = vunpack.c.h.b16 %v310
    %v505 = vunpack.c.l.b16 %v311
    %v506 = vunpack.c.h.b16 %v311
    %v507 = vunpack.c.l.b16 %v312
    %v508 = vunpack.c.h.b16 %v312
    %v509 = vunpack.c.l.b16 %v313
    %v510 = vunpack.c.h.b16 %v313
    %v511 = vunpack.c.l.b16 %v314
    %v512 = vunpack.c.h.b16 %v314
    %v513 = vunpack.c.l.b16 %v315
    %v514 = vunpack.c.h.b16 %v315
    %v515 = vunpack.c.l.b16 %v316
    %v516 = vunpack.c.h.b16 %v316
    %v517 = vunpack.c.l.b16 %v317
    %v518 = vunpack.c.h.b16 %v317
    %v519 = vunpack.c.l.b16 %v318
    %v520 = vunpack.c.h.b16 %v318
    %v521 = vpack.c.b16 %v397, %v393
    %v522 = vpack.c.b16 %v398, %v394
    %v523 = vpack.c.b16 %v399, %v395
    %v524 = vpack.c.b16 %v400, %v396
    %v525 = vpack.c.b16 %v405, %v401
    %v526 = vpack.c.b16 %v406, %v402
    %v527 = vpack.c.b16 %v407, %v403
    %v528 = vpack.c.b16 %v408, %v404
    %v529 = vpack.c.b16 %v413, %v409
    %v530 = vpack.c.b16 %v414, %v410
    %v531 = vpack.c.b16 %v415, %v411
    %v532 = vpack.c.b16 %v416, %v412
    %v533 = vpack.c.b16 %v421, %v417
    %v534 = vpack.c.b16 %v422, %v418
    %v535 = vpack.c.b16 %v423, %v419
    %v536 = vpack.c.b16 %v424, %v420
    %v537 = vpack.c.b16 %v429, %v425
    %v538 = vpack.c.b16 %v430, %v426
    %v539 = vpack.c.b16 %v431, %v427
    %v540 = vpack.c.b16 %v432, %v428
    %v541 = vpack.c.b16 %v437, %v433
    %v542 = vpack.c.b16 %v438, %v434
    %v543 = vpack.c.b16 %v439, %v435
    %v544 = vpack.c.b16 %v440, %v436
    %v545 = vpack.c.b16 %v445, %v441
    %v546 = vpack.c.b16 %v446, %v442
    %v547 = vpack.c.b16 %v447, %v443
    %v548 = vpack.c.b16 %v448, %v444
    %v549 = vpack.c.b16 %v453, %v449
    %v550 = vpack.c.b16 %v454, %v450
    %v551 = vpack.c.b16 %v455, %v451
    %v552 = vpack.c.b16 %v456, %v452
    %v553 = vpack.c.b16 %v461, %v457
    %v554 = vpack.c.b16 %v462, %v458
    %v555 = vpack.c.b16 %v463, %v459
    %v556 = vpack.c.b16 %v464, %v460
    %v557 = vpack.c.b16 %v469, %v465
    %v558 = vpack.c.b16 %v470, %v466
    %v559 = vpack.c.b16 %v471, %v467
    %v560 = vpack.c.b16 %v472, %v468
    %v561 = vpack.c.b16 %v477, %v473
    %v562 = vpack.c.b16 %v478, %v474
    %v563 = vpack.c.b16 %v479, %v475
    %v564 = vpack.c.b16 %v480, %v476
    %v565 = vpack.c.b16 %v485, %v481
    %v566 = vpack.c.b16 %v486, %v482
    %v567 = vpack.c.b16 %v487, %v483
    %v568 = vpack.c.b16 %v488, %v484
    %v569 = vpack.c.b16 %v493, %v489
    %v570 = vpack.c.b16 %v494, %v490
    %v571 = vpack.c.b16 %v495, %v491
    %v572 = vpack.c.b16 %v496, %v492
    %v573 = vpack.c.b16 %v501, %v497
    %v574 = vpack.c.b16 %v502, %v498
    %v575 = vpack.c.b16 %v503, %v499
    %v576 = vpack.c.b16 %v504, %v500
    %v577 = vpack.c.b16 %v509, %v505
    %v578 = vpack.c.b16 %v510, %v506
    %v579 = vpack.c.b16 %v511, %v507
    %v580 = vpack.c.b16 %v512, %v508
    %v581 = vpack.c.b16 %v517, %v513
    %v582 = vpack.c.b16 %v518, %v514
    %v583 = vpack.c.b16 %v519, %v515
    %v584 = vpack.c.b16 %v520, %v516
    %649 = vmatpush.bf16.msra.mxu0 %v549
    %650 = vmatpush.bf16.msra.mxu0 %v545
    %651 = vmatpush.bf16.msra.mxu0 %v541
    %652 = vmatpush.bf16.msra.mxu0 %v537
    %653 = vmatpush.bf16.msra.mxu0 %v533
    %654 = vmatpush.bf16.msra.mxu0 %v529
    %655 = vmatpush.bf16.msra.mxu0 %v525
    %656 = vmatpush.bf16.msra.mxu0 %v521
    %657 = vmatmul.bf16.gmra.mxu0 %v253
    %v658 = vpop.f32.mrf.mxu0
    %v659 = vadd.f32 %v321, %v658
    %v660 = vpop.f32.mrf.mxu0
    %661 = vdwg.mxu0
    %662 = vmatpush.bf16.msra.mxu0 %v581
    %663 = vmatpush.bf16.msra.mxu0 %v577
    %664 = vmatpush.bf16.msra.mxu0 %v573
    %665 = vmatpush.bf16.msra.mxu0 %v569
    %666 = vmatpush.bf16.msra.mxu0 %v565
    %667 = vmatpush.bf16.msra.mxu0 %v561
    %668 = vmatpush.bf16.msra.mxu0 %v557
    %669 = vmatpush.bf16.msra.mxu0 %v553
    %670 = vmatmul.bf16.gmra.mxu0 %v254
    %v671 = vpop.f32.mrf.mxu0
    %v672 = vadd.f32 %v659, %v671
    %v673 = vpop.f32.mrf.mxu0
    %674 = vdwg.mxu0
    %675 = vmatpush.bf16.msra.mxu0 %v550
    %676 = vmatpush.bf16.msra.mxu0 %v546
    %677 = vmatpush.bf16.msra.mxu0 %v542
    %678 = vmatpush.bf16.msra.mxu0 %v538
    %679 = vmatpush.bf16.msra.mxu0 %v534
    %680 = vmatpush.bf16.msra.mxu0 %v530
    %681 = vmatpush.bf16.msra.mxu0 %v526
    %682 = vmatpush.bf16.msra.mxu0 %v522
    %683 = vmatmul.bf16.gmra.mxu0 %v253
    %v684 = vpop.f32.mrf.mxu0
    %v685 = vadd.f32 %v322, %v684
    %v686 = vpop.f32.mrf.mxu0
    %687 = vdwg.mxu0
    %688 = vmatpush.bf16.msra.mxu0 %v582
    %689 = vmatpush.bf16.msra.mxu0 %v578
    %690 = vmatpush.bf16.msra.mxu0 %v574
    %691 = vmatpush.bf16.msra.mxu0 %v570
    %692 = vmatpush.bf16.msra.mxu0 %v566
    %693 = vmatpush.bf16.msra.mxu0 %v562
    %694 = vmatpush.bf16.msra.mxu0 %v558
    %695 = vmatpush.bf16.msra.mxu0 %v554
    %696 = vmatmul.bf16.gmra.mxu0 %v254
    %v697 = vpop.f32.mrf.mxu0
    %v698 = vadd.f32 %v685, %v697
    %v699 = vpop.f32.mrf.mxu0
    %700 = vdwg.mxu0
    %701 = vmatpush.bf16.msra.mxu0 %v551
    %702 = vmatpush.bf16.msra.mxu0 %v547
    %703 = vmatpush.bf16.msra.mxu0 %v543
    %704 = vmatpush.bf16.msra.mxu0 %v539
    %705 = vmatpush.bf16.msra.mxu0 %v535
    %706 = vmatpush.bf16.msra.mxu0 %v531
    %707 = vmatpush.bf16.msra.mxu0 %v527
    %708 = vmatpush.bf16.msra.mxu0 %v523
    %709 = vmatmul.bf16.gmra.mxu0 %v253
    %v710 = vpop.f32.mrf.mxu0
    %v711 = vadd.f32 %v323, %v710
    %v712 = vpop.f32.mrf.mxu0
    %713 = vdwg.mxu0
    %714 = vmatpush.bf16.msra.mxu0 %v583
    %715 = vmatpush.bf16.msra.mxu0 %v579
    %716 = vmatpush.bf16.msra.mxu0 %v575
    %717 = vmatpush.bf16.msra.mxu0 %v571
    %718 = vmatpush.bf16.msra.mxu0 %v567
    %719 = vmatpush.bf16.msra.mxu0 %v563
    %720 = vmatpush.bf16.msra.mxu0 %v559
    %721 = vmatpush.bf16.msra.mxu0 %v555
    %722 = vmatmul.bf16.gmra.mxu0 %v254
    %v723 = vpop.f32.mrf.mxu0
    %v724 = vadd.f32 %v711, %v723
    %v725 = vpop.f32.mrf.mxu0
    %726 = vdwg.mxu0
    %727 = vmatpush.bf16.msra.mxu0 %v552
    %728 = vmatpush.bf16.msra.mxu0 %v548
    %729 = vmatpush.bf16.msra.mxu0 %v544
    %730 = vmatpush.bf16.msra.mxu0 %v540
    %731 = vmatpush.bf16.msra.mxu0 %v536
    %732 = vmatpush.bf16.msra.mxu0 %v532
    %733 = vmatpush.bf16.msra.mxu0 %v528
    %734 = vmatpush.bf16.msra.mxu0 %v524
    %735 = vmatmul.bf16.gmra.mxu0 %v253
    %v736 = vpop.f32.mrf.mxu0
    %v737 = vadd.f32 %v324, %v736
    %v738 = vpop.f32.mrf.mxu0
    %739 = vdwg.mxu0
    %740 = vmatpush.bf16.msra.mxu0 %v584
    %741 = vmatpush.bf16.msra.mxu0 %v580
    %742 = vmatpush.bf16.msra.mxu0 %v576
    %743 = vmatpush.bf16.msra.mxu0 %v572
    %744 = vmatpush.bf16.msra.mxu0 %v568
    %745 = vmatpush.bf16.msra.mxu0 %v564
    %746 = vmatpush.bf16.msra.mxu0 %v560
    %747 = vmatpush.bf16.msra.mxu0 %v556
    %748 = vmatmul.bf16.gmra.mxu0 %v254
    %v749 = vpop.f32.mrf.mxu0
    %v750 = vadd.f32 %v737, %v749
    %v751 = vpop.f32.mrf.mxu0
    %752 = vdwg.mxu0
    %v753 = vmul.f32 %v672, 0.2
    %v754 = vmul.f32 %v698, 0.2
    %v755 = vmul.f32 %v724, 0.2
    %v756 = vmul.f32 %v750, 0.2
    %v757 = vmax.f32 %v672, %v753
    %v758 = vmax.f32 %v698, %v754
    %v759 = vmax.f32 %v724, %v755
    %v760 = vmax.f32 %v750, %v756
    %v761 = vpack.c.bf16 %v757, %v757
    %v762 = vpack.c.bf16 %v758, %v758
    %v763 = vpack.c.bf16 %v759, %v759
    %v764 = vpack.c.bf16 %v760, %v760
    %v765 = vld [vmem:[#allocation11] sm:$0xff]
    %v766 = vld [vmem:[#allocation11 + $0x8] sm:$0xff]
    %v767 = vld [vmem:[#allocation11 + $0x10] sm:$0xff]
    %v768 = vld [vmem:[#allocation11 + $0x18] sm:$0xff]
    %v769 = vld [vmem:[#allocation11 + $0x20] sm:$0xff]
    %v770 = vld [vmem:[#allocation11 + $0x28] sm:$0xff]
    %v771 = vld [vmem:[#allocation11 + $0x30] sm:$0xff]
    %v772 = vld [vmem:[#allocation11 + $0x38] sm:$0xff]
    %v773 = vld [vmem:[#allocation11 + $0x40] sm:$0xff]
    %v774 = vld [vmem:[#allocation11 + $0x48] sm:$0xff]
    %v775 = vld [vmem:[#allocation11 + $0x50] sm:$0xff]
    %v776 = vld [vmem:[#allocation11 + $0x58] sm:$0xff]
    %v777 = vld [vmem:[#allocation11 + $0x60] sm:$0xff]
    %v778 = vld [vmem:[#allocation11 + $0x68] sm:$0xff]
    %v779 = vld [vmem:[#allocation11 + $0x70] sm:$0xff]
    %v780 = vld [vmem:[#allocation11 + $0x78] sm:$0xff]
    %v781 = vld [vmem:[#allocation11 + $0x80] sm:$0xff]
    %v782 = vld [vmem:[#allocation11 + $0x88] sm:$0xff]
    %v783 = vld [vmem:[#allocation11 + $0x90] sm:$0xff]
    %v784 = vld [vmem:[#allocation11 + $0x98] sm:$0xff]
    %v785 = vld [vmem:[#allocation11 + $0xa0] sm:$0xff]
    %v786 = vld [vmem:[#allocation11 + $0xa8] sm:$0xff]
    %v787 = vld [vmem:[#allocation11 + $0xb0] sm:$0xff]
    %v788 = vld [vmem:[#allocation11 + $0xb8] sm:$0xff]
    %v789 = vld [vmem:[#allocation11 + $0xc0] sm:$0xff]
    %v790 = vld [vmem:[#allocation11 + $0xc8] sm:$0xff]
    %v791 = vld [vmem:[#allocation11 + $0xd0] sm:$0xff]
    %v792 = vld [vmem:[#allocation11 + $0xd8] sm:$0xff]
    %v793 = vld [vmem:[#allocation11 + $0xe0] sm:$0xff]
    %v794 = vld [vmem:[#allocation11 + $0xe8] sm:$0xff]
    %v795 = vld [vmem:[#allocation11 + $0xf0] sm:$0xff]
    %v796 = vld [vmem:[#allocation11 + $0xf8] sm:$0xff]
    %v797 = vld [vmem:[#allocation11 + $0x100] sm:$0xff]
    %v798 = vld [vmem:[#allocation11 + $0x108] sm:$0xff]
    %v799 = vld [vmem:[#allocation11 + $0x110] sm:$0xff]
    %v800 = vld [vmem:[#allocation11 + $0x118] sm:$0xff]
    %v801 = vld [vmem:[#allocation11 + $0x120] sm:$0xff]
    %v802 = vld [vmem:[#allocation11 + $0x128] sm:$0xff]
    %v803 = vld [vmem:[#allocation11 + $0x130] sm:$0xff]
    %v804 = vld [vmem:[#allocation11 + $0x138] sm:$0xff]
    %v805 = vld [vmem:[#allocation11 + $0x140] sm:$0xff]
    %v806 = vld [vmem:[#allocation11 + $0x148] sm:$0xff]
    %v807 = vld [vmem:[#allocation11 + $0x150] sm:$0xff]
    %v808 = vld [vmem:[#allocation11 + $0x158] sm:$0xff]
    %v809 = vld [vmem:[#allocation11 + $0x160] sm:$0xff]
    %v810 = vld [vmem:[#allocation11 + $0x168] sm:$0xff]
    %v811 = vld [vmem:[#allocation11 + $0x170] sm:$0xff]
    %v812 = vld [vmem:[#allocation11 + $0x178] sm:$0xff]
    %v813 = vld [vmem:[#allocation11 + $0x180] sm:$0xff]
    %v814 = vld [vmem:[#allocation11 + $0x188] sm:$0xff]
    %v815 = vld [vmem:[#allocation11 + $0x190] sm:$0xff]
    %v816 = vld [vmem:[#allocation11 + $0x198] sm:$0xff]
    %v817 = vld [vmem:[#allocation11 + $0x1a0] sm:$0xff]
    %v818 = vld [vmem:[#allocation11 + $0x1a8] sm:$0xff]
    %v819 = vld [vmem:[#allocation11 + $0x1b0] sm:$0xff]
    %v820 = vld [vmem:[#allocation11 + $0x1b8] sm:$0xff]
    %v821 = vld [vmem:[#allocation11 + $0x1c0] sm:$0xff]
    %v822 = vld [vmem:[#allocation11 + $0x1c8] sm:$0xff]
    %v823 = vld [vmem:[#allocation11 + $0x1d0] sm:$0xff]
    %v824 = vld [vmem:[#allocation11 + $0x1d8] sm:$0xff]
    %v825 = vld [vmem:[#allocation11 + $0x1e0] sm:$0xff]
    %v826 = vld [vmem:[#allocation11 + $0x1e8] sm:$0xff]
    %v827 = vld [vmem:[#allocation11 + $0x1f0] sm:$0xff]
    %v828 = vld [vmem:[#allocation11 + $0x1f8] sm:$0xff]
    %v829 = vld [vmem:[#allocation11 + $0x200] sm:$0xff]
    %v830 = vld [vmem:[#allocation11 + $0x208] sm:$0xff]
    %v831 = vld [vmem:[#allocation11 + $0x210] sm:$0xff]
    %v832 = vld [vmem:[#allocation11 + $0x218] sm:$0xff]
    %v833 = vld [vmem:[#allocation11 + $0x220] sm:$0xff]
    %v834 = vld [vmem:[#allocation11 + $0x228] sm:$0xff]
    %v835 = vld [vmem:[#allocation11 + $0x230] sm:$0xff]
    %v836 = vld [vmem:[#allocation11 + $0x238] sm:$0xff]
    %v837 = vld [vmem:[#allocation11 + $0x240] sm:$0xff]
    %v838 = vld [vmem:[#allocation11 + $0x248] sm:$0xff]
    %v839 = vld [vmem:[#allocation11 + $0x250] sm:$0xff]
    %v840 = vld [vmem:[#allocation11 + $0x258] sm:$0xff]
    %v841 = vld [vmem:[#allocation11 + $0x260] sm:$0xff]
    %v842 = vld [vmem:[#allocation11 + $0x268] sm:$0xff]
    %v843 = vld [vmem:[#allocation11 + $0x270] sm:$0xff]
    %v844 = vld [vmem:[#allocation11 + $0x278] sm:$0xff]
    %v845 = vld [vmem:[#allocation11 + $0x280] sm:$0xff]
    %v846 = vld [vmem:[#allocation11 + $0x288] sm:$0xff]
    %v847 = vld [vmem:[#allocation11 + $0x290] sm:$0xff]
    %v848 = vld [vmem:[#allocation11 + $0x298] sm:$0xff]
    %v849 = vld [vmem:[#allocation11 + $0x2a0] sm:$0xff]
    %v850 = vld [vmem:[#allocation11 + $0x2a8] sm:$0xff]
    %v851 = vld [vmem:[#allocation11 + $0x2b0] sm:$0xff]
    %v852 = vld [vmem:[#allocation11 + $0x2b8] sm:$0xff]
    %v853 = vld [vmem:[#allocation11 + $0x2c0] sm:$0xff]
    %v854 = vld [vmem:[#allocation11 + $0x2c8] sm:$0xff]
    %v855 = vld [vmem:[#allocation11 + $0x2d0] sm:$0xff]
    %v856 = vld [vmem:[#allocation11 + $0x2d8] sm:$0xff]
    %v857 = vld [vmem:[#allocation11 + $0x2e0] sm:$0xff]
    %v858 = vld [vmem:[#allocation11 + $0x2e8] sm:$0xff]
    %v859 = vld [vmem:[#allocation11 + $0x2f0] sm:$0xff]
    %v860 = vld [vmem:[#allocation11 + $0x2f8] sm:$0xff]
    %v861 = vld [vmem:[#allocation11 + $0x300] sm:$0xff]
    %v862 = vld [vmem:[#allocation11 + $0x308] sm:$0xff]
    %v863 = vld [vmem:[#allocation11 + $0x310] sm:$0xff]
    %v864 = vld [vmem:[#allocation11 + $0x318] sm:$0xff]
    %v865 = vld [vmem:[#allocation11 + $0x320] sm:$0xff]
    %v866 = vld [vmem:[#allocation11 + $0x328] sm:$0xff]
    %v867 = vld [vmem:[#allocation11 + $0x330] sm:$0xff]
    %v868 = vld [vmem:[#allocation11 + $0x338] sm:$0xff]
    %v869 = vld [vmem:[#allocation11 + $0x340] sm:$0xff]
    %v870 = vld [vmem:[#allocation11 + $0x348] sm:$0xff]
    %v871 = vld [vmem:[#allocation11 + $0x350] sm:$0xff]
    %v872 = vld [vmem:[#allocation11 + $0x358] sm:$0xff]
    %v873 = vld [vmem:[#allocation11 + $0x360] sm:$0xff]
    %v874 = vld [vmem:[#allocation11 + $0x368] sm:$0xff]
    %v875 = vld [vmem:[#allocation11 + $0x370] sm:$0xff]
    %v876 = vld [vmem:[#allocation11 + $0x378] sm:$0xff]
    %v877 = vld [vmem:[#allocation11 + $0x380] sm:$0xff]
    %v878 = vld [vmem:[#allocation11 + $0x388] sm:$0xff]
    %v879 = vld [vmem:[#allocation11 + $0x390] sm:$0xff]
    %v880 = vld [vmem:[#allocation11 + $0x398] sm:$0xff]
    %v881 = vld [vmem:[#allocation11 + $0x3a0] sm:$0xff]
    %v882 = vld [vmem:[#allocation11 + $0x3a8] sm:$0xff]
    %v883 = vld [vmem:[#allocation11 + $0x3b0] sm:$0xff]
    %v884 = vld [vmem:[#allocation11 + $0x3b8] sm:$0xff]
    %v885 = vld [vmem:[#allocation11 + $0x3c0] sm:$0xff]
    %v886 = vld [vmem:[#allocation11 + $0x3c8] sm:$0xff]
    %v887 = vld [vmem:[#allocation11 + $0x3d0] sm:$0xff]
    %v888 = vld [vmem:[#allocation11 + $0x3d8] sm:$0xff]
    %v889 = vld [vmem:[#allocation11 + $0x3e0] sm:$0xff]
    %v890 = vld [vmem:[#allocation11 + $0x3e8] sm:$0xff]
    %v891 = vld [vmem:[#allocation11 + $0x3f0] sm:$0xff]
    %v892 = vld [vmem:[#allocation11 + $0x3f8] sm:$0xff]
    %v893 = vld [vmem:[#allocation11 + $0x400] sm:$0xff]
    %v894 = vld [vmem:[#allocation11 + $0x408] sm:$0xff]
    %v895 = vld [vmem:[#allocation11 + $0x410] sm:$0xff]
    %v896 = vld [vmem:[#allocation11 + $0x418] sm:$0xff]
    %v897 = vld [vmem:[#allocation11 + $0x420] sm:$0xff]
    %v898 = vld [vmem:[#allocation11 + $0x428] sm:$0xff]
    %v899 = vld [vmem:[#allocation11 + $0x430] sm:$0xff]
    %v900 = vld [vmem:[#allocation11 + $0x438] sm:$0xff]
    %v901 = vld [vmem:[#allocation11 + $0x440] sm:$0xff]
    %v902 = vld [vmem:[#allocation11 + $0x448] sm:$0xff]
    %v903 = vld [vmem:[#allocation11 + $0x450] sm:$0xff]
    %v904 = vld [vmem:[#allocation11 + $0x458] sm:$0xff]
    %v905 = vld [vmem:[#allocation11 + $0x460] sm:$0xff]
    %v906 = vld [vmem:[#allocation11 + $0x468] sm:$0xff]
    %v907 = vld [vmem:[#allocation11 + $0x470] sm:$0xff]
    %v908 = vld [vmem:[#allocation11 + $0x478] sm:$0xff]
    %v909 = vld [vmem:[#allocation11 + $0x480] sm:$0xff]
    %v910 = vld [vmem:[#allocation11 + $0x488] sm:$0xff]
    %v911 = vld [vmem:[#allocation11 + $0x490] sm:$0xff]
    %v912 = vld [vmem:[#allocation11 + $0x498] sm:$0xff]
    %v913 = vld [vmem:[#allocation11 + $0x4a0] sm:$0xff]
    %v914 = vld [vmem:[#allocation11 + $0x4a8] sm:$0xff]
    %v915 = vld [vmem:[#allocation11 + $0x4b0] sm:$0xff]
    %v916 = vld [vmem:[#allocation11 + $0x4b8] sm:$0xff]
    %v917 = vld [vmem:[#allocation11 + $0x4c0] sm:$0xff]
    %v918 = vld [vmem:[#allocation11 + $0x4c8] sm:$0xff]
    %v919 = vld [vmem:[#allocation11 + $0x4d0] sm:$0xff]
    %v920 = vld [vmem:[#allocation11 + $0x4d8] sm:$0xff]
    %v921 = vld [vmem:[#allocation11 + $0x4e0] sm:$0xff]
    %v922 = vld [vmem:[#allocation11 + $0x4e8] sm:$0xff]
    %v923 = vld [vmem:[#allocation11 + $0x4f0] sm:$0xff]
    %v924 = vld [vmem:[#allocation11 + $0x4f8] sm:$0xff]
    %v925 = vld [vmem:[#allocation11 + $0x500] sm:$0xff]
    %v926 = vld [vmem:[#allocation11 + $0x508] sm:$0xff]
    %v927 = vld [vmem:[#allocation11 + $0x510] sm:$0xff]
    %v928 = vld [vmem:[#allocation11 + $0x518] sm:$0xff]
    %v929 = vld [vmem:[#allocation11 + $0x520] sm:$0xff]
    %v930 = vld [vmem:[#allocation11 + $0x528] sm:$0xff]
    %v931 = vld [vmem:[#allocation11 + $0x530] sm:$0xff]
    %v932 = vld [vmem:[#allocation11 + $0x538] sm:$0xff]
    %v933 = vld [vmem:[#allocation11 + $0x540] sm:$0xff]
    %v934 = vld [vmem:[#allocation11 + $0x548] sm:$0xff]
    %v935 = vld [vmem:[#allocation11 + $0x550] sm:$0xff]
    %v936 = vld [vmem:[#allocation11 + $0x558] sm:$0xff]
    %v937 = vld [vmem:[#allocation11 + $0x560] sm:$0xff]
    %v938 = vld [vmem:[#allocation11 + $0x568] sm:$0xff]
    %v939 = vld [vmem:[#allocation11 + $0x570] sm:$0xff]
    %v940 = vld [vmem:[#allocation11 + $0x578] sm:$0xff]
    %v941 = vld [vmem:[#allocation11 + $0x580] sm:$0xff]
    %v942 = vld [vmem:[#allocation11 + $0x588] sm:$0xff]
    %v943 = vld [vmem:[#allocation11 + $0x590] sm:$0xff]
    %v944 = vld [vmem:[#allocation11 + $0x598] sm:$0xff]
    %v945 = vld [vmem:[#allocation11 + $0x5a0] sm:$0xff]
    %v946 = vld [vmem:[#allocation11 + $0x5a8] sm:$0xff]
    %v947 = vld [vmem:[#allocation11 + $0x5b0] sm:$0xff]
    %v948 = vld [vmem:[#allocation11 + $0x5b8] sm:$0xff]
    %v949 = vld [vmem:[#allocation11 + $0x5c0] sm:$0xff]
    %v950 = vld [vmem:[#allocation11 + $0x5c8] sm:$0xff]
    %v951 = vld [vmem:[#allocation11 + $0x5d0] sm:$0xff]
    %v952 = vld [vmem:[#allocation11 + $0x5d8] sm:$0xff]
    %v953 = vld [vmem:[#allocation11 + $0x5e0] sm:$0xff]
    %v954 = vld [vmem:[#allocation11 + $0x5e8] sm:$0xff]
    %v955 = vld [vmem:[#allocation11 + $0x5f0] sm:$0xff]
    %v956 = vld [vmem:[#allocation11 + $0x5f8] sm:$0xff]
    %v957 = vld [vmem:[#allocation11 + $0x600] sm:$0xff]
    %v958 = vld [vmem:[#allocation11 + $0x608] sm:$0xff]
    %v959 = vld [vmem:[#allocation11 + $0x610] sm:$0xff]
    %v960 = vld [vmem:[#allocation11 + $0x618] sm:$0xff]
    %v961 = vld [vmem:[#allocation11 + $0x620] sm:$0xff]
    %v962 = vld [vmem:[#allocation11 + $0x628] sm:$0xff]
    %v963 = vld [vmem:[#allocation11 + $0x630] sm:$0xff]
    %v964 = vld [vmem:[#allocation11 + $0x638] sm:$0xff]
    %v965 = vld [vmem:[#allocation11 + $0x640] sm:$0xff]
    %v966 = vld [vmem:[#allocation11 + $0x648] sm:$0xff]
    %v967 = vld [vmem:[#allocation11 + $0x650] sm:$0xff]
    %v968 = vld [vmem:[#allocation11 + $0x658] sm:$0xff]
    %v969 = vld [vmem:[#allocation11 + $0x660] sm:$0xff]
    %v970 = vld [vmem:[#allocation11 + $0x668] sm:$0xff]
    %v971 = vld [vmem:[#allocation11 + $0x670] sm:$0xff]
    %v972 = vld [vmem:[#allocation11 + $0x678] sm:$0xff]
    %v973 = vld [vmem:[#allocation11 + $0x680] sm:$0xff]
    %v974 = vld [vmem:[#allocation11 + $0x688] sm:$0xff]
    %v975 = vld [vmem:[#allocation11 + $0x690] sm:$0xff]
    %v976 = vld [vmem:[#allocation11 + $0x698] sm:$0xff]
    %v977 = vld [vmem:[#allocation11 + $0x6a0] sm:$0xff]
    %v978 = vld [vmem:[#allocation11 + $0x6a8] sm:$0xff]
    %v979 = vld [vmem:[#allocation11 + $0x6b0] sm:$0xff]
    %v980 = vld [vmem:[#allocation11 + $0x6b8] sm:$0xff]
    %v981 = vld [vmem:[#allocation11 + $0x6c0] sm:$0xff]
    %v982 = vld [vmem:[#allocation11 + $0x6c8] sm:$0xff]
    %v983 = vld [vmem:[#allocation11 + $0x6d0] sm:$0xff]
    %v984 = vld [vmem:[#allocation11 + $0x6d8] sm:$0xff]
    %v985 = vld [vmem:[#allocation11 + $0x6e0] sm:$0xff]
    %v986 = vld [vmem:[#allocation11 + $0x6e8] sm:$0xff]
    %v987 = vld [vmem:[#allocation11 + $0x6f0] sm:$0xff]
    %v988 = vld [vmem:[#allocation11 + $0x6f8] sm:$0xff]
    %v989 = vld [vmem:[#allocation11 + $0x700] sm:$0xff]
    %v990 = vld [vmem:[#allocation11 + $0x708] sm:$0xff]
    %v991 = vld [vmem:[#allocation11 + $0x710] sm:$0xff]
    %v992 = vld [vmem:[#allocation11 + $0x718] sm:$0xff]
    %v993 = vld [vmem:[#allocation11 + $0x720] sm:$0xff]
    %v994 = vld [vmem:[#allocation11 + $0x728] sm:$0xff]
    %v995 = vld [vmem:[#allocation11 + $0x730] sm:$0xff]
    %v996 = vld [vmem:[#allocation11 + $0x738] sm:$0xff]
    %v997 = vld [vmem:[#allocation11 + $0x740] sm:$0xff]
    %v998 = vld [vmem:[#allocation11 + $0x748] sm:$0xff]
    %v999 = vld [vmem:[#allocation11 + $0x750] sm:$0xff]
    %v1000 = vld [vmem:[#allocation11 + $0x758] sm:$0xff]
    %v1001 = vld [vmem:[#allocation11 + $0x760] sm:$0xff]
    %v1002 = vld [vmem:[#allocation11 + $0x768] sm:$0xff]
    %v1003 = vld [vmem:[#allocation11 + $0x770] sm:$0xff]
    %v1004 = vld [vmem:[#allocation11 + $0x778] sm:$0xff]
    %v1005 = vld [vmem:[#allocation11 + $0x780] sm:$0xff]
    %v1006 = vld [vmem:[#allocation11 + $0x788] sm:$0xff]
    %v1007 = vld [vmem:[#allocation11 + $0x790] sm:$0xff]
    %v1008 = vld [vmem:[#allocation11 + $0x798] sm:$0xff]
    %v1009 = vld [vmem:[#allocation11 + $0x7a0] sm:$0xff]
    %v1010 = vld [vmem:[#allocation11 + $0x7a8] sm:$0xff]
    %v1011 = vld [vmem:[#allocation11 + $0x7b0] sm:$0xff]
    %v1012 = vld [vmem:[#allocation11 + $0x7b8] sm:$0xff]
    %v1013 = vld [vmem:[#allocation11 + $0x7c0] sm:$0xff]
    %v1014 = vld [vmem:[#allocation11 + $0x7c8] sm:$0xff]
    %v1015 = vld [vmem:[#allocation11 + $0x7d0] sm:$0xff]
    %v1016 = vld [vmem:[#allocation11 + $0x7d8] sm:$0xff]
    %v1017 = vld [vmem:[#allocation11 + $0x7e0] sm:$0xff]
    %v1018 = vld [vmem:[#allocation11 + $0x7e8] sm:$0xff]
    %v1019 = vld [vmem:[#allocation11 + $0x7f0] sm:$0xff]
    %v1020 = vld [vmem:[#allocation11 + $0x7f8] sm:$0xff]
    %v1021 = vld [vmem:[#allocation13] sm:$0xff]
    %v1023 = vperm.slane %v1021, 0
    %v1024 = vperm.slane %v1021, 1
    %v1025 = vperm.slane %v1021, 2
    %v1026 = vperm.slane %v1021, 3
    %v1027 = vperm.slane %v1021, 4
    %v1028 = vperm.slane %v1021, 5
    %v1029 = vperm.slane %v1021, 6
    %v1030 = vperm.slane %v1021, 7
    %v1295 = vunpack.c.l.b16 %v765
    %v1296 = vunpack.c.h.b16 %v765
    %v1297 = vunpack.c.l.b16 %v766
    %v1298 = vunpack.c.h.b16 %v766
    %v1299 = vunpack.c.l.b16 %v767
    %v1300 = vunpack.c.h.b16 %v767
    %v1301 = vunpack.c.l.b16 %v768
    %v1302 = vunpack.c.h.b16 %v768
    %v1303 = vunpack.c.l.b16 %v769
    %v1304 = vunpack.c.h.b16 %v769
    %v1305 = vunpack.c.l.b16 %v770
    %v1306 = vunpack.c.h.b16 %v770
    %v1307 = vunpack.c.l.b16 %v771
    %v1308 = vunpack.c.h.b16 %v771
    %v1309 = vunpack.c.l.b16 %v772
    %v1310 = vunpack.c.h.b16 %v772
    %v1311 = vunpack.c.l.b16 %v773
    %v1312 = vunpack.c.h.b16 %v773
    %v1313 = vunpack.c.l.b16 %v774
    %v1314 = vunpack.c.h.b16 %v774
    %v1315 = vunpack.c.l.b16 %v775
    %v1316 = vunpack.c.h.b16 %v775
    %v1317 = vunpack.c.l.b16 %v776
    %v1318 = vunpack.c.h.b16 %v776
    %v1319 = vunpack.c.l.b16 %v777
    %v1320 = vunpack.c.h.b16 %v777
    %v1321 = vunpack.c.l.b16 %v778
    %v1322 = vunpack.c.h.b16 %v778
    %v1323 = vunpack.c.l.b16 %v779
    %v1324 = vunpack.c.h.b16 %v779
    %v1325 = vunpack.c.l.b16 %v780
    %v1326 = vunpack.c.h.b16 %v780
    %v1327 = vunpack.c.l.b16 %v781
    %v1328 = vunpack.c.h.b16 %v781
    %v1329 = vunpack.c.l.b16 %v782
    %v1330 = vunpack.c.h.b16 %v782
    %v1331 = vunpack.c.l.b16 %v783
    %v1332 = vunpack.c.h.b16 %v783
    %v1333 = vunpack.c.l.b16 %v784
    %v1334 = vunpack.c.h.b16 %v784
    %v1335 = vunpack.c.l.b16 %v785
    %v1336 = vunpack.c.h.b16 %v785
    %v1337 = vunpack.c.l.b16 %v786
    %v1338 = vunpack.c.h.b16 %v786
    %v1339 = vunpack.c.l.b16 %v787
    %v1340 = vunpack.c.h.b16 %v787
    %v1341 = vunpack.c.l.b16 %v788
    %v1342 = vunpack.c.h.b16 %v788
    %v1343 = vunpack.c.l.b16 %v789
    %v1344 = vunpack.c.h.b16 %v789
    %v1345 = vunpack.c.l.b16 %v790
    %v1346 = vunpack.c.h.b16 %v790
    %v1347 = vunpack.c.l.b16 %v791
    %v1348 = vunpack.c.h.b16 %v791
    %v1349 = vunpack.c.l.b16 %v792
    %v1350 = vunpack.c.h.b16 %v792
    %v1351 = vunpack.c.l.b16 %v793
    %v1352 = vunpack.c.h.b16 %v793
    %v1353 = vunpack.c.l.b16 %v794
    %v1354 = vunpack.c.h.b16 %v794
    %v1355 = vunpack.c.l.b16 %v795
    %v1356 = vunpack.c.h.b16 %v795
    %v1357 = vunpack.c.l.b16 %v796
    %v1358 = vunpack.c.h.b16 %v796
    %v1359 = vunpack.c.l.b16 %v797
    %v1360 = vunpack.c.h.b16 %v797
    %v1361 = vunpack.c.l.b16 %v798
    %v1362 = vunpack.c.h.b16 %v798
    %v1363 = vunpack.c.l.b16 %v799
    %v1364 = vunpack.c.h.b16 %v799
    %v1365 = vunpack.c.l.b16 %v800
    %v1366 = vunpack.c.h.b16 %v800
    %v1367 = vunpack.c.l.b16 %v801
    %v1368 = vunpack.c.h.b16 %v801
    %v1369 = vunpack.c.l.b16 %v802
    %v1370 = vunpack.c.h.b16 %v802
    %v1371 = vunpack.c.l.b16 %v803
    %v1372 = vunpack.c.h.b16 %v803
    %v1373 = vunpack.c.l.b16 %v804
    %v1374 = vunpack.c.h.b16 %v804
    %v1375 = vunpack.c.l.b16 %v805
    %v1376 = vunpack.c.h.b16 %v805
    %v1377 = vunpack.c.l.b16 %v806
    %v1378 = vunpack.c.h.b16 %v806
    %v1379 = vunpack.c.l.b16 %v807
    %v1380 = vunpack.c.h.b16 %v807
    %v1381 = vunpack.c.l.b16 %v808
    %v1382 = vunpack.c.h.b16 %v808
    %v1383 = vunpack.c.l.b16 %v809
    %v1384 = vunpack.c.h.b16 %v809
    %v1385 = vunpack.c.l.b16 %v810
    %v1386 = vunpack.c.h.b16 %v810
    %v1387 = vunpack.c.l.b16 %v811
    %v1388 = vunpack.c.h.b16 %v811
    %v1389 = vunpack.c.l.b16 %v812
    %v1390 = vunpack.c.h.b16 %v812
    %v1391 = vunpack.c.l.b16 %v813
    %v1392 = vunpack.c.h.b16 %v813
    %v1393 = vunpack.c.l.b16 %v814
    %v1394 = vunpack.c.h.b16 %v814
    %v1395 = vunpack.c.l.b16 %v815
    %v1396 = vunpack.c.h.b16 %v815
    %v1397 = vunpack.c.l.b16 %v816
    %v1398 = vunpack.c.h.b16 %v816
    %v1399 = vunpack.c.l.b16 %v817
    %v1400 = vunpack.c.h.b16 %v817
    %v1401 = vunpack.c.l.b16 %v818
    %v1402 = vunpack.c.h.b16 %v818
    %v1403 = vunpack.c.l.b16 %v819
    %v1404 = vunpack.c.h.b16 %v819
    %v1405 = vunpack.c.l.b16 %v820
    %v1406 = vunpack.c.h.b16 %v820
    %v1407 = vunpack.c.l.b16 %v821
    %v1408 = vunpack.c.h.b16 %v821
    %v1409 = vunpack.c.l.b16 %v822
    %v1410 = vunpack.c.h.b16 %v822
    %v1411 = vunpack.c.l.b16 %v823
    %v1412 = vunpack.c.h.b16 %v823
    %v1413 = vunpack.c.l.b16 %v824
    %v1414 = vunpack.c.h.b16 %v824
    %v1415 = vunpack.c.l.b16 %v825
    %v1416 = vunpack.c.h.b16 %v825
    %v1417 = vunpack.c.l.b16 %v826
    %v1418 = vunpack.c.h.b16 %v826
    %v1419 = vunpack.c.l.b16 %v827
    %v1420 = vunpack.c.h.b16 %v827
    %v1421 = vunpack.c.l.b16 %v828
    %v1422 = vunpack.c.h.b16 %v828
    %v1423 = vunpack.c.l.b16 %v829
    %v1424 = vunpack.c.h.b16 %v829
    %v1425 = vunpack.c.l.b16 %v830
    %v1426 = vunpack.c.h.b16 %v830
    %v1427 = vunpack.c.l.b16 %v831
    %v1428 = vunpack.c.h.b16 %v831
    %v1429 = vunpack.c.l.b16 %v832
    %v1430 = vunpack.c.h.b16 %v832
    %v1431 = vunpack.c.l.b16 %v833
    %v1432 = vunpack.c.h.b16 %v833
    %v1433 = vunpack.c.l.b16 %v834
    %v1434 = vunpack.c.h.b16 %v834
    %v1435 = vunpack.c.l.b16 %v835
    %v1436 = vunpack.c.h.b16 %v835
    %v1437 = vunpack.c.l.b16 %v836
    %v1438 = vunpack.c.h.b16 %v836
    %v1439 = vunpack.c.l.b16 %v837
    %v1440 = vunpack.c.h.b16 %v837
    %v1441 = vunpack.c.l.b16 %v838
    %v1442 = vunpack.c.h.b16 %v838
    %v1443 = vunpack.c.l.b16 %v839
    %v1444 = vunpack.c.h.b16 %v839
    %v1445 = vunpack.c.l.b16 %v840
    %v1446 = vunpack.c.h.b16 %v840
    %v1447 = vunpack.c.l.b16 %v841
    %v1448 = vunpack.c.h.b16 %v841
    %v1449 = vunpack.c.l.b16 %v842
    %v1450 = vunpack.c.h.b16 %v842
    %v1451 = vunpack.c.l.b16 %v843
    %v1452 = vunpack.c.h.b16 %v843
    %v1453 = vunpack.c.l.b16 %v844
    %v1454 = vunpack.c.h.b16 %v844
    %v1455 = vunpack.c.l.b16 %v845
    %v1456 = vunpack.c.h.b16 %v845
    %v1457 = vunpack.c.l.b16 %v846
    %v1458 = vunpack.c.h.b16 %v846
    %v1459 = vunpack.c.l.b16 %v847
    %v1460 = vunpack.c.h.b16 %v847
    %v1461 = vunpack.c.l.b16 %v848
    %v1462 = vunpack.c.h.b16 %v848
    %v1463 = vunpack.c.l.b16 %v849
    %v1464 = vunpack.c.h.b16 %v849
    %v1465 = vunpack.c.l.b16 %v850
    %v1466 = vunpack.c.h.b16 %v850
    %v1467 = vunpack.c.l.b16 %v851
    %v1468 = vunpack.c.h.b16 %v851
    %v1469 = vunpack.c.l.b16 %v852
    %v1470 = vunpack.c.h.b16 %v852
    %v1471 = vunpack.c.l.b16 %v853
    %v1472 = vunpack.c.h.b16 %v853
    %v1473 = vunpack.c.l.b16 %v854
    %v1474 = vunpack.c.h.b16 %v854
    %v1475 = vunpack.c.l.b16 %v855
    %v1476 = vunpack.c.h.b16 %v855
    %v1477 = vunpack.c.l.b16 %v856
    %v1478 = vunpack.c.h.b16 %v856
    %v1479 = vunpack.c.l.b16 %v857
    %v1480 = vunpack.c.h.b16 %v857
    %v1481 = vunpack.c.l.b16 %v858
    %v1482 = vunpack.c.h.b16 %v858
    %v1483 = vunpack.c.l.b16 %v859
    %v1484 = vunpack.c.h.b16 %v859
    %v1485 = vunpack.c.l.b16 %v860
    %v1486 = vunpack.c.h.b16 %v860
    %v1487 = vunpack.c.l.b16 %v861
    %v1488 = vunpack.c.h.b16 %v861
    %v1489 = vunpack.c.l.b16 %v862
    %v1490 = vunpack.c.h.b16 %v862
    %v1491 = vunpack.c.l.b16 %v863
    %v1492 = vunpack.c.h.b16 %v863
    %v1493 = vunpack.c.l.b16 %v864
    %v1494 = vunpack.c.h.b16 %v864
    %v1495 = vunpack.c.l.b16 %v865
    %v1496 = vunpack.c.h.b16 %v865
    %v1497 = vunpack.c.l.b16 %v866
    %v1498 = vunpack.c.h.b16 %v866
    %v1499 = vunpack.c.l.b16 %v867
    %v1500 = vunpack.c.h.b16 %v867
    %v1501 = vunpack.c.l.b16 %v868
    %v1502 = vunpack.c.h.b16 %v868
    %v1503 = vunpack.c.l.b16 %v869
    %v1504 = vunpack.c.h.b16 %v869
    %v1505 = vunpack.c.l.b16 %v870
    %v1506 = vunpack.c.h.b16 %v870
    %v1507 = vunpack.c.l.b16 %v871
    %v1508 = vunpack.c.h.b16 %v871
    %v1509 = vunpack.c.l.b16 %v872
    %v1510 = vunpack.c.h.b16 %v872
    %v1511 = vunpack.c.l.b16 %v873
    %v1512 = vunpack.c.h.b16 %v873
    %v1513 = vunpack.c.l.b16 %v874
    %v1514 = vunpack.c.h.b16 %v874
    %v1515 = vunpack.c.l.b16 %v875
    %v1516 = vunpack.c.h.b16 %v875
    %v1517 = vunpack.c.l.b16 %v876
    %v1518 = vunpack.c.h.b16 %v876
    %v1519 = vunpack.c.l.b16 %v877
    %v1520 = vunpack.c.h.b16 %v877
    %v1521 = vunpack.c.l.b16 %v878
    %v1522 = vunpack.c.h.b16 %v878
    %v1523 = vunpack.c.l.b16 %v879
    %v1524 = vunpack.c.h.b16 %v879
    %v1525 = vunpack.c.l.b16 %v880
    %v1526 = vunpack.c.h.b16 %v880
    %v1527 = vunpack.c.l.b16 %v881
    %v1528 = vunpack.c.h.b16 %v881
    %v1529 = vunpack.c.l.b16 %v882
    %v1530 = vunpack.c.h.b16 %v882
    %v1531 = vunpack.c.l.b16 %v883
    %v1532 = vunpack.c.h.b16 %v883
    %v1533 = vunpack.c.l.b16 %v884
    %v1534 = vunpack.c.h.b16 %v884
    %v1535 = vunpack.c.l.b16 %v885
    %v1536 = vunpack.c.h.b16 %v885
    %v1537 = vunpack.c.l.b16 %v886
    %v1538 = vunpack.c.h.b16 %v886
    %v1539 = vunpack.c.l.b16 %v887
    %v1540 = vunpack.c.h.b16 %v887
    %v1541 = vunpack.c.l.b16 %v888
    %v1542 = vunpack.c.h.b16 %v888
    %v1543 = vunpack.c.l.b16 %v889
    %v1544 = vunpack.c.h.b16 %v889
    %v1545 = vunpack.c.l.b16 %v890
    %v1546 = vunpack.c.h.b16 %v890
    %v1547 = vunpack.c.l.b16 %v891
    %v1548 = vunpack.c.h.b16 %v891
    %v1549 = vunpack.c.l.b16 %v892
    %v1550 = vunpack.c.h.b16 %v892
    %v1551 = vunpack.c.l.b16 %v893
    %v1552 = vunpack.c.h.b16 %v893
    %v1553 = vunpack.c.l.b16 %v894
    %v1554 = vunpack.c.h.b16 %v894
    %v1555 = vunpack.c.l.b16 %v895
    %v1556 = vunpack.c.h.b16 %v895
    %v1557 = vunpack.c.l.b16 %v896
    %v1558 = vunpack.c.h.b16 %v896
    %v1559 = vunpack.c.l.b16 %v897
    %v1560 = vunpack.c.h.b16 %v897
    %v1561 = vunpack.c.l.b16 %v898
    %v1562 = vunpack.c.h.b16 %v898
    %v1563 = vunpack.c.l.b16 %v899
    %v1564 = vunpack.c.h.b16 %v899
    %v1565 = vunpack.c.l.b16 %v900
    %v1566 = vunpack.c.h.b16 %v900
    %v1567 = vunpack.c.l.b16 %v901
    %v1568 = vunpack.c.h.b16 %v901
    %v1569 = vunpack.c.l.b16 %v902
    %v1570 = vunpack.c.h.b16 %v902
    %v1571 = vunpack.c.l.b16 %v903
    %v1572 = vunpack.c.h.b16 %v903
    %v1573 = vunpack.c.l.b16 %v904
    %v1574 = vunpack.c.h.b16 %v904
    %v1575 = vunpack.c.l.b16 %v905
    %v1576 = vunpack.c.h.b16 %v905
    %v1577 = vunpack.c.l.b16 %v906
    %v1578 = vunpack.c.h.b16 %v906
    %v1579 = vunpack.c.l.b16 %v907
    %v1580 = vunpack.c.h.b16 %v907
    %v1581 = vunpack.c.l.b16 %v908
    %v1582 = vunpack.c.h.b16 %v908
    %v1583 = vunpack.c.l.b16 %v909
    %v1584 = vunpack.c.h.b16 %v909
    %v1585 = vunpack.c.l.b16 %v910
    %v1586 = vunpack.c.h.b16 %v910
    %v1587 = vunpack.c.l.b16 %v911
    %v1588 = vunpack.c.h.b16 %v911
    %v1589 = vunpack.c.l.b16 %v912
    %v1590 = vunpack.c.h.b16 %v912
    %v1591 = vunpack.c.l.b16 %v913
    %v1592 = vunpack.c.h.b16 %v913
    %v1593 = vunpack.c.l.b16 %v914
    %v1594 = vunpack.c.h.b16 %v914
    %v1595 = vunpack.c.l.b16 %v915
    %v1596 = vunpack.c.h.b16 %v915
    %v1597 = vunpack.c.l.b16 %v916
    %v1598 = vunpack.c.h.b16 %v916
    %v1599 = vunpack.c.l.b16 %v917
    %v1600 = vunpack.c.h.b16 %v917
    %v1601 = vunpack.c.l.b16 %v918
    %v1602 = vunpack.c.h.b16 %v918
    %v1603 = vunpack.c.l.b16 %v919
    %v1604 = vunpack.c.h.b16 %v919
    %v1605 = vunpack.c.l.b16 %v920
    %v1606 = vunpack.c.h.b16 %v920
    %v1607 = vunpack.c.l.b16 %v921
    %v1608 = vunpack.c.h.b16 %v921
    %v1609 = vunpack.c.l.b16 %v922
    %v1610 = vunpack.c.h.b16 %v922
    %v1611 = vunpack.c.l.b16 %v923
    %v1612 = vunpack.c.h.b16 %v923
    %v1613 = vunpack.c.l.b16 %v924
    %v1614 = vunpack.c.h.b16 %v924
    %v1615 = vunpack.c.l.b16 %v925
    %v1616 = vunpack.c.h.b16 %v925
    %v1617 = vunpack.c.l.b16 %v926
    %v1618 = vunpack.c.h.b16 %v926
    %v1619 = vunpack.c.l.b16 %v927
    %v1620 = vunpack.c.h.b16 %v927
    %v1621 = vunpack.c.l.b16 %v928
    %v1622 = vunpack.c.h.b16 %v928
    %v1623 = vunpack.c.l.b16 %v929
    %v1624 = vunpack.c.h.b16 %v929
    %v1625 = vunpack.c.l.b16 %v930
    %v1626 = vunpack.c.h.b16 %v930
    %v1627 = vunpack.c.l.b16 %v931
    %v1628 = vunpack.c.h.b16 %v931
    %v1629 = vunpack.c.l.b16 %v932
    %v1630 = vunpack.c.h.b16 %v932
    %v1631 = vunpack.c.l.b16 %v933
    %v1632 = vunpack.c.h.b16 %v933
    %v1633 = vunpack.c.l.b16 %v934
    %v1634 = vunpack.c.h.b16 %v934
    %v1635 = vunpack.c.l.b16 %v935
    %v1636 = vunpack.c.h.b16 %v935
    %v1637 = vunpack.c.l.b16 %v936
    %v1638 = vunpack.c.h.b16 %v936
    %v1639 = vunpack.c.l.b16 %v937
    %v1640 = vunpack.c.h.b16 %v937
    %v1641 = vunpack.c.l.b16 %v938
    %v1642 = vunpack.c.h.b16 %v938
    %v1643 = vunpack.c.l.b16 %v939
    %v1644 = vunpack.c.h.b16 %v939
    %v1645 = vunpack.c.l.b16 %v940
    %v1646 = vunpack.c.h.b16 %v940
    %v1647 = vunpack.c.l.b16 %v941
    %v1648 = vunpack.c.h.b16 %v941
    %v1649 = vunpack.c.l.b16 %v942
    %v1650 = vunpack.c.h.b16 %v942
    %v1651 = vunpack.c.l.b16 %v943
    %v1652 = vunpack.c.h.b16 %v943
    %v1653 = vunpack.c.l.b16 %v944
    %v1654 = vunpack.c.h.b16 %v944
    %v1655 = vunpack.c.l.b16 %v945
    %v1656 = vunpack.c.h.b16 %v945
    %v1657 = vunpack.c.l.b16 %v946
    %v1658 = vunpack.c.h.b16 %v946
    %v1659 = vunpack.c.l.b16 %v947
    %v1660 = vunpack.c.h.b16 %v947
    %v1661 = vunpack.c.l.b16 %v948
    %v1662 = vunpack.c.h.b16 %v948
    %v1663 = vunpack.c.l.b16 %v949
    %v1664 = vunpack.c.h.b16 %v949
    %v1665 = vunpack.c.l.b16 %v950
    %v1666 = vunpack.c.h.b16 %v950
    %v1667 = vunpack.c.l.b16 %v951
    %v1668 = vunpack.c.h.b16 %v951
    %v1669 = vunpack.c.l.b16 %v952
    %v1670 = vunpack.c.h.b16 %v952
    %v1671 = vunpack.c.l.b16 %v953
    %v1672 = vunpack.c.h.b16 %v953
    %v1673 = vunpack.c.l.b16 %v954
    %v1674 = vunpack.c.h.b16 %v954
    %v1675 = vunpack.c.l.b16 %v955
    %v1676 = vunpack.c.h.b16 %v955
    %v1677 = vunpack.c.l.b16 %v956
    %v1678 = vunpack.c.h.b16 %v956
    %v1679 = vunpack.c.l.b16 %v957
    %v1680 = vunpack.c.h.b16 %v957
    %v1681 = vunpack.c.l.b16 %v958
    %v1682 = vunpack.c.h.b16 %v958
    %v1683 = vunpack.c.l.b16 %v959
    %v1684 = vunpack.c.h.b16 %v959
    %v1685 = vunpack.c.l.b16 %v960
    %v1686 = vunpack.c.h.b16 %v960
    %v1687 = vunpack.c.l.b16 %v961
    %v1688 = vunpack.c.h.b16 %v961
    %v1689 = vunpack.c.l.b16 %v962
    %v1690 = vunpack.c.h.b16 %v962
    %v1691 = vunpack.c.l.b16 %v963
    %v1692 = vunpack.c.h.b16 %v963
    %v1693 = vunpack.c.l.b16 %v964
    %v1694 = vunpack.c.h.b16 %v964
    %v1695 = vunpack.c.l.b16 %v965
    %v1696 = vunpack.c.h.b16 %v965
    %v1697 = vunpack.c.l.b16 %v966
    %v1698 = vunpack.c.h.b16 %v966
    %v1699 = vunpack.c.l.b16 %v967
    %v1700 = vunpack.c.h.b16 %v967
    %v1701 = vunpack.c.l.b16 %v968
    %v1702 = vunpack.c.h.b16 %v968
    %v1703 = vunpack.c.l.b16 %v969
    %v1704 = vunpack.c.h.b16 %v969
    %v1705 = vunpack.c.l.b16 %v970
    %v1706 = vunpack.c.h.b16 %v970
    %v1707 = vunpack.c.l.b16 %v971
    %v1708 = vunpack.c.h.b16 %v971
    %v1709 = vunpack.c.l.b16 %v972
    %v1710 = vunpack.c.h.b16 %v972
    %v1711 = vunpack.c.l.b16 %v973
    %v1712 = vunpack.c.h.b16 %v973
    %v1713 = vunpack.c.l.b16 %v974
    %v1714 = vunpack.c.h.b16 %v974
    %v1715 = vunpack.c.l.b16 %v975
    %v1716 = vunpack.c.h.b16 %v975
    %v1717 = vunpack.c.l.b16 %v976
    %v1718 = vunpack.c.h.b16 %v976
    %v1719 = vunpack.c.l.b16 %v977
    %v1720 = vunpack.c.h.b16 %v977
    %v1721 = vunpack.c.l.b16 %v978
    %v1722 = vunpack.c.h.b16 %v978
    %v1723 = vunpack.c.l.b16 %v979
    %v1724 = vunpack.c.h.b16 %v979
    %v1725 = vunpack.c.l.b16 %v980
    %v1726 = vunpack.c.h.b16 %v980
    %v1727 = vunpack.c.l.b16 %v981
    %v1728 = vunpack.c.h.b16 %v981
    %v1729 = vunpack.c.l.b16 %v982
    %v1730 = vunpack.c.h.b16 %v982
    %v1731 = vunpack.c.l.b16 %v983
    %v1732 = vunpack.c.h.b16 %v983
    %v1733 = vunpack.c.l.b16 %v984
    %v1734 = vunpack.c.h.b16 %v984
    %v1735 = vunpack.c.l.b16 %v985
    %v1736 = vunpack.c.h.b16 %v985
    %v1737 = vunpack.c.l.b16 %v986
    %v1738 = vunpack.c.h.b16 %v986
    %v1739 = vunpack.c.l.b16 %v987
    %v1740 = vunpack.c.h.b16 %v987
    %v1741 = vunpack.c.l.b16 %v988
    %v1742 = vunpack.c.h.b16 %v988
    %v1743 = vunpack.c.l.b16 %v989
    %v1744 = vunpack.c.h.b16 %v989
    %v1745 = vunpack.c.l.b16 %v990
    %v1746 = vunpack.c.h.b16 %v990
    %v1747 = vunpack.c.l.b16 %v991
    %v1748 = vunpack.c.h.b16 %v991
    %v1749 = vunpack.c.l.b16 %v992
    %v1750 = vunpack.c.h.b16 %v992
    %v1751 = vunpack.c.l.b16 %v993
    %v1752 = vunpack.c.h.b16 %v993
    %v1753 = vunpack.c.l.b16 %v994
    %v1754 = vunpack.c.h.b16 %v994
    %v1755 = vunpack.c.l.b16 %v995
    %v1756 = vunpack.c.h.b16 %v995
    %v1757 = vunpack.c.l.b16 %v996
    %v1758 = vunpack.c.h.b16 %v996
    %v1759 = vunpack.c.l.b16 %v997
    %v1760 = vunpack.c.h.b16 %v997
    %v1761 = vunpack.c.l.b16 %v998
    %v1762 = vunpack.c.h.b16 %v998
    %v1763 = vunpack.c.l.b16 %v999
    %v1764 = vunpack.c.h.b16 %v999
    %v1765 = vunpack.c.l.b16 %v1000
    %v1766 = vunpack.c.h.b16 %v1000
    %v1767 = vunpack.c.l.b16 %v1001
    %v1768 = vunpack.c.h.b16 %v1001
    %v1769 = vunpack.c.l.b16 %v1002
    %v1770 = vunpack.c.h.b16 %v1002
    %v1771 = vunpack.c.l.b16 %v1003
    %v1772 = vunpack.c.h.b16 %v1003
    %v1773 = vunpack.c.l.b16 %v1004
    %v1774 = vunpack.c.h.b16 %v1004
    %v1775 = vunpack.c.l.b16 %v1005
    %v1776 = vunpack.c.h.b16 %v1005
    %v1777 = vunpack.c.l.b16 %v1006
    %v1778 = vunpack.c.h.b16 %v1006
    %v1779 = vunpack.c.l.b16 %v1007
    %v1780 = vunpack.c.h.b16 %v1007
    %v1781 = vunpack.c.l.b16 %v1008
    %v1782 = vunpack.c.h.b16 %v1008
    %v1783 = vunpack.c.l.b16 %v1009
    %v1784 = vunpack.c.h.b16 %v1009
    %v1785 = vunpack.c.l.b16 %v1010
    %v1786 = vunpack.c.h.b16 %v1010
    %v1787 = vunpack.c.l.b16 %v1011
    %v1788 = vunpack.c.h.b16 %v1011
    %v1789 = vunpack.c.l.b16 %v1012
    %v1790 = vunpack.c.h.b16 %v1012
    %v1791 = vunpack.c.l.b16 %v1013
    %v1792 = vunpack.c.h.b16 %v1013
    %v1793 = vunpack.c.l.b16 %v1014
    %v1794 = vunpack.c.h.b16 %v1014
    %v1795 = vunpack.c.l.b16 %v1015
    %v1796 = vunpack.c.h.b16 %v1015
    %v1797 = vunpack.c.l.b16 %v1016
    %v1798 = vunpack.c.h.b16 %v1016
    %v1799 = vunpack.c.l.b16 %v1017
    %v1800 = vunpack.c.h.b16 %v1017
    %v1801 = vunpack.c.l.b16 %v1018
    %v1802 = vunpack.c.h.b16 %v1018
    %v1803 = vunpack.c.l.b16 %v1019
    %v1804 = vunpack.c.h.b16 %v1019
    %v1805 = vunpack.c.l.b16 %v1020
    %v1806 = vunpack.c.h.b16 %v1020
    %v1807 = vpack.c.b16 %v1303, %v1295
    %v1808 = vpack.c.b16 %v1304, %v1296
    %v1809 = vpack.c.b16 %v1305, %v1297
    %v1810 = vpack.c.b16 %v1306, %v1298
    %v1811 = vpack.c.b16 %v1307, %v1299
    %v1812 = vpack.c.b16 %v1308, %v1300
    %v1813 = vpack.c.b16 %v1309, %v1301
    %v1814 = vpack.c.b16 %v1310, %v1302
    %v1815 = vpack.c.b16 %v1319, %v1311
    %v1816 = vpack.c.b16 %v1320, %v1312
    %v1817 = vpack.c.b16 %v1321, %v1313
    %v1818 = vpack.c.b16 %v1322, %v1314
    %v1819 = vpack.c.b16 %v1323, %v1315
    %v1820 = vpack.c.b16 %v1324, %v1316
    %v1821 = vpack.c.b16 %v1325, %v1317
    %v1822 = vpack.c.b16 %v1326, %v1318
    %v1823 = vpack.c.b16 %v1335, %v1327
    %v1824 = vpack.c.b16 %v1336, %v1328
    %v1825 = vpack.c.b16 %v1337, %v1329
    %v1826 = vpack.c.b16 %v1338, %v1330
    %v1827 = vpack.c.b16 %v1339, %v1331
    %v1828 = vpack.c.b16 %v1340, %v1332
    %v1829 = vpack.c.b16 %v1341, %v1333
    %v1830 = vpack.c.b16 %v1342, %v1334
    %v1831 = vpack.c.b16 %v1351, %v1343
    %v1832 = vpack.c.b16 %v1352, %v1344
    %v1833 = vpack.c.b16 %v1353, %v1345
    %v1834 = vpack.c.b16 %v1354, %v1346
    %v1835 = vpack.c.b16 %v1355, %v1347
    %v1836 = vpack.c.b16 %v1356, %v1348
    %v1837 = vpack.c.b16 %v1357, %v1349
    %v1838 = vpack.c.b16 %v1358, %v1350
    %v1839 = vpack.c.b16 %v1367, %v1359
    %v1840 = vpack.c.b16 %v1368, %v1360
    %v1841 = vpack.c.b16 %v1369, %v1361
    %v1842 = vpack.c.b16 %v1370, %v1362
    %v1843 = vpack.c.b16 %v1371, %v1363
    %v1844 = vpack.c.b16 %v1372, %v1364
    %v1845 = vpack.c.b16 %v1373, %v1365
    %v1846 = vpack.c.b16 %v1374, %v1366
    %v1847 = vpack.c.b16 %v1383, %v1375
    %v1848 = vpack.c.b16 %v1384, %v1376
    %v1849 = vpack.c.b16 %v1385, %v1377
    %v1850 = vpack.c.b16 %v1386, %v1378
    %v1851 = vpack.c.b16 %v1387, %v1379
    %v1852 = vpack.c.b16 %v1388, %v1380
    %v1853 = vpack.c.b16 %v1389, %v1381
    %v1854 = vpack.c.b16 %v1390, %v1382
    %v1855 = vpack.c.b16 %v1399, %v1391
    %v1856 = vpack.c.b16 %v1400, %v1392
    %v1857 = vpack.c.b16 %v1401, %v1393
    %v1858 = vpack.c.b16 %v1402, %v1394
    %v1859 = vpack.c.b16 %v1403, %v1395
    %v1860 = vpack.c.b16 %v1404, %v1396
    %v1861 = vpack.c.b16 %v1405, %v1397
    %v1862 = vpack.c.b16 %v1406, %v1398
    %v1863 = vpack.c.b16 %v1415, %v1407
    %v1864 = vpack.c.b16 %v1416, %v1408
    %v1865 = vpack.c.b16 %v1417, %v1409
    %v1866 = vpack.c.b16 %v1418, %v1410
    %v1867 = vpack.c.b16 %v1419, %v1411
    %v1868 = vpack.c.b16 %v1420, %v1412
    %v1869 = vpack.c.b16 %v1421, %v1413
    %v1870 = vpack.c.b16 %v1422, %v1414
    %v1871 = vpack.c.b16 %v1431, %v1423
    %v1872 = vpack.c.b16 %v1432, %v1424
    %v1873 = vpack.c.b16 %v1433, %v1425
    %v1874 = vpack.c.b16 %v1434, %v1426
    %v1875 = vpack.c.b16 %v1435, %v1427
    %v1876 = vpack.c.b16 %v1436, %v1428
    %v1877 = vpack.c.b16 %v1437, %v1429
    %v1878 = vpack.c.b16 %v1438, %v1430
    %v1879 = vpack.c.b16 %v1447, %v1439
    %v1880 = vpack.c.b16 %v1448, %v1440
    %v1881 = vpack.c.b16 %v1449, %v1441
    %v1882 = vpack.c.b16 %v1450, %v1442
    %v1883 = vpack.c.b16 %v1451, %v1443
    %v1884 = vpack.c.b16 %v1452, %v1444
    %v1885 = vpack.c.b16 %v1453, %v1445
    %v1886 = vpack.c.b16 %v1454, %v1446
    %v1887 = vpack.c.b16 %v1463, %v1455
    %v1888 = vpack.c.b16 %v1464, %v1456
    %v1889 = vpack.c.b16 %v1465, %v1457
    %v1890 = vpack.c.b16 %v1466, %v1458
    %v1891 = vpack.c.b16 %v1467, %v1459
    %v1892 = vpack.c.b16 %v1468, %v1460
    %v1893 = vpack.c.b16 %v1469, %v1461
    %v1894 = vpack.c.b16 %v1470, %v1462
    %v1895 = vpack.c.b16 %v1479, %v1471
    %v1896 = vpack.c.b16 %v1480, %v1472
    %v1897 = vpack.c.b16 %v1481, %v1473
    %v1898 = vpack.c.b16 %v1482, %v1474
    %v1899 = vpack.c.b16 %v1483, %v1475
    %v1900 = vpack.c.b16 %v1484, %v1476
    %v1901 = vpack.c.b16 %v1485, %v1477
    %v1902 = vpack.c.b16 %v1486, %v1478
    %v1903 = vpack.c.b16 %v1495, %v1487
    %v1904 = vpack.c.b16 %v1496, %v1488
    %v1905 = vpack.c.b16 %v1497, %v1489
    %v1906 = vpack.c.b16 %v1498, %v1490
    %v1907 = vpack.c.b16 %v1499, %v1491
    %v1908 = vpack.c.b16 %v1500, %v1492
    %v1909 = vpack.c.b16 %v1501, %v1493
    %v1910 = vpack.c.b16 %v1502, %v1494
    %v1911 = vpack.c.b16 %v1511, %v1503
    %v1912 = vpack.c.b16 %v1512, %v1504
    %v1913 = vpack.c.b16 %v1513, %v1505
    %v1914 = vpack.c.b16 %v1514, %v1506
    %v1915 = vpack.c.b16 %v1515, %v1507
    %v1916 = vpack.c.b16 %v1516, %v1508
    %v1917 = vpack.c.b16 %v1517, %v1509
    %v1918 = vpack.c.b16 %v1518, %v1510
    %v1919 = vpack.c.b16 %v1527, %v1519
    %v1920 = vpack.c.b16 %v1528, %v1520
    %v1921 = vpack.c.b16 %v1529, %v1521
    %v1922 = vpack.c.b16 %v1530, %v1522
    %v1923 = vpack.c.b16 %v1531, %v1523
    %v1924 = vpack.c.b16 %v1532, %v1524
    %v1925 = vpack.c.b16 %v1533, %v1525
    %v1926 = vpack.c.b16 %v1534, %v1526
    %v1927 = vpack.c.b16 %v1543, %v1535
    %v1928 = vpack.c.b16 %v1544, %v1536
    %v1929 = vpack.c.b16 %v1545, %v1537
    %v1930 = vpack.c.b16 %v1546, %v1538
    %v1931 = vpack.c.b16 %v1547, %v1539
    %v1932 = vpack.c.b16 %v1548, %v1540
    %v1933 = vpack.c.b16 %v1549, %v1541
    %v1934 = vpack.c.b16 %v1550, %v1542
    %v1935 = vpack.c.b16 %v1559, %v1551
    %v1936 = vpack.c.b16 %v1560, %v1552
    %v1937 = vpack.c.b16 %v1561, %v1553
    %v1938 = vpack.c.b16 %v1562, %v1554
    %v1939 = vpack.c.b16 %v1563, %v1555
    %v1940 = vpack.c.b16 %v1564, %v1556
    %v1941 = vpack.c.b16 %v1565, %v1557
    %v1942 = vpack.c.b16 %v1566, %v1558
    %v1943 = vpack.c.b16 %v1575, %v1567
    %v1944 = vpack.c.b16 %v1576, %v1568
    %v1945 = vpack.c.b16 %v1577, %v1569
    %v1946 = vpack.c.b16 %v1578, %v1570
    %v1947 = vpack.c.b16 %v1579, %v1571
    %v1948 = vpack.c.b16 %v1580, %v1572
    %v1949 = vpack.c.b16 %v1581, %v1573
    %v1950 = vpack.c.b16 %v1582, %v1574
    %v1951 = vpack.c.b16 %v1591, %v1583
    %v1952 = vpack.c.b16 %v1592, %v1584
    %v1953 = vpack.c.b16 %v1593, %v1585
    %v1954 = vpack.c.b16 %v1594, %v1586
    %v1955 = vpack.c.b16 %v1595, %v1587
    %v1956 = vpack.c.b16 %v1596, %v1588
    %v1957 = vpack.c.b16 %v1597, %v1589
    %v1958 = vpack.c.b16 %v1598, %v1590
    %v1959 = vpack.c.b16 %v1607, %v1599
    %v1960 = vpack.c.b16 %v1608, %v1600
    %v1961 = vpack.c.b16 %v1609, %v1601
    %v1962 = vpack.c.b16 %v1610, %v1602
    %v1963 = vpack.c.b16 %v1611, %v1603
    %v1964 = vpack.c.b16 %v1612, %v1604
    %v1965 = vpack.c.b16 %v1613, %v1605
    %v1966 = vpack.c.b16 %v1614, %v1606
    %v1967 = vpack.c.b16 %v1623, %v1615
    %v1968 = vpack.c.b16 %v1624, %v1616
    %v1969 = vpack.c.b16 %v1625, %v1617
    %v1970 = vpack.c.b16 %v1626, %v1618
    %v1971 = vpack.c.b16 %v1627, %v1619
    %v1972 = vpack.c.b16 %v1628, %v1620
    %v1973 = vpack.c.b16 %v1629, %v1621
    %v1974 = vpack.c.b16 %v1630, %v1622
    %v1975 = vpack.c.b16 %v1639, %v1631
    %v1976 = vpack.c.b16 %v1640, %v1632
    %v1977 = vpack.c.b16 %v1641, %v1633
    %v1978 = vpack.c.b16 %v1642, %v1634
    %v1979 = vpack.c.b16 %v1643, %v1635
    %v1980 = vpack.c.b16 %v1644, %v1636
    %v1981 = vpack.c.b16 %v1645, %v1637
    %v1982 = vpack.c.b16 %v1646, %v1638
    %v1983 = vpack.c.b16 %v1655, %v1647
    %v1984 = vpack.c.b16 %v1656, %v1648
    %v1985 = vpack.c.b16 %v1657, %v1649
    %v1986 = vpack.c.b16 %v1658, %v1650
    %v1987 = vpack.c.b16 %v1659, %v1651
    %v1988 = vpack.c.b16 %v1660, %v1652
    %v1989 = vpack.c.b16 %v1661, %v1653
    %v1990 = vpack.c.b16 %v1662, %v1654
    %v1991 = vpack.c.b16 %v1671, %v1663
    %v1992 = vpack.c.b16 %v1672, %v1664
    %v1993 = vpack.c.b16 %v1673, %v1665
    %v1994 = vpack.c.b16 %v1674, %v1666
    %v1995 = vpack.c.b16 %v1675, %v1667
    %v1996 = vpack.c.b16 %v1676, %v1668
    %v1997 = vpack.c.b16 %v1677, %v1669
    %v1998 = vpack.c.b16 %v1678, %v1670
    %v1999 = vpack.c.b16 %v1687, %v1679
    %v2000 = vpack.c.b16 %v1688, %v1680
    %v2001 = vpack.c.b16 %v1689, %v1681
    %v2002 = vpack.c.b16 %v1690, %v1682
    %v2003 = vpack.c.b16 %v1691, %v1683
    %v2004 = vpack.c.b16 %v1692, %v1684
    %v2005 = vpack.c.b16 %v1693, %v1685
    %v2006 = vpack.c.b16 %v1694, %v1686
    %v2007 = vpack.c.b16 %v1703, %v1695
    %v2008 = vpack.c.b16 %v1704, %v1696
    %v2009 = vpack.c.b16 %v1705, %v1697
    %v2010 = vpack.c.b16 %v1706, %v1698
    %v2011 = vpack.c.b16 %v1707, %v1699
    %v2012 = vpack.c.b16 %v1708, %v1700
    %v2013 = vpack.c.b16 %v1709, %v1701
    %v2014 = vpack.c.b16 %v1710, %v1702
    %v2015 = vpack.c.b16 %v1719, %v1711
    %v2016 = vpack.c.b16 %v1720, %v1712
    %v2017 = vpack.c.b16 %v1721, %v1713
    %v2018 = vpack.c.b16 %v1722, %v1714
    %v2019 = vpack.c.b16 %v1723, %v1715
    %v2020 = vpack.c.b16 %v1724, %v1716
    %v2021 = vpack.c.b16 %v1725, %v1717
    %v2022 = vpack.c.b16 %v1726, %v1718
    %v2023 = vpack.c.b16 %v1735, %v1727
    %v2024 = vpack.c.b16 %v1736, %v1728
    %v2025 = vpack.c.b16 %v1737, %v1729
    %v2026 = vpack.c.b16 %v1738, %v1730
    %v2027 = vpack.c.b16 %v1739, %v1731
    %v2028 = vpack.c.b16 %v1740, %v1732
    %v2029 = vpack.c.b16 %v1741, %v1733
    %v2030 = vpack.c.b16 %v1742, %v1734
    %v2031 = vpack.c.b16 %v1751, %v1743
    %v2032 = vpack.c.b16 %v1752, %v1744
    %v2033 = vpack.c.b16 %v1753, %v1745
    %v2034 = vpack.c.b16 %v1754, %v1746
    %v2035 = vpack.c.b16 %v1755, %v1747
    %v2036 = vpack.c.b16 %v1756, %v1748
    %v2037 = vpack.c.b16 %v1757, %v1749
    %v2038 = vpack.c.b16 %v1758, %v1750
    %v2039 = vpack.c.b16 %v1767, %v1759
    %v2040 = vpack.c.b16 %v1768, %v1760
    %v2041 = vpack.c.b16 %v1769, %v1761
    %v2042 = vpack.c.b16 %v1770, %v1762
    %v2043 = vpack.c.b16 %v1771, %v1763
    %v2044 = vpack.c.b16 %v1772, %v1764
    %v2045 = vpack.c.b16 %v1773, %v1765
    %v2046 = vpack.c.b16 %v1774, %v1766
    %v2047 = vpack.c.b16 %v1783, %v1775
    %v2048 = vpack.c.b16 %v1784, %v1776
    %v2049 = vpack.c.b16 %v1785, %v1777
    %v2050 = vpack.c.b16 %v1786, %v1778
    %v2051 = vpack.c.b16 %v1787, %v1779
    %v2052 = vpack.c.b16 %v1788, %v1780
    %v2053 = vpack.c.b16 %v1789, %v1781
    %v2054 = vpack.c.b16 %v1790, %v1782
    %v2055 = vpack.c.b16 %v1799, %v1791
    %v2056 = vpack.c.b16 %v1800, %v1792
    %v2057 = vpack.c.b16 %v1801, %v1793
    %v2058 = vpack.c.b16 %v1802, %v1794
    %v2059 = vpack.c.b16 %v1803, %v1795
    %v2060 = vpack.c.b16 %v1804, %v1796
    %v2061 = vpack.c.b16 %v1805, %v1797
    %v2062 = vpack.c.b16 %v1806, %v1798
    %2319 = vmatpush.bf16.msra.mxu0 %v1863
    %2320 = vmatpush.bf16.msra.mxu0 %v1855
    %2321 = vmatpush.bf16.msra.mxu0 %v1847
    %2322 = vmatpush.bf16.msra.mxu0 %v1839
    %2323 = vmatpush.bf16.msra.mxu0 %v1831
    %2324 = vmatpush.bf16.msra.mxu0 %v1823
    %2325 = vmatpush.bf16.msra.mxu0 %v1815
    %2326 = vmatpush.bf16.msra.mxu0 %v1807
    %2327 = vmatmul.bf16.gmra.mxu0 %v761
    %v2328 = vpop.f32.mrf.mxu0
    %v2329 = vadd.f32 %v1023, %v2328
    %v2330 = vpop.f32.mrf.mxu0
    %2331 = vdwg.mxu0
    %2332 = vmatpush.bf16.msra.mxu0 %v1927
    %2333 = vmatpush.bf16.msra.mxu0 %v1919
    %2334 = vmatpush.bf16.msra.mxu0 %v1911
    %2335 = vmatpush.bf16.msra.mxu0 %v1903
    %2336 = vmatpush.bf16.msra.mxu0 %v1895
    %2337 = vmatpush.bf16.msra.mxu0 %v1887
    %2338 = vmatpush.bf16.msra.mxu0 %v1879
    %2339 = vmatpush.bf16.msra.mxu0 %v1871
    %2340 = vmatmul.bf16.gmra.mxu0 %v762
    %v2341 = vpop.f32.mrf.mxu0
    %v2342 = vadd.f32 %v2329, %v2341
    %v2343 = vpop.f32.mrf.mxu0
    %2344 = vdwg.mxu0
    %2345 = vmatpush.bf16.msra.mxu0 %v1991
    %2346 = vmatpush.bf16.msra.mxu0 %v1983
    %2347 = vmatpush.bf16.msra.mxu0 %v1975
    %2348 = vmatpush.bf16.msra.mxu0 %v1967
    %2349 = vmatpush.bf16.msra.mxu0 %v1959
    %2350 = vmatpush.bf16.msra.mxu0 %v1951
    %2351 = vmatpush.bf16.msra.mxu0 %v1943
    %2352 = vmatpush.bf16.msra.mxu0 %v1935
    %2353 = vmatmul.bf16.gmra.mxu0 %v763
    %v2354 = vpop.f32.mrf.mxu0
    %v2355 = vadd.f32 %v2342, %v2354
    %v2356 = vpop.f32.mrf.mxu0
    %2357 = vdwg.mxu0
    %2358 = vmatpush.bf16.msra.mxu0 %v2055
    %2359 = vmatpush.bf16.msra.mxu0 %v2047
    %2360 = vmatpush.bf16.msra.mxu0 %v2039
    %2361 = vmatpush.bf16.msra.mxu0 %v2031
    %2362 = vmatpush.bf16.msra.mxu0 %v2023
    %2363 = vmatpush.bf16.msra.mxu0 %v2015
    %2364 = vmatpush.bf16.msra.mxu0 %v2007
    %2365 = vmatpush.bf16.msra.mxu0 %v1999
    %2366 = vmatmul.bf16.gmra.mxu0 %v764
    %v2367 = vpop.f32.mrf.mxu0
    %v2368 = vadd.f32 %v2355, %v2367
    %v2369 = vpop.f32.mrf.mxu0
    %2370 = vdwg.mxu0
    %2371 = vmatpush.bf16.msra.mxu0 %v1864
    %2372 = vmatpush.bf16.msra.mxu0 %v1856
    %2373 = vmatpush.bf16.msra.mxu0 %v1848
    %2374 = vmatpush.bf16.msra.mxu0 %v1840
    %2375 = vmatpush.bf16.msra.mxu0 %v1832
    %2376 = vmatpush.bf16.msra.mxu0 %v1824
    %2377 = vmatpush.bf16.msra.mxu0 %v1816
    %2378 = vmatpush.bf16.msra.mxu0 %v1808
    %2379 = vmatmul.bf16.gmra.mxu0 %v761
    %v2380 = vpop.f32.mrf.mxu0
    %v2381 = vadd.f32 %v1024, %v2380
    %v2382 = vpop.f32.mrf.mxu0
    %2383 = vdwg.mxu0
    %2384 = vmatpush.bf16.msra.mxu0 %v1928
    %2385 = vmatpush.bf16.msra.mxu0 %v1920
    %2386 = vmatpush.bf16.msra.mxu0 %v1912
    %2387 = vmatpush.bf16.msra.mxu0 %v1904
    %2388 = vmatpush.bf16.msra.mxu0 %v1896
    %2389 = vmatpush.bf16.msra.mxu0 %v1888
    %2390 = vmatpush.bf16.msra.mxu0 %v1880
    %2391 = vmatpush.bf16.msra.mxu0 %v1872
    %2392 = vmatmul.bf16.gmra.mxu0 %v762
    %v2393 = vpop.f32.mrf.mxu0
    %v2394 = vadd.f32 %v2381, %v2393
    %v2395 = vpop.f32.mrf.mxu0
    %2396 = vdwg.mxu0
    %2397 = vmatpush.bf16.msra.mxu0 %v1992
    %2398 = vmatpush.bf16.msra.mxu0 %v1984
    %2399 = vmatpush.bf16.msra.mxu0 %v1976
    %2400 = vmatpush.bf16.msra.mxu0 %v1968
    %2401 = vmatpush.bf16.msra.mxu0 %v1960
    %2402 = vmatpush.bf16.msra.mxu0 %v1952
    %2403 = vmatpush.bf16.msra.mxu0 %v1944
    %2404 = vmatpush.bf16.msra.mxu0 %v1936
    %2405 = vmatmul.bf16.gmra.mxu0 %v763
    %v2406 = vpop.f32.mrf.mxu0
    %v2407 = vadd.f32 %v2394, %v2406
    %v2408 = vpop.f32.mrf.mxu0
    %2409 = vdwg.mxu0
    %2410 = vmatpush.bf16.msra.mxu0 %v2056
    %2411 = vmatpush.bf16.msra.mxu0 %v2048
    %2412 = vmatpush.bf16.msra.mxu0 %v2040
    %2413 = vmatpush.bf16.msra.mxu0 %v2032
    %2414 = vmatpush.bf16.msra.mxu0 %v2024
    %2415 = vmatpush.bf16.msra.mxu0 %v2016
    %2416 = vmatpush.bf16.msra.mxu0 %v2008
    %2417 = vmatpush.bf16.msra.mxu0 %v2000
    %2418 = vmatmul.bf16.gmra.mxu0 %v764
    %v2419 = vpop.f32.mrf.mxu0
    %v2420 = vadd.f32 %v2407, %v2419
    %v2421 = vpop.f32.mrf.mxu0
    %2422 = vdwg.mxu0
    %2423 = vmatpush.bf16.msra.mxu0 %v1865
    %2424 = vmatpush.bf16.msra.mxu0 %v1857
    %2425 = vmatpush.bf16.msra.mxu0 %v1849
    %2426 = vmatpush.bf16.msra.mxu0 %v1841
    %2427 = vmatpush.bf16.msra.mxu0 %v1833
    %2428 = vmatpush.bf16.msra.mxu0 %v1825
    %2429 = vmatpush.bf16.msra.mxu0 %v1817
    %2430 = vmatpush.bf16.msra.mxu0 %v1809
    %2431 = vmatmul.bf16.gmra.mxu0 %v761
    %v2432 = vpop.f32.mrf.mxu0
    %v2433 = vadd.f32 %v1025, %v2432
    %v2434 = vpop.f32.mrf.mxu0
    %2435 = vdwg.mxu0
    %2436 = vmatpush.bf16.msra.mxu0 %v1929
    %2437 = vmatpush.bf16.msra.mxu0 %v1921
    %2438 = vmatpush.bf16.msra.mxu0 %v1913
    %2439 = vmatpush.bf16.msra.mxu0 %v1905
    %2440 = vmatpush.bf16.msra.mxu0 %v1897
    %2441 = vmatpush.bf16.msra.mxu0 %v1889
    %2442 = vmatpush.bf16.msra.mxu0 %v1881
    %2443 = vmatpush.bf16.msra.mxu0 %v1873
    %2444 = vmatmul.bf16.gmra.mxu0 %v762
    %v2445 = vpop.f32.mrf.mxu0
    %v2446 = vadd.f32 %v2433, %v2445
    %v2447 = vpop.f32.mrf.mxu0
    %2448 = vdwg.mxu0
    %2449 = vmatpush.bf16.msra.mxu0 %v1993
    %2450 = vmatpush.bf16.msra.mxu0 %v1985
    %2451 = vmatpush.bf16.msra.mxu0 %v1977
    %2452 = vmatpush.bf16.msra.mxu0 %v1969
    %2453 = vmatpush.bf16.msra.mxu0 %v1961
    %2454 = vmatpush.bf16.msra.mxu0 %v1953
    %2455 = vmatpush.bf16.msra.mxu0 %v1945
    %2456 = vmatpush.bf16.msra.mxu0 %v1937
    %2457 = vmatmul.bf16.gmra.mxu0 %v763
    %v2458 = vpop.f32.mrf.mxu0
    %v2459 = vadd.f32 %v2446, %v2458
    %v2460 = vpop.f32.mrf.mxu0
    %2461 = vdwg.mxu0
    %2462 = vmatpush.bf16.msra.mxu0 %v2057
    %2463 = vmatpush.bf16.msra.mxu0 %v2049
    %2464 = vmatpush.bf16.msra.mxu0 %v2041
    %2465 = vmatpush.bf16.msra.mxu0 %v2033
    %2466 = vmatpush.bf16.msra.mxu0 %v2025
    %2467 = vmatpush.bf16.msra.mxu0 %v2017
    %2468 = vmatpush.bf16.msra.mxu0 %v2009
    %2469 = vmatpush.bf16.msra.mxu0 %v2001
    %2470 = vmatmul.bf16.gmra.mxu0 %v764
    %v2471 = vpop.f32.mrf.mxu0
    %v2472 = vadd.f32 %v2459, %v2471
    %v2473 = vpop.f32.mrf.mxu0
    %2474 = vdwg.mxu0
    %2475 = vmatpush.bf16.msra.mxu0 %v1866
    %2476 = vmatpush.bf16.msra.mxu0 %v1858
    %2477 = vmatpush.bf16.msra.mxu0 %v1850
    %2478 = vmatpush.bf16.msra.mxu0 %v1842
    %2479 = vmatpush.bf16.msra.mxu0 %v1834
    %2480 = vmatpush.bf16.msra.mxu0 %v1826
    %2481 = vmatpush.bf16.msra.mxu0 %v1818
    %2482 = vmatpush.bf16.msra.mxu0 %v1810
    %2483 = vmatmul.bf16.gmra.mxu0 %v761
    %v2484 = vpop.f32.mrf.mxu0
    %v2485 = vadd.f32 %v1026, %v2484
    %v2486 = vpop.f32.mrf.mxu0
    %2487 = vdwg.mxu0
    %2488 = vmatpush.bf16.msra.mxu0 %v1930
    %2489 = vmatpush.bf16.msra.mxu0 %v1922
    %2490 = vmatpush.bf16.msra.mxu0 %v1914
    %2491 = vmatpush.bf16.msra.mxu0 %v1906
    %2492 = vmatpush.bf16.msra.mxu0 %v1898
    %2493 = vmatpush.bf16.msra.mxu0 %v1890
    %2494 = vmatpush.bf16.msra.mxu0 %v1882
    %2495 = vmatpush.bf16.msra.mxu0 %v1874
    %2496 = vmatmul.bf16.gmra.mxu0 %v762
    %v2497 = vpop.f32.mrf.mxu0
    %v2498 = vadd.f32 %v2485, %v2497
    %v2499 = vpop.f32.mrf.mxu0
    %2500 = vdwg.mxu0
    %2501 = vmatpush.bf16.msra.mxu0 %v1994
    %2502 = vmatpush.bf16.msra.mxu0 %v1986
    %2503 = vmatpush.bf16.msra.mxu0 %v1978
    %2504 = vmatpush.bf16.msra.mxu0 %v1970
    %2505 = vmatpush.bf16.msra.mxu0 %v1962
    %2506 = vmatpush.bf16.msra.mxu0 %v1954
    %2507 = vmatpush.bf16.msra.mxu0 %v1946
    %2508 = vmatpush.bf16.msra.mxu0 %v1938
    %2509 = vmatmul.bf16.gmra.mxu0 %v763
    %v2510 = vpop.f32.mrf.mxu0
    %v2511 = vadd.f32 %v2498, %v2510
    %v2512 = vpop.f32.mrf.mxu0
    %2513 = vdwg.mxu0
    %2514 = vmatpush.bf16.msra.mxu0 %v2058
    %2515 = vmatpush.bf16.msra.mxu0 %v2050
    %2516 = vmatpush.bf16.msra.mxu0 %v2042
    %2517 = vmatpush.bf16.msra.mxu0 %v2034
    %2518 = vmatpush.bf16.msra.mxu0 %v2026
    %2519 = vmatpush.bf16.msra.mxu0 %v2018
    %2520 = vmatpush.bf16.msra.mxu0 %v2010
    %2521 = vmatpush.bf16.msra.mxu0 %v2002
    %2522 = vmatmul.bf16.gmra.mxu0 %v764
    %v2523 = vpop.f32.mrf.mxu0
    %v2524 = vadd.f32 %v2511, %v2523
    %v2525 = vpop.f32.mrf.mxu0
    %2526 = vdwg.mxu0
    %2527 = vmatpush.bf16.msra.mxu0 %v1867
    %2528 = vmatpush.bf16.msra.mxu0 %v1859
    %2529 = vmatpush.bf16.msra.mxu0 %v1851
    %2530 = vmatpush.bf16.msra.mxu0 %v1843
    %2531 = vmatpush.bf16.msra.mxu0 %v1835
    %2532 = vmatpush.bf16.msra.mxu0 %v1827
    %2533 = vmatpush.bf16.msra.mxu0 %v1819
    %2534 = vmatpush.bf16.msra.mxu0 %v1811
    %2535 = vmatmul.bf16.gmra.mxu0 %v761
    %v2536 = vpop.f32.mrf.mxu0
    %v2537 = vadd.f32 %v1027, %v2536
    %v2538 = vpop.f32.mrf.mxu0
    %2539 = vdwg.mxu0
    %2540 = vmatpush.bf16.msra.mxu0 %v1931
    %2541 = vmatpush.bf16.msra.mxu0 %v1923
    %2542 = vmatpush.bf16.msra.mxu0 %v1915
    %2543 = vmatpush.bf16.msra.mxu0 %v1907
    %2544 = vmatpush.bf16.msra.mxu0 %v1899
    %2545 = vmatpush.bf16.msra.mxu0 %v1891
    %2546 = vmatpush.bf16.msra.mxu0 %v1883
    %2547 = vmatpush.bf16.msra.mxu0 %v1875
    %2548 = vmatmul.bf16.gmra.mxu0 %v762
    %v2549 = vpop.f32.mrf.mxu0
    %v2550 = vadd.f32 %v2537, %v2549
    %v2551 = vpop.f32.mrf.mxu0
    %2552 = vdwg.mxu0
    %2553 = vmatpush.bf16.msra.mxu0 %v1995
    %2554 = vmatpush.bf16.msra.mxu0 %v1987
    %2555 = vmatpush.bf16.msra.mxu0 %v1979
    %2556 = vmatpush.bf16.msra.mxu0 %v1971
    %2557 = vmatpush.bf16.msra.mxu0 %v1963
    %2558 = vmatpush.bf16.msra.mxu0 %v1955
    %2559 = vmatpush.bf16.msra.mxu0 %v1947
    %2560 = vmatpush.bf16.msra.mxu0 %v1939
    %2561 = vmatmul.bf16.gmra.mxu0 %v763
    %v2562 = vpop.f32.mrf.mxu0
    %v2563 = vadd.f32 %v2550, %v2562
    %v2564 = vpop.f32.mrf.mxu0
    %2565 = vdwg.mxu0
    %2566 = vmatpush.bf16.msra.mxu0 %v2059
    %2567 = vmatpush.bf16.msra.mxu0 %v2051
    %2568 = vmatpush.bf16.msra.mxu0 %v2043
    %2569 = vmatpush.bf16.msra.mxu0 %v2035
    %2570 = vmatpush.bf16.msra.mxu0 %v2027
    %2571 = vmatpush.bf16.msra.mxu0 %v2019
    %2572 = vmatpush.bf16.msra.mxu0 %v2011
    %2573 = vmatpush.bf16.msra.mxu0 %v2003
    %2574 = vmatmul.bf16.gmra.mxu0 %v764
    %v2575 = vpop.f32.mrf.mxu0
    %v2576 = vadd.f32 %v2563, %v2575
    %v2577 = vpop.f32.mrf.mxu0
    %2578 = vdwg.mxu0
    %2579 = vmatpush.bf16.msra.mxu0 %v1868
    %2580 = vmatpush.bf16.msra.mxu0 %v1860
    %2581 = vmatpush.bf16.msra.mxu0 %v1852
    %2582 = vmatpush.bf16.msra.mxu0 %v1844
    %2583 = vmatpush.bf16.msra.mxu0 %v1836
    %2584 = vmatpush.bf16.msra.mxu0 %v1828
    %2585 = vmatpush.bf16.msra.mxu0 %v1820
    %2586 = vmatpush.bf16.msra.mxu0 %v1812
    %2587 = vmatmul.bf16.gmra.mxu0 %v761
    %v2588 = vpop.f32.mrf.mxu0
    %v2589 = vadd.f32 %v1028, %v2588
    %v2590 = vpop.f32.mrf.mxu0
    %2591 = vdwg.mxu0
    %2592 = vmatpush.bf16.msra.mxu0 %v1932
    %2593 = vmatpush.bf16.msra.mxu0 %v1924
    %2594 = vmatpush.bf16.msra.mxu0 %v1916
    %2595 = vmatpush.bf16.msra.mxu0 %v1908
    %2596 = vmatpush.bf16.msra.mxu0 %v1900
    %2597 = vmatpush.bf16.msra.mxu0 %v1892
    %2598 = vmatpush.bf16.msra.mxu0 %v1884
    %2599 = vmatpush.bf16.msra.mxu0 %v1876
    %2600 = vmatmul.bf16.gmra.mxu0 %v762
    %v2601 = vpop.f32.mrf.mxu0
    %v2602 = vadd.f32 %v2589, %v2601
    %v2603 = vpop.f32.mrf.mxu0
    %2604 = vdwg.mxu0
    %2605 = vmatpush.bf16.msra.mxu0 %v1996
    %2606 = vmatpush.bf16.msra.mxu0 %v1988
    %2607 = vmatpush.bf16.msra.mxu0 %v1980
    %2608 = vmatpush.bf16.msra.mxu0 %v1972
    %2609 = vmatpush.bf16.msra.mxu0 %v1964
    %2610 = vmatpush.bf16.msra.mxu0 %v1956
    %2611 = vmatpush.bf16.msra.mxu0 %v1948
    %2612 = vmatpush.bf16.msra.mxu0 %v1940
    %2613 = vmatmul.bf16.gmra.mxu0 %v763
    %v2614 = vpop.f32.mrf.mxu0
    %v2615 = vadd.f32 %v2602, %v2614
    %v2616 = vpop.f32.mrf.mxu0
    %2617 = vdwg.mxu0
    %2618 = vmatpush.bf16.msra.mxu0 %v2060
    %2619 = vmatpush.bf16.msra.mxu0 %v2052
    %2620 = vmatpush.bf16.msra.mxu0 %v2044
    %2621 = vmatpush.bf16.msra.mxu0 %v2036
    %2622 = vmatpush.bf16.msra.mxu0 %v2028
    %2623 = vmatpush.bf16.msra.mxu0 %v2020
    %2624 = vmatpush.bf16.msra.mxu0 %v2012
    %2625 = vmatpush.bf16.msra.mxu0 %v2004
    %2626 = vmatmul.bf16.gmra.mxu0 %v764
    %v2627 = vpop.f32.mrf.mxu0
    %v2628 = vadd.f32 %v2615, %v2627
    %v2629 = vpop.f32.mrf.mxu0
    %2630 = vdwg.mxu0
    %2631 = vmatpush.bf16.msra.mxu0 %v1869
    %2632 = vmatpush.bf16.msra.mxu0 %v1861
    %2633 = vmatpush.bf16.msra.mxu0 %v1853
    %2634 = vmatpush.bf16.msra.mxu0 %v1845
    %2635 = vmatpush.bf16.msra.mxu0 %v1837
    %2636 = vmatpush.bf16.msra.mxu0 %v1829
    %2637 = vmatpush.bf16.msra.mxu0 %v1821
    %2638 = vmatpush.bf16.msra.mxu0 %v1813
    %2639 = vmatmul.bf16.gmra.mxu0 %v761
    %v2640 = vpop.f32.mrf.mxu0
    %v2641 = vadd.f32 %v1029, %v2640
    %v2642 = vpop.f32.mrf.mxu0
    %2643 = vdwg.mxu0
    %2644 = vmatpush.bf16.msra.mxu0 %v1933
    %2645 = vmatpush.bf16.msra.mxu0 %v1925
    %2646 = vmatpush.bf16.msra.mxu0 %v1917
    %2647 = vmatpush.bf16.msra.mxu0 %v1909
    %2648 = vmatpush.bf16.msra.mxu0 %v1901
    %2649 = vmatpush.bf16.msra.mxu0 %v1893
    %2650 = vmatpush.bf16.msra.mxu0 %v1885
    %2651 = vmatpush.bf16.msra.mxu0 %v1877
    %2652 = vmatmul.bf16.gmra.mxu0 %v762
    %v2653 = vpop.f32.mrf.mxu0
    %v2654 = vadd.f32 %v2641, %v2653
    %v2655 = vpop.f32.mrf.mxu0
    %2656 = vdwg.mxu0
    %2657 = vmatpush.bf16.msra.mxu0 %v1997
    %2658 = vmatpush.bf16.msra.mxu0 %v1989
    %2659 = vmatpush.bf16.msra.mxu0 %v1981
    %2660 = vmatpush.bf16.msra.mxu0 %v1973
    %2661 = vmatpush.bf16.msra.mxu0 %v1965
    %2662 = vmatpush.bf16.msra.mxu0 %v1957
    %2663 = vmatpush.bf16.msra.mxu0 %v1949
    %2664 = vmatpush.bf16.msra.mxu0 %v1941
    %2665 = vmatmul.bf16.gmra.mxu0 %v763
    %v2666 = vpop.f32.mrf.mxu0
    %v2667 = vadd.f32 %v2654, %v2666
    %v2668 = vpop.f32.mrf.mxu0
    %2669 = vdwg.mxu0
    %2670 = vmatpush.bf16.msra.mxu0 %v2061
    %2671 = vmatpush.bf16.msra.mxu0 %v2053
    %2672 = vmatpush.bf16.msra.mxu0 %v2045
    %2673 = vmatpush.bf16.msra.mxu0 %v2037
    %2674 = vmatpush.bf16.msra.mxu0 %v2029
    %2675 = vmatpush.bf16.msra.mxu0 %v2021
    %2676 = vmatpush.bf16.msra.mxu0 %v2013
    %2677 = vmatpush.bf16.msra.mxu0 %v2005
    %2678 = vmatmul.bf16.gmra.mxu0 %v764
    %v2679 = vpop.f32.mrf.mxu0
    %v2680 = vadd.f32 %v2667, %v2679
    %v2681 = vpop.f32.mrf.mxu0
    %2682 = vdwg.mxu0
    %2683 = vmatpush.bf16.msra.mxu0 %v1870
    %2684 = vmatpush.bf16.msra.mxu0 %v1862
    %2685 = vmatpush.bf16.msra.mxu0 %v1854
    %2686 = vmatpush.bf16.msra.mxu0 %v1846
    %2687 = vmatpush.bf16.msra.mxu0 %v1838
    %2688 = vmatpush.bf16.msra.mxu0 %v1830
    %2689 = vmatpush.bf16.msra.mxu0 %v1822
    %2690 = vmatpush.bf16.msra.mxu0 %v1814
    %2691 = vmatmul.bf16.gmra.mxu0 %v761
    %v2692 = vpop.f32.mrf.mxu0
    %v2693 = vadd.f32 %v1030, %v2692
    %v2694 = vpop.f32.mrf.mxu0
    %2695 = vdwg.mxu0
    %2696 = vmatpush.bf16.msra.mxu0 %v1934
    %2697 = vmatpush.bf16.msra.mxu0 %v1926
    %2698 = vmatpush.bf16.msra.mxu0 %v1918
    %2699 = vmatpush.bf16.msra.mxu0 %v1910
    %2700 = vmatpush.bf16.msra.mxu0 %v1902
    %2701 = vmatpush.bf16.msra.mxu0 %v1894
    %2702 = vmatpush.bf16.msra.mxu0 %v1886
    %2703 = vmatpush.bf16.msra.mxu0 %v1878
    %2704 = vmatmul.bf16.gmra.mxu0 %v762
    %v2705 = vpop.f32.mrf.mxu0
    %v2706 = vadd.f32 %v2693, %v2705
    %v2707 = vpop.f32.mrf.mxu0
    %2708 = vdwg.mxu0
    %2709 = vmatpush.bf16.msra.mxu0 %v1998
    %2710 = vmatpush.bf16.msra.mxu0 %v1990
    %2711 = vmatpush.bf16.msra.mxu0 %v1982
    %2712 = vmatpush.bf16.msra.mxu0 %v1974
    %2713 = vmatpush.bf16.msra.mxu0 %v1966
    %2714 = vmatpush.bf16.msra.mxu0 %v1958
    %2715 = vmatpush.bf16.msra.mxu0 %v1950
    %2716 = vmatpush.bf16.msra.mxu0 %v1942
    %2717 = vmatmul.bf16.gmra.mxu0 %v763
    %v2718 = vpop.f32.mrf.mxu0
    %v2719 = vadd.f32 %v2706, %v2718
    %v2720 = vpop.f32.mrf.mxu0
    %2721 = vdwg.mxu0
    %2722 = vmatpush.bf16.msra.mxu0 %v2062
    %2723 = vmatpush.bf16.msra.mxu0 %v2054
    %2724 = vmatpush.bf16.msra.mxu0 %v2046
    %2725 = vmatpush.bf16.msra.mxu0 %v2038
    %2726 = vmatpush.bf16.msra.mxu0 %v2030
    %2727 = vmatpush.bf16.msra.mxu0 %v2022
    %2728 = vmatpush.bf16.msra.mxu0 %v2014
    %2729 = vmatpush.bf16.msra.mxu0 %v2006
    %2730 = vmatmul.bf16.gmra.mxu0 %v764
    %v2731 = vpop.f32.mrf.mxu0
    %v2732 = vadd.f32 %v2719, %v2731
    %v2733 = vpop.f32.mrf.mxu0
    %2734 = vdwg.mxu0
    %v2735 = vmul.f32 %v2368, 0.2
    %v2736 = vmul.f32 %v2420, 0.2
    %v2737 = vmul.f32 %v2472, 0.2
    %v2738 = vmul.f32 %v2524, 0.2
    %v2739 = vmul.f32 %v2576, 0.2
    %v2740 = vmul.f32 %v2628, 0.2
    %v2741 = vmul.f32 %v2680, 0.2
    %v2742 = vmul.f32 %v2732, 0.2
    %v2743 = vmax.f32 %v2368, %v2735
    %v2744 = vmax.f32 %v2420, %v2736
    %v2745 = vmax.f32 %v2472, %v2737
    %v2746 = vmax.f32 %v2524, %v2738
    %v2747 = vmax.f32 %v2576, %v2739
    %v2748 = vmax.f32 %v2628, %v2740
    %v2749 = vmax.f32 %v2680, %v2741
    %v2750 = vmax.f32 %v2732, %v2742
    %v2751 = vpack.c.bf16 %v2743, %v2743
    %v2752 = vpack.c.bf16 %v2744, %v2744
    %v2753 = vpack.c.bf16 %v2745, %v2745
    %v2754 = vpack.c.bf16 %v2746, %v2746
    %v2755 = vpack.c.bf16 %v2747, %v2747
    %v2756 = vpack.c.bf16 %v2748, %v2748
    %v2757 = vpack.c.bf16 %v2749, %v2749
    %v2758 = vpack.c.bf16 %v2750, %v2750
    %v2759 = vld [vmem:[#allocation14] sm:$0xff]
    %v2760 = vld [vmem:[#allocation14 + $0x8] sm:$0xff]
    %v2761 = vld [vmem:[#allocation14 + $0x10] sm:$0xff]
    %v2762 = vld [vmem:[#allocation14 + $0x18] sm:$0xf]
    %v2763 = vld [vmem:[#allocation14 + $0x1c] sm:$0xff]
    %v2764 = vld [vmem:[#allocation14 + $0x24] sm:$0xff]
    %v2765 = vld [vmem:[#allocation14 + $0x2c] sm:$0xff]
    %v2766 = vld [vmem:[#allocation14 + $0x34] sm:$0xf]
    %v2767 = vld [vmem:[#allocation14 + $0x38] sm:$0xff]
    %v2768 = vld [vmem:[#allocation14 + $0x40] sm:$0xff]
    %v2769 = vld [vmem:[#allocation14 + $0x48] sm:$0xff]
    %v2770 = vld [vmem:[#allocation14 + $0x50] sm:$0xf]
    %v2771 = vld [vmem:[#allocation14 + $0x54] sm:$0xff]
    %v2772 = vld [vmem:[#allocation14 + $0x5c] sm:$0xff]
    %v2773 = vld [vmem:[#allocation14 + $0x64] sm:$0xff]
    %v2774 = vld [vmem:[#allocation14 + $0x6c] sm:$0xf]
    %v2775 = vld [vmem:[#allocation14 + $0x70] sm:$0xff]
    %v2776 = vld [vmem:[#allocation14 + $0x78] sm:$0xff]
    %v2777 = vld [vmem:[#allocation14 + $0x80] sm:$0xff]
    %v2778 = vld [vmem:[#allocation14 + $0x88] sm:$0xf]
    %v2779 = vld [vmem:[#allocation14 + $0x8c] sm:$0xff]
    %v2780 = vld [vmem:[#allocation14 + $0x94] sm:$0xff]
    %v2781 = vld [vmem:[#allocation14 + $0x9c] sm:$0xff]
    %v2782 = vld [vmem:[#allocation14 + $0xa4] sm:$0xf]
    %v2783 = vld [vmem:[#allocation14 + $0xa8] sm:$0xff]
    %v2784 = vld [vmem:[#allocation14 + $0xb0] sm:$0xff]
    %v2785 = vld [vmem:[#allocation14 + $0xb8] sm:$0xff]
    %v2786 = vld [vmem:[#allocation14 + $0xc0] sm:$0xf]
    %v2787 = vld [vmem:[#allocation14 + $0xc4] sm:$0xff]
    %v2788 = vld [vmem:[#allocation14 + $0xcc] sm:$0xff]
    %v2789 = vld [vmem:[#allocation14 + $0xd4] sm:$0xff]
    %v2790 = vld [vmem:[#allocation14 + $0xdc] sm:$0xf]
    %v2791 = vld [vmem:[#allocation14 + $0xe0] sm:$0xff]
    %v2792 = vld [vmem:[#allocation14 + $0xe8] sm:$0xff]
    %v2793 = vld [vmem:[#allocation14 + $0xf0] sm:$0xff]
    %v2794 = vld [vmem:[#allocation14 + $0xf8] sm:$0xf]
    %v2795 = vld [vmem:[#allocation14 + $0xfc] sm:$0xff]
    %v2796 = vld [vmem:[#allocation14 + $0x104] sm:$0xff]
    %v2797 = vld [vmem:[#allocation14 + $0x10c] sm:$0xff]
    %v2798 = vld [vmem:[#allocation14 + $0x114] sm:$0xf]
    %v2799 = vld [vmem:[#allocation14 + $0x118] sm:$0xff]
    %v2800 = vld [vmem:[#allocation14 + $0x120] sm:$0xff]
    %v2801 = vld [vmem:[#allocation14 + $0x128] sm:$0xff]
    %v2802 = vld [vmem:[#allocation14 + $0x130] sm:$0xf]
    %v2803 = vld [vmem:[#allocation14 + $0x134] sm:$0xff]
    %v2804 = vld [vmem:[#allocation14 + $0x13c] sm:$0xff]
    %v2805 = vld [vmem:[#allocation14 + $0x144] sm:$0xff]
    %v2806 = vld [vmem:[#allocation14 + $0x14c] sm:$0xf]
    %v2807 = vld [vmem:[#allocation14 + $0x150] sm:$0xff]
    %v2808 = vld [vmem:[#allocation14 + $0x158] sm:$0xff]
    %v2809 = vld [vmem:[#allocation14 + $0x160] sm:$0xff]
    %v2810 = vld [vmem:[#allocation14 + $0x168] sm:$0xf]
    %v2811 = vld [vmem:[#allocation14 + $0x16c] sm:$0xff]
    %v2812 = vld [vmem:[#allocation14 + $0x174] sm:$0xff]
    %v2813 = vld [vmem:[#allocation14 + $0x17c] sm:$0xff]
    %v2814 = vld [vmem:[#allocation14 + $0x184] sm:$0xf]
    %v2815 = vld [vmem:[#allocation14 + $0x188] sm:$0xff]
    %v2816 = vld [vmem:[#allocation14 + $0x190] sm:$0xff]
    %v2817 = vld [vmem:[#allocation14 + $0x198] sm:$0xff]
    %v2818 = vld [vmem:[#allocation14 + $0x1a0] sm:$0xf]
    %v2819 = vld [vmem:[#allocation14 + $0x1a4] sm:$0xff]
    %v2820 = vld [vmem:[#allocation14 + $0x1ac] sm:$0xff]
    %v2821 = vld [vmem:[#allocation14 + $0x1b4] sm:$0xff]
    %v2822 = vld [vmem:[#allocation14 + $0x1bc] sm:$0xf]
    %v2823 = vld [vmem:[#allocation14 + $0x1c0] sm:$0xff]
    %v2824 = vld [vmem:[#allocation14 + $0x1c8] sm:$0xff]
    %v2825 = vld [vmem:[#allocation14 + $0x1d0] sm:$0xff]
    %v2826 = vld [vmem:[#allocation14 + $0x1d8] sm:$0xf]
    %v2827 = vld [vmem:[#allocation14 + $0x1dc] sm:$0xff]
    %v2828 = vld [vmem:[#allocation14 + $0x1e4] sm:$0xff]
    %v2829 = vld [vmem:[#allocation14 + $0x1ec] sm:$0xff]
    %v2830 = vld [vmem:[#allocation14 + $0x1f4] sm:$0xf]
    %v2831 = vld [vmem:[#allocation14 + $0x1f8] sm:$0xff]
    %v2832 = vld [vmem:[#allocation14 + $0x200] sm:$0xff]
    %v2833 = vld [vmem:[#allocation14 + $0x208] sm:$0xff]
    %v2834 = vld [vmem:[#allocation14 + $0x210] sm:$0xf]
    %v2835 = vld [vmem:[#allocation14 + $0x214] sm:$0xff]
    %v2836 = vld [vmem:[#allocation14 + $0x21c] sm:$0xff]
    %v2837 = vld [vmem:[#allocation14 + $0x224] sm:$0xff]
    %v2838 = vld [vmem:[#allocation14 + $0x22c] sm:$0xf]
    %v2839 = vld [vmem:[#allocation14 + $0x230] sm:$0xff]
    %v2840 = vld [vmem:[#allocation14 + $0x238] sm:$0xff]
    %v2841 = vld [vmem:[#allocation14 + $0x240] sm:$0xff]
    %v2842 = vld [vmem:[#allocation14 + $0x248] sm:$0xf]
    %v2843 = vld [vmem:[#allocation14 + $0x24c] sm:$0xff]
    %v2844 = vld [vmem:[#allocation14 + $0x254] sm:$0xff]
    %v2845 = vld [vmem:[#allocation14 + $0x25c] sm:$0xff]
    %v2846 = vld [vmem:[#allocation14 + $0x264] sm:$0xf]
    %v2847 = vld [vmem:[#allocation14 + $0x268] sm:$0xff]
    %v2848 = vld [vmem:[#allocation14 + $0x270] sm:$0xff]
    %v2849 = vld [vmem:[#allocation14 + $0x278] sm:$0xff]
    %v2850 = vld [vmem:[#allocation14 + $0x280] sm:$0xf]
    %v2851 = vld [vmem:[#allocation14 + $0x284] sm:$0xff]
    %v2852 = vld [vmem:[#allocation14 + $0x28c] sm:$0xff]
    %v2853 = vld [vmem:[#allocation14 + $0x294] sm:$0xff]
    %v2854 = vld [vmem:[#allocation14 + $0x29c] sm:$0xf]
    %v2855 = vld [vmem:[#allocation14 + $0x2a0] sm:$0xff]
    %v2856 = vld [vmem:[#allocation14 + $0x2a8] sm:$0xff]
    %v2857 = vld [vmem:[#allocation14 + $0x2b0] sm:$0xff]
    %v2858 = vld [vmem:[#allocation14 + $0x2b8] sm:$0xf]
    %v2859 = vld [vmem:[#allocation14 + $0x2bc] sm:$0xff]
    %v2860 = vld [vmem:[#allocation14 + $0x2c4] sm:$0xff]
    %v2861 = vld [vmem:[#allocation14 + $0x2cc] sm:$0xff]
    %v2862 = vld [vmem:[#allocation14 + $0x2d4] sm:$0xf]
    %v2863 = vld [vmem:[#allocation14 + $0x2d8] sm:$0xff]
    %v2864 = vld [vmem:[#allocation14 + $0x2e0] sm:$0xff]
    %v2865 = vld [vmem:[#allocation14 + $0x2e8] sm:$0xff]
    %v2866 = vld [vmem:[#allocation14 + $0x2f0] sm:$0xf]
    %v2867 = vld [vmem:[#allocation14 + $0x2f4] sm:$0xff]
    %v2868 = vld [vmem:[#allocation14 + $0x2fc] sm:$0xff]
    %v2869 = vld [vmem:[#allocation14 + $0x304] sm:$0xff]
    %v2870 = vld [vmem:[#allocation14 + $0x30c] sm:$0xf]
    %v2871 = vld [vmem:[#allocation14 + $0x310] sm:$0xff]
    %v2872 = vld [vmem:[#allocation14 + $0x318] sm:$0xff]
    %v2873 = vld [vmem:[#allocation14 + $0x320] sm:$0xff]
    %v2874 = vld [vmem:[#allocation14 + $0x328] sm:$0xf]
    %v2875 = vld [vmem:[#allocation14 + $0x32c] sm:$0xff]
    %v2876 = vld [vmem:[#allocation14 + $0x334] sm:$0xff]
    %v2877 = vld [vmem:[#allocation14 + $0x33c] sm:$0xff]
    %v2878 = vld [vmem:[#allocation14 + $0x344] sm:$0xf]
    %v2879 = vld [vmem:[#allocation14 + $0x348] sm:$0xff]
    %v2880 = vld [vmem:[#allocation14 + $0x350] sm:$0xff]
    %v2881 = vld [vmem:[#allocation14 + $0x358] sm:$0xff]
    %v2882 = vld [vmem:[#allocation14 + $0x360] sm:$0xf]
    %v2883 = vld [vmem:[#allocation14 + $0x364] sm:$0xff]
    %v2884 = vld [vmem:[#allocation14 + $0x36c] sm:$0xff]
    %v2885 = vld [vmem:[#allocation14 + $0x374] sm:$0xff]
    %v2886 = vld [vmem:[#allocation14 + $0x37c] sm:$0xf]
    %v2887 = vld [vmem:[#allocation14 + $0x380] sm:$0xff]
    %v2888 = vld [vmem:[#allocation14 + $0x388] sm:$0xff]
    %v2889 = vld [vmem:[#allocation14 + $0x390] sm:$0xff]
    %v2890 = vld [vmem:[#allocation14 + $0x398] sm:$0xf]
    %v2891 = vld [vmem:[#allocation14 + $0x39c] sm:$0xff]
    %v2892 = vld [vmem:[#allocation14 + $0x3a4] sm:$0xff]
    %v2893 = vld [vmem:[#allocation14 + $0x3ac] sm:$0xff]
    %v2894 = vld [vmem:[#allocation14 + $0x3b4] sm:$0xf]
    %v2895 = vld [vmem:[#allocation14 + $0x3b8] sm:$0xff]
    %v2896 = vld [vmem:[#allocation14 + $0x3c0] sm:$0xff]
    %v2897 = vld [vmem:[#allocation14 + $0x3c8] sm:$0xff]
    %v2898 = vld [vmem:[#allocation14 + $0x3d0] sm:$0xf]
    %v2899 = vld [vmem:[#allocation14 + $0x3d4] sm:$0xff]
    %v2900 = vld [vmem:[#allocation14 + $0x3dc] sm:$0xff]
    %v2901 = vld [vmem:[#allocation14 + $0x3e4] sm:$0xff]
    %v2902 = vld [vmem:[#allocation14 + $0x3ec] sm:$0xf]
    %v2903 = vld [vmem:[#allocation14 + $0x3f0] sm:$0xff]
    %v2904 = vld [vmem:[#allocation14 + $0x3f8] sm:$0xff]
    %v2905 = vld [vmem:[#allocation14 + $0x400] sm:$0xff]
    %v2906 = vld [vmem:[#allocation14 + $0x408] sm:$0xf]
    %v2907 = vld [vmem:[#allocation14 + $0x40c] sm:$0xff]
    %v2908 = vld [vmem:[#allocation14 + $0x414] sm:$0xff]
    %v2909 = vld [vmem:[#allocation14 + $0x41c] sm:$0xff]
    %v2910 = vld [vmem:[#allocation14 + $0x424] sm:$0xf]
    %v2911 = vld [vmem:[#allocation14 + $0x428] sm:$0xff]
    %v2912 = vld [vmem:[#allocation14 + $0x430] sm:$0xff]
    %v2913 = vld [vmem:[#allocation14 + $0x438] sm:$0xff]
    %v2914 = vld [vmem:[#allocation14 + $0x440] sm:$0xf]
    %v2915 = vld [vmem:[#allocation14 + $0x444] sm:$0xff]
    %v2916 = vld [vmem:[#allocation14 + $0x44c] sm:$0xff]
    %v2917 = vld [vmem:[#allocation14 + $0x454] sm:$0xff]
    %v2918 = vld [vmem:[#allocation14 + $0x45c] sm:$0xf]
    %v2919 = vld [vmem:[#allocation14 + $0x460] sm:$0xff]
    %v2920 = vld [vmem:[#allocation14 + $0x468] sm:$0xff]
    %v2921 = vld [vmem:[#allocation14 + $0x470] sm:$0xff]
    %v2922 = vld [vmem:[#allocation14 + $0x478] sm:$0xf]
    %v2923 = vld [vmem:[#allocation14 + $0x47c] sm:$0xff]
    %v2924 = vld [vmem:[#allocation14 + $0x484] sm:$0xff]
    %v2925 = vld [vmem:[#allocation14 + $0x48c] sm:$0xff]
    %v2926 = vld [vmem:[#allocation14 + $0x494] sm:$0xf]
    %v2927 = vld [vmem:[#allocation14 + $0x498] sm:$0xff]
    %v2928 = vld [vmem:[#allocation14 + $0x4a0] sm:$0xff]
    %v2929 = vld [vmem:[#allocation14 + $0x4a8] sm:$0xff]
    %v2930 = vld [vmem:[#allocation14 + $0x4b0] sm:$0xf]
    %v2931 = vld [vmem:[#allocation14 + $0x4b4] sm:$0xff]
    %v2932 = vld [vmem:[#allocation14 + $0x4bc] sm:$0xff]
    %v2933 = vld [vmem:[#allocation14 + $0x4c4] sm:$0xff]
    %v2934 = vld [vmem:[#allocation14 + $0x4cc] sm:$0xf]
    %v2935 = vld [vmem:[#allocation14 + $0x4d0] sm:$0xff]
    %v2936 = vld [vmem:[#allocation14 + $0x4d8] sm:$0xff]
    %v2937 = vld [vmem:[#allocation14 + $0x4e0] sm:$0xff]
    %v2938 = vld [vmem:[#allocation14 + $0x4e8] sm:$0xf]
    %v2939 = vld [vmem:[#allocation14 + $0x4ec] sm:$0xff]
    %v2940 = vld [vmem:[#allocation14 + $0x4f4] sm:$0xff]
    %v2941 = vld [vmem:[#allocation14 + $0x4fc] sm:$0xff]
    %v2942 = vld [vmem:[#allocation14 + $0x504] sm:$0xf]
    %v2943 = vld [vmem:[#allocation14 + $0x508] sm:$0xff]
    %v2944 = vld [vmem:[#allocation14 + $0x510] sm:$0xff]
    %v2945 = vld [vmem:[#allocation14 + $0x518] sm:$0xff]
    %v2946 = vld [vmem:[#allocation14 + $0x520] sm:$0xf]
    %v2947 = vld [vmem:[#allocation14 + $0x524] sm:$0xff]
    %v2948 = vld [vmem:[#allocation14 + $0x52c] sm:$0xff]
    %v2949 = vld [vmem:[#allocation14 + $0x534] sm:$0xff]
    %v2950 = vld [vmem:[#allocation14 + $0x53c] sm:$0xf]
    %v2951 = vld [vmem:[#allocation14 + $0x540] sm:$0xff]
    %v2952 = vld [vmem:[#allocation14 + $0x548] sm:$0xff]
    %v2953 = vld [vmem:[#allocation14 + $0x550] sm:$0xff]
    %v2954 = vld [vmem:[#allocation14 + $0x558] sm:$0xf]
    %v2955 = vld [vmem:[#allocation14 + $0x55c] sm:$0xff]
    %v2956 = vld [vmem:[#allocation14 + $0x564] sm:$0xff]
    %v2957 = vld [vmem:[#allocation14 + $0x56c] sm:$0xff]
    %v2958 = vld [vmem:[#allocation14 + $0x574] sm:$0xf]
    %v2959 = vld [vmem:[#allocation14 + $0x578] sm:$0xff]
    %v2960 = vld [vmem:[#allocation14 + $0x580] sm:$0xff]
    %v2961 = vld [vmem:[#allocation14 + $0x588] sm:$0xff]
    %v2962 = vld [vmem:[#allocation14 + $0x590] sm:$0xf]
    %v2963 = vld [vmem:[#allocation14 + $0x594] sm:$0xff]
    %v2964 = vld [vmem:[#allocation14 + $0x59c] sm:$0xff]
    %v2965 = vld [vmem:[#allocation14 + $0x5a4] sm:$0xff]
    %v2966 = vld [vmem:[#allocation14 + $0x5ac] sm:$0xf]
    %v2967 = vld [vmem:[#allocation14 + $0x5b0] sm:$0xff]
    %v2968 = vld [vmem:[#allocation14 + $0x5b8] sm:$0xff]
    %v2969 = vld [vmem:[#allocation14 + $0x5c0] sm:$0xff]
    %v2970 = vld [vmem:[#allocation14 + $0x5c8] sm:$0xf]
    %v2971 = vld [vmem:[#allocation14 + $0x5cc] sm:$0xff]
    %v2972 = vld [vmem:[#allocation14 + $0x5d4] sm:$0xff]
    %v2973 = vld [vmem:[#allocation14 + $0x5dc] sm:$0xff]
    %v2974 = vld [vmem:[#allocation14 + $0x5e4] sm:$0xf]
    %v2975 = vld [vmem:[#allocation14 + $0x5e8] sm:$0xff]
    %v2976 = vld [vmem:[#allocation14 + $0x5f0] sm:$0xff]
    %v2977 = vld [vmem:[#allocation14 + $0x5f8] sm:$0xff]
    %v2978 = vld [vmem:[#allocation14 + $0x600] sm:$0xf]
    %v2979 = vld [vmem:[#allocation14 + $0x604] sm:$0xff]
    %v2980 = vld [vmem:[#allocation14 + $0x60c] sm:$0xff]
    %v2981 = vld [vmem:[#allocation14 + $0x614] sm:$0xff]
    %v2982 = vld [vmem:[#allocation14 + $0x61c] sm:$0xf]
    %v2983 = vld [vmem:[#allocation14 + $0x620] sm:$0xff]
    %v2984 = vld [vmem:[#allocation14 + $0x628] sm:$0xff]
    %v2985 = vld [vmem:[#allocation14 + $0x630] sm:$0xff]
    %v2986 = vld [vmem:[#allocation14 + $0x638] sm:$0xf]
    %v2987 = vld [vmem:[#allocation14 + $0x63c] sm:$0xff]
    %v2988 = vld [vmem:[#allocation14 + $0x644] sm:$0xff]
    %v2989 = vld [vmem:[#allocation14 + $0x64c] sm:$0xff]
    %v2990 = vld [vmem:[#allocation14 + $0x654] sm:$0xf]
    %v2991 = vld [vmem:[#allocation14 + $0x658] sm:$0xff]
    %v2992 = vld [vmem:[#allocation14 + $0x660] sm:$0xff]
    %v2993 = vld [vmem:[#allocation14 + $0x668] sm:$0xff]
    %v2994 = vld [vmem:[#allocation14 + $0x670] sm:$0xf]
    %v2995 = vld [vmem:[#allocation14 + $0x674] sm:$0xff]
    %v2996 = vld [vmem:[#allocation14 + $0x67c] sm:$0xff]
    %v2997 = vld [vmem:[#allocation14 + $0x684] sm:$0xff]
    %v2998 = vld [vmem:[#allocation14 + $0x68c] sm:$0xf]
    %v2999 = vld [vmem:[#allocation14 + $0x690] sm:$0xff]
    %v3000 = vld [vmem:[#allocation14 + $0x698] sm:$0xff]
    %v3001 = vld [vmem:[#allocation14 + $0x6a0] sm:$0xff]
    %v3002 = vld [vmem:[#allocation14 + $0x6a8] sm:$0xf]
    %v3003 = vld [vmem:[#allocation14 + $0x6ac] sm:$0xff]
    %v3004 = vld [vmem:[#allocation14 + $0x6b4] sm:$0xff]
    %v3005 = vld [vmem:[#allocation14 + $0x6bc] sm:$0xff]
    %v3006 = vld [vmem:[#allocation14 + $0x6c4] sm:$0xf]
    %v3007 = vld [vmem:[#allocation14 + $0x6c8] sm:$0xff]
    %v3008 = vld [vmem:[#allocation14 + $0x6d0] sm:$0xff]
    %v3009 = vld [vmem:[#allocation14 + $0x6d8] sm:$0xff]
    %v3010 = vld [vmem:[#allocation14 + $0x6e0] sm:$0xf]
    %v3011 = vld [vmem:[#allocation14 + $0x6e4] sm:$0xff]
    %v3012 = vld [vmem:[#allocation14 + $0x6ec] sm:$0xff]
    %v3013 = vld [vmem:[#allocation14 + $0x6f4] sm:$0xff]
    %v3014 = vld [vmem:[#allocation14 + $0x6fc] sm:$0xf]
    %v3015 = vld [vmem:[#allocation14 + $0x700] sm:$0xff]
    %v3016 = vld [vmem:[#allocation14 + $0x708] sm:$0xff]
    %v3017 = vld [vmem:[#allocation14 + $0x710] sm:$0xff]
    %v3018 = vld [vmem:[#allocation14 + $0x718] sm:$0xf]
    %v3019 = vld [vmem:[#allocation14 + $0x71c] sm:$0xff]
    %v3020 = vld [vmem:[#allocation14 + $0x724] sm:$0xff]
    %v3021 = vld [vmem:[#allocation14 + $0x72c] sm:$0xff]
    %v3022 = vld [vmem:[#allocation14 + $0x734] sm:$0xf]
    %v3023 = vld [vmem:[#allocation14 + $0x738] sm:$0xff]
    %v3024 = vld [vmem:[#allocation14 + $0x740] sm:$0xff]
    %v3025 = vld [vmem:[#allocation14 + $0x748] sm:$0xff]
    %v3026 = vld [vmem:[#allocation14 + $0x750] sm:$0xf]
    %v3027 = vld [vmem:[#allocation14 + $0x754] sm:$0xff]
    %v3028 = vld [vmem:[#allocation14 + $0x75c] sm:$0xff]
    %v3029 = vld [vmem:[#allocation14 + $0x764] sm:$0xff]
    %v3030 = vld [vmem:[#allocation14 + $0x76c] sm:$0xf]
    %v3031 = vld [vmem:[#allocation14 + $0x770] sm:$0xff]
    %v3032 = vld [vmem:[#allocation14 + $0x778] sm:$0xff]
    %v3033 = vld [vmem:[#allocation14 + $0x780] sm:$0xff]
    %v3034 = vld [vmem:[#allocation14 + $0x788] sm:$0xf]
    %v3035 = vld [vmem:[#allocation14 + $0x78c] sm:$0xff]
    %v3036 = vld [vmem:[#allocation14 + $0x794] sm:$0xff]
    %v3037 = vld [vmem:[#allocation14 + $0x79c] sm:$0xff]
    %v3038 = vld [vmem:[#allocation14 + $0x7a4] sm:$0xf]
    %v3039 = vld [vmem:[#allocation14 + $0x7a8] sm:$0xff]
    %v3040 = vld [vmem:[#allocation14 + $0x7b0] sm:$0xff]
    %v3041 = vld [vmem:[#allocation14 + $0x7b8] sm:$0xff]
    %v3042 = vld [vmem:[#allocation14 + $0x7c0] sm:$0xf]
    %v3043 = vld [vmem:[#allocation14 + $0x7c4] sm:$0xff]
    %v3044 = vld [vmem:[#allocation14 + $0x7cc] sm:$0xff]
    %v3045 = vld [vmem:[#allocation14 + $0x7d4] sm:$0xff]
    %v3046 = vld [vmem:[#allocation14 + $0x7dc] sm:$0xf]
    %v3047 = vld [vmem:[#allocation14 + $0x7e0] sm:$0xff]
    %v3048 = vld [vmem:[#allocation14 + $0x7e8] sm:$0xff]
    %v3049 = vld [vmem:[#allocation14 + $0x7f0] sm:$0xff]
    %v3050 = vld [vmem:[#allocation14 + $0x7f8] sm:$0xf]
    %v3051 = vld [vmem:[#allocation14 + $0x7fc] sm:$0xff]
    %v3052 = vld [vmem:[#allocation14 + $0x804] sm:$0xff]
    %v3053 = vld [vmem:[#allocation14 + $0x80c] sm:$0xff]
    %v3054 = vld [vmem:[#allocation14 + $0x814] sm:$0xf]
    %v3055 = vld [vmem:[#allocation14 + $0x818] sm:$0xff]
    %v3056 = vld [vmem:[#allocation14 + $0x820] sm:$0xff]
    %v3057 = vld [vmem:[#allocation14 + $0x828] sm:$0xff]
    %v3058 = vld [vmem:[#allocation14 + $0x830] sm:$0xf]
    %v3059 = vld [vmem:[#allocation14 + $0x834] sm:$0xff]
    %v3060 = vld [vmem:[#allocation14 + $0x83c] sm:$0xff]
    %v3061 = vld [vmem:[#allocation14 + $0x844] sm:$0xff]
    %v3062 = vld [vmem:[#allocation14 + $0x84c] sm:$0xf]
    %v3063 = vld [vmem:[#allocation14 + $0x850] sm:$0xff]
    %v3064 = vld [vmem:[#allocation14 + $0x858] sm:$0xff]
    %v3065 = vld [vmem:[#allocation14 + $0x860] sm:$0xff]
    %v3066 = vld [vmem:[#allocation14 + $0x868] sm:$0xf]
    %v3067 = vld [vmem:[#allocation14 + $0x86c] sm:$0xff]
    %v3068 = vld [vmem:[#allocation14 + $0x874] sm:$0xff]
    %v3069 = vld [vmem:[#allocation14 + $0x87c] sm:$0xff]
    %v3070 = vld [vmem:[#allocation14 + $0x884] sm:$0xf]
    %v3071 = vld [vmem:[#allocation14 + $0x888] sm:$0xff]
    %v3072 = vld [vmem:[#allocation14 + $0x890] sm:$0xff]
    %v3073 = vld [vmem:[#allocation14 + $0x898] sm:$0xff]
    %v3074 = vld [vmem:[#allocation14 + $0x8a0] sm:$0xf]
    %v3075 = vld [vmem:[#allocation14 + $0x8a4] sm:$0xff]
    %v3076 = vld [vmem:[#allocation14 + $0x8ac] sm:$0xff]
    %v3077 = vld [vmem:[#allocation14 + $0x8b4] sm:$0xff]
    %v3078 = vld [vmem:[#allocation14 + $0x8bc] sm:$0xf]
    %v3079 = vld [vmem:[#allocation14 + $0x8c0] sm:$0xff]
    %v3080 = vld [vmem:[#allocation14 + $0x8c8] sm:$0xff]
    %v3081 = vld [vmem:[#allocation14 + $0x8d0] sm:$0xff]
    %v3082 = vld [vmem:[#allocation14 + $0x8d8] sm:$0xf]
    %v3083 = vld [vmem:[#allocation14 + $0x8dc] sm:$0xff]
    %v3084 = vld [vmem:[#allocation14 + $0x8e4] sm:$0xff]
    %v3085 = vld [vmem:[#allocation14 + $0x8ec] sm:$0xff]
    %v3086 = vld [vmem:[#allocation14 + $0x8f4] sm:$0xf]
    %v3087 = vld [vmem:[#allocation14 + $0x8f8] sm:$0xff]
    %v3088 = vld [vmem:[#allocation14 + $0x900] sm:$0xff]
    %v3089 = vld [vmem:[#allocation14 + $0x908] sm:$0xff]
    %v3090 = vld [vmem:[#allocation14 + $0x910] sm:$0xf]
    %v3091 = vld [vmem:[#allocation14 + $0x914] sm:$0xff]
    %v3092 = vld [vmem:[#allocation14 + $0x91c] sm:$0xff]
    %v3093 = vld [vmem:[#allocation14 + $0x924] sm:$0xff]
    %v3094 = vld [vmem:[#allocation14 + $0x92c] sm:$0xf]
    %v3095 = vld [vmem:[#allocation14 + $0x930] sm:$0xff]
    %v3096 = vld [vmem:[#allocation14 + $0x938] sm:$0xff]
    %v3097 = vld [vmem:[#allocation14 + $0x940] sm:$0xff]
    %v3098 = vld [vmem:[#allocation14 + $0x948] sm:$0xf]
    %v3099 = vld [vmem:[#allocation14 + $0x94c] sm:$0xff]
    %v3100 = vld [vmem:[#allocation14 + $0x954] sm:$0xff]
    %v3101 = vld [vmem:[#allocation14 + $0x95c] sm:$0xff]
    %v3102 = vld [vmem:[#allocation14 + $0x964] sm:$0xf]
    %v3103 = vld [vmem:[#allocation14 + $0x968] sm:$0xff]
    %v3104 = vld [vmem:[#allocation14 + $0x970] sm:$0xff]
    %v3105 = vld [vmem:[#allocation14 + $0x978] sm:$0xff]
    %v3106 = vld [vmem:[#allocation14 + $0x980] sm:$0xf]
    %v3107 = vld [vmem:[#allocation14 + $0x984] sm:$0xff]
    %v3108 = vld [vmem:[#allocation14 + $0x98c] sm:$0xff]
    %v3109 = vld [vmem:[#allocation14 + $0x994] sm:$0xff]
    %v3110 = vld [vmem:[#allocation14 + $0x99c] sm:$0xf]
    %v3111 = vld [vmem:[#allocation14 + $0x9a0] sm:$0xff]
    %v3112 = vld [vmem:[#allocation14 + $0x9a8] sm:$0xff]
    %v3113 = vld [vmem:[#allocation14 + $0x9b0] sm:$0xff]
    %v3114 = vld [vmem:[#allocation14 + $0x9b8] sm:$0xf]
    %v3115 = vld [vmem:[#allocation14 + $0x9bc] sm:$0xff]
    %v3116 = vld [vmem:[#allocation14 + $0x9c4] sm:$0xff]
    %v3117 = vld [vmem:[#allocation14 + $0x9cc] sm:$0xff]
    %v3118 = vld [vmem:[#allocation14 + $0x9d4] sm:$0xf]
    %v3119 = vld [vmem:[#allocation14 + $0x9d8] sm:$0xff]
    %v3120 = vld [vmem:[#allocation14 + $0x9e0] sm:$0xff]
    %v3121 = vld [vmem:[#allocation14 + $0x9e8] sm:$0xff]
    %v3122 = vld [vmem:[#allocation14 + $0x9f0] sm:$0xf]
    %v3123 = vld [vmem:[#allocation14 + $0x9f4] sm:$0xff]
    %v3124 = vld [vmem:[#allocation14 + $0x9fc] sm:$0xff]
    %v3125 = vld [vmem:[#allocation14 + $0xa04] sm:$0xff]
    %v3126 = vld [vmem:[#allocation14 + $0xa0c] sm:$0xf]
    %v3127 = vld [vmem:[#allocation14 + $0xa10] sm:$0xff]
    %v3128 = vld [vmem:[#allocation14 + $0xa18] sm:$0xff]
    %v3129 = vld [vmem:[#allocation14 + $0xa20] sm:$0xff]
    %v3130 = vld [vmem:[#allocation14 + $0xa28] sm:$0xf]
    %v3131 = vld [vmem:[#allocation14 + $0xa2c] sm:$0xff]
    %v3132 = vld [vmem:[#allocation14 + $0xa34] sm:$0xff]
    %v3133 = vld [vmem:[#allocation14 + $0xa3c] sm:$0xff]
    %v3134 = vld [vmem:[#allocation14 + $0xa44] sm:$0xf]
    %v3135 = vld [vmem:[#allocation14 + $0xa48] sm:$0xff]
    %v3136 = vld [vmem:[#allocation14 + $0xa50] sm:$0xff]
    %v3137 = vld [vmem:[#allocation14 + $0xa58] sm:$0xff]
    %v3138 = vld [vmem:[#allocation14 + $0xa60] sm:$0xf]
    %v3139 = vld [vmem:[#allocation14 + $0xa64] sm:$0xff]
    %v3140 = vld [vmem:[#allocation14 + $0xa6c] sm:$0xff]
    %v3141 = vld [vmem:[#allocation14 + $0xa74] sm:$0xff]
    %v3142 = vld [vmem:[#allocation14 + $0xa7c] sm:$0xf]
    %v3143 = vld [vmem:[#allocation14 + $0xa80] sm:$0xff]
    %v3144 = vld [vmem:[#allocation14 + $0xa88] sm:$0xff]
    %v3145 = vld [vmem:[#allocation14 + $0xa90] sm:$0xff]
    %v3146 = vld [vmem:[#allocation14 + $0xa98] sm:$0xf]
    %v3147 = vld [vmem:[#allocation14 + $0xa9c] sm:$0xff]
    %v3148 = vld [vmem:[#allocation14 + $0xaa4] sm:$0xff]
    %v3149 = vld [vmem:[#allocation14 + $0xaac] sm:$0xff]
    %v3150 = vld [vmem:[#allocation14 + $0xab4] sm:$0xf]
    %v3151 = vld [vmem:[#allocation14 + $0xab8] sm:$0xff]
    %v3152 = vld [vmem:[#allocation14 + $0xac0] sm:$0xff]
    %v3153 = vld [vmem:[#allocation14 + $0xac8] sm:$0xff]
    %v3154 = vld [vmem:[#allocation14 + $0xad0] sm:$0xf]
    %v3155 = vld [vmem:[#allocation14 + $0xad4] sm:$0xff]
    %v3156 = vld [vmem:[#allocation14 + $0xadc] sm:$0xff]
    %v3157 = vld [vmem:[#allocation14 + $0xae4] sm:$0xff]
    %v3158 = vld [vmem:[#allocation14 + $0xaec] sm:$0xf]
    %v3159 = vld [vmem:[#allocation14 + $0xaf0] sm:$0xff]
    %v3160 = vld [vmem:[#allocation14 + $0xaf8] sm:$0xff]
    %v3161 = vld [vmem:[#allocation14 + $0xb00] sm:$0xff]
    %v3162 = vld [vmem:[#allocation14 + $0xb08] sm:$0xf]
    %v3163 = vld [vmem:[#allocation14 + $0xb0c] sm:$0xff]
    %v3164 = vld [vmem:[#allocation14 + $0xb14] sm:$0xff]
    %v3165 = vld [vmem:[#allocation14 + $0xb1c] sm:$0xff]
    %v3166 = vld [vmem:[#allocation14 + $0xb24] sm:$0xf]
    %v3167 = vld [vmem:[#allocation14 + $0xb28] sm:$0xff]
    %v3168 = vld [vmem:[#allocation14 + $0xb30] sm:$0xff]
    %v3169 = vld [vmem:[#allocation14 + $0xb38] sm:$0xff]
    %v3170 = vld [vmem:[#allocation14 + $0xb40] sm:$0xf]
    %v3171 = vld [vmem:[#allocation14 + $0xb44] sm:$0xff]
    %v3172 = vld [vmem:[#allocation14 + $0xb4c] sm:$0xff]
    %v3173 = vld [vmem:[#allocation14 + $0xb54] sm:$0xff]
    %v3174 = vld [vmem:[#allocation14 + $0xb5c] sm:$0xf]
    %v3175 = vld [vmem:[#allocation14 + $0xb60] sm:$0xff]
    %v3176 = vld [vmem:[#allocation14 + $0xb68] sm:$0xff]
    %v3177 = vld [vmem:[#allocation14 + $0xb70] sm:$0xff]
    %v3178 = vld [vmem:[#allocation14 + $0xb78] sm:$0xf]
    %v3179 = vld [vmem:[#allocation14 + $0xb7c] sm:$0xff]
    %v3180 = vld [vmem:[#allocation14 + $0xb84] sm:$0xff]
    %v3181 = vld [vmem:[#allocation14 + $0xb8c] sm:$0xff]
    %v3182 = vld [vmem:[#allocation14 + $0xb94] sm:$0xf]
    %v3183 = vld [vmem:[#allocation14 + $0xb98] sm:$0xff]
    %v3184 = vld [vmem:[#allocation14 + $0xba0] sm:$0xff]
    %v3185 = vld [vmem:[#allocation14 + $0xba8] sm:$0xff]
    %v3186 = vld [vmem:[#allocation14 + $0xbb0] sm:$0xf]
    %v3187 = vld [vmem:[#allocation14 + $0xbb4] sm:$0xff]
    %v3188 = vld [vmem:[#allocation14 + $0xbbc] sm:$0xff]
    %v3189 = vld [vmem:[#allocation14 + $0xbc4] sm:$0xff]
    %v3190 = vld [vmem:[#allocation14 + $0xbcc] sm:$0xf]
    %v3191 = vld [vmem:[#allocation14 + $0xbd0] sm:$0xff]
    %v3192 = vld [vmem:[#allocation14 + $0xbd8] sm:$0xff]
    %v3193 = vld [vmem:[#allocation14 + $0xbe0] sm:$0xff]
    %v3194 = vld [vmem:[#allocation14 + $0xbe8] sm:$0xf]
    %v3195 = vld [vmem:[#allocation14 + $0xbec] sm:$0xff]
    %v3196 = vld [vmem:[#allocation14 + $0xbf4] sm:$0xff]
    %v3197 = vld [vmem:[#allocation14 + $0xbfc] sm:$0xff]
    %v3198 = vld [vmem:[#allocation14 + $0xc04] sm:$0xf]
    %v3199 = vld [vmem:[#allocation14 + $0xc08] sm:$0xff]
    %v3200 = vld [vmem:[#allocation14 + $0xc10] sm:$0xff]
    %v3201 = vld [vmem:[#allocation14 + $0xc18] sm:$0xff]
    %v3202 = vld [vmem:[#allocation14 + $0xc20] sm:$0xf]
    %v3203 = vld [vmem:[#allocation14 + $0xc24] sm:$0xff]
    %v3204 = vld [vmem:[#allocation14 + $0xc2c] sm:$0xff]
    %v3205 = vld [vmem:[#allocation14 + $0xc34] sm:$0xff]
    %v3206 = vld [vmem:[#allocation14 + $0xc3c] sm:$0xf]
    %v3207 = vld [vmem:[#allocation14 + $0xc40] sm:$0xff]
    %v3208 = vld [vmem:[#allocation14 + $0xc48] sm:$0xff]
    %v3209 = vld [vmem:[#allocation14 + $0xc50] sm:$0xff]
    %v3210 = vld [vmem:[#allocation14 + $0xc58] sm:$0xf]
    %v3211 = vld [vmem:[#allocation14 + $0xc5c] sm:$0xff]
    %v3212 = vld [vmem:[#allocation14 + $0xc64] sm:$0xff]
    %v3213 = vld [vmem:[#allocation14 + $0xc6c] sm:$0xff]
    %v3214 = vld [vmem:[#allocation14 + $0xc74] sm:$0xf]
    %v3215 = vld [vmem:[#allocation14 + $0xc78] sm:$0xff]
    %v3216 = vld [vmem:[#allocation14 + $0xc80] sm:$0xff]
    %v3217 = vld [vmem:[#allocation14 + $0xc88] sm:$0xff]
    %v3218 = vld [vmem:[#allocation14 + $0xc90] sm:$0xf]
    %v3219 = vld [vmem:[#allocation14 + $0xc94] sm:$0xff]
    %v3220 = vld [vmem:[#allocation14 + $0xc9c] sm:$0xff]
    %v3221 = vld [vmem:[#allocation14 + $0xca4] sm:$0xff]
    %v3222 = vld [vmem:[#allocation14 + $0xcac] sm:$0xf]
    %v3223 = vld [vmem:[#allocation14 + $0xcb0] sm:$0xff]
    %v3224 = vld [vmem:[#allocation14 + $0xcb8] sm:$0xff]
    %v3225 = vld [vmem:[#allocation14 + $0xcc0] sm:$0xff]
    %v3226 = vld [vmem:[#allocation14 + $0xcc8] sm:$0xf]
    %v3227 = vld [vmem:[#allocation14 + $0xccc] sm:$0xff]
    %v3228 = vld [vmem:[#allocation14 + $0xcd4] sm:$0xff]
    %v3229 = vld [vmem:[#allocation14 + $0xcdc] sm:$0xff]
    %v3230 = vld [vmem:[#allocation14 + $0xce4] sm:$0xf]
    %v3231 = vld [vmem:[#allocation14 + $0xce8] sm:$0xff]
    %v3232 = vld [vmem:[#allocation14 + $0xcf0] sm:$0xff]
    %v3233 = vld [vmem:[#allocation14 + $0xcf8] sm:$0xff]
    %v3234 = vld [vmem:[#allocation14 + $0xd00] sm:$0xf]
    %v3235 = vld [vmem:[#allocation14 + $0xd04] sm:$0xff]
    %v3236 = vld [vmem:[#allocation14 + $0xd0c] sm:$0xff]
    %v3237 = vld [vmem:[#allocation14 + $0xd14] sm:$0xff]
    %v3238 = vld [vmem:[#allocation14 + $0xd1c] sm:$0xf]
    %v3239 = vld [vmem:[#allocation14 + $0xd20] sm:$0xff]
    %v3240 = vld [vmem:[#allocation14 + $0xd28] sm:$0xff]
    %v3241 = vld [vmem:[#allocation14 + $0xd30] sm:$0xff]
    %v3242 = vld [vmem:[#allocation14 + $0xd38] sm:$0xf]
    %v3243 = vld [vmem:[#allocation14 + $0xd3c] sm:$0xff]
    %v3244 = vld [vmem:[#allocation14 + $0xd44] sm:$0xff]
    %v3245 = vld [vmem:[#allocation14 + $0xd4c] sm:$0xff]
    %v3246 = vld [vmem:[#allocation14 + $0xd54] sm:$0xf]
    %v3247 = vld [vmem:[#allocation14 + $0xd58] sm:$0xff]
    %v3248 = vld [vmem:[#allocation14 + $0xd60] sm:$0xff]
    %v3249 = vld [vmem:[#allocation14 + $0xd68] sm:$0xff]
    %v3250 = vld [vmem:[#allocation14 + $0xd70] sm:$0xf]
    %v3251 = vld [vmem:[#allocation14 + $0xd74] sm:$0xff]
    %v3252 = vld [vmem:[#allocation14 + $0xd7c] sm:$0xff]
    %v3253 = vld [vmem:[#allocation14 + $0xd84] sm:$0xff]
    %v3254 = vld [vmem:[#allocation14 + $0xd8c] sm:$0xf]
    %v3255 = vld [vmem:[#allocation14 + $0xd90] sm:$0xff]
    %v3256 = vld [vmem:[#allocation14 + $0xd98] sm:$0xff]
    %v3257 = vld [vmem:[#allocation14 + $0xda0] sm:$0xff]
    %v3258 = vld [vmem:[#allocation14 + $0xda8] sm:$0xf]
    %v3259 = vld [vmem:[#allocation14 + $0xdac] sm:$0xff]
    %v3260 = vld [vmem:[#allocation14 + $0xdb4] sm:$0xff]
    %v3261 = vld [vmem:[#allocation14 + $0xdbc] sm:$0xff]
    %v3262 = vld [vmem:[#allocation14 + $0xdc4] sm:$0xf]
    %v3263 = vld [vmem:[#allocation14 + $0xdc8] sm:$0xff]
    %v3264 = vld [vmem:[#allocation14 + $0xdd0] sm:$0xff]
    %v3265 = vld [vmem:[#allocation14 + $0xdd8] sm:$0xff]
    %v3266 = vld [vmem:[#allocation14 + $0xde0] sm:$0xf]
    %v3267 = vld [vmem:[#allocation14 + $0xde4] sm:$0xff]
    %v3268 = vld [vmem:[#allocation14 + $0xdec] sm:$0xff]
    %v3269 = vld [vmem:[#allocation14 + $0xdf4] sm:$0xff]
    %v3270 = vld [vmem:[#allocation14 + $0xdfc] sm:$0xf]
    %v3271 = vld [vmem:[#allocation16] sm:$0xff]
    %v3273 = vperm.slane %v3271, 0
    %v3274 = vperm.slane %v3271, 1
    %v3275 = vperm.slane %v3271, 2
    %v3276 = vperm.slane %v3271, 3
    %v3277 = vperm.slane %v3271, 4
    %v3278 = vperm.slane %v3271, 5
    %v3279 = vperm.slane %v3271, 6
    %v3799 = vunpack.c.l.b16 %v2759
    %v3800 = vunpack.c.h.b16 %v2759
    %v3801 = vunpack.c.l.b16 %v2760
    %v3802 = vunpack.c.h.b16 %v2760
    %v3803 = vunpack.c.l.b16 %v2761
    %v3804 = vunpack.c.h.b16 %v2761
    %v3805 = vunpack.c.l.b16 %v2762
    %v3806 = vunpack.c.l.b16 %v2763
    %v3807 = vunpack.c.h.b16 %v2763
    %v3808 = vunpack.c.l.b16 %v2764
    %v3809 = vunpack.c.h.b16 %v2764
    %v3810 = vunpack.c.l.b16 %v2765
    %v3811 = vunpack.c.h.b16 %v2765
    %v3812 = vunpack.c.l.b16 %v2766
    %v3813 = vunpack.c.l.b16 %v2767
    %v3814 = vunpack.c.h.b16 %v2767
    %v3815 = vunpack.c.l.b16 %v2768
    %v3816 = vunpack.c.h.b16 %v2768
    %v3817 = vunpack.c.l.b16 %v2769
    %v3818 = vunpack.c.h.b16 %v2769
    %v3819 = vunpack.c.l.b16 %v2770
    %v3820 = vunpack.c.l.b16 %v2771
    %v3821 = vunpack.c.h.b16 %v2771
    %v3822 = vunpack.c.l.b16 %v2772
    %v3823 = vunpack.c.h.b16 %v2772
    %v3824 = vunpack.c.l.b16 %v2773
    %v3825 = vunpack.c.h.b16 %v2773
    %v3826 = vunpack.c.l.b16 %v2774
    %v3827 = vunpack.c.l.b16 %v2775
    %v3828 = vunpack.c.h.b16 %v2775
    %v3829 = vunpack.c.l.b16 %v2776
    %v3830 = vunpack.c.h.b16 %v2776
    %v3831 = vunpack.c.l.b16 %v2777
    %v3832 = vunpack.c.h.b16 %v2777
    %v3833 = vunpack.c.l.b16 %v2778
    %v3834 = vunpack.c.l.b16 %v2779
    %v3835 = vunpack.c.h.b16 %v2779
    %v3836 = vunpack.c.l.b16 %v2780
    %v3837 = vunpack.c.h.b16 %v2780
    %v3838 = vunpack.c.l.b16 %v2781
    %v3839 = vunpack.c.h.b16 %v2781
    %v3840 = vunpack.c.l.b16 %v2782
    %v3841 = vunpack.c.l.b16 %v2783
    %v3842 = vunpack.c.h.b16 %v2783
    %v3843 = vunpack.c.l.b16 %v2784
    %v3844 = vunpack.c.h.b16 %v2784
    %v3845 = vunpack.c.l.b16 %v2785
    %v3846 = vunpack.c.h.b16 %v2785
    %v3847 = vunpack.c.l.b16 %v2786
    %v3848 = vunpack.c.l.b16 %v2787
    %v3849 = vunpack.c.h.b16 %v2787
    %v3850 = vunpack.c.l.b16 %v2788
    %v3851 = vunpack.c.h.b16 %v2788
    %v3852 = vunpack.c.l.b16 %v2789
    %v3853 = vunpack.c.h.b16 %v2789
    %v3854 = vunpack.c.l.b16 %v2790
    %v3855 = vunpack.c.l.b16 %v2791
    %v3856 = vunpack.c.h.b16 %v2791
    %v3857 = vunpack.c.l.b16 %v2792
    %v3858 = vunpack.c.h.b16 %v2792
    %v3859 = vunpack.c.l.b16 %v2793
    %v3860 = vunpack.c.h.b16 %v2793
    %v3861 = vunpack.c.l.b16 %v2794
    %v3862 = vunpack.c.l.b16 %v2795
    %v3863 = vunpack.c.h.b16 %v2795
    %v3864 = vunpack.c.l.b16 %v2796
    %v3865 = vunpack.c.h.b16 %v2796
    %v3866 = vunpack.c.l.b16 %v2797
    %v3867 = vunpack.c.h.b16 %v2797
    %v3868 = vunpack.c.l.b16 %v2798
    %v3869 = vunpack.c.l.b16 %v2799
    %v3870 = vunpack.c.h.b16 %v2799
    %v3871 = vunpack.c.l.b16 %v2800
    %v3872 = vunpack.c.h.b16 %v2800
    %v3873 = vunpack.c.l.b16 %v2801
    %v3874 = vunpack.c.h.b16 %v2801
    %v3875 = vunpack.c.l.b16 %v2802
    %v3876 = vunpack.c.l.b16 %v2803
    %v3877 = vunpack.c.h.b16 %v2803
    %v3878 = vunpack.c.l.b16 %v2804
    %v3879 = vunpack.c.h.b16 %v2804
    %v3880 = vunpack.c.l.b16 %v2805
    %v3881 = vunpack.c.h.b16 %v2805
    %v3882 = vunpack.c.l.b16 %v2806
    %v3883 = vunpack.c.l.b16 %v2807
    %v3884 = vunpack.c.h.b16 %v2807
    %v3885 = vunpack.c.l.b16 %v2808
    %v3886 = vunpack.c.h.b16 %v2808
    %v3887 = vunpack.c.l.b16 %v2809
    %v3888 = vunpack.c.h.b16 %v2809
    %v3889 = vunpack.c.l.b16 %v2810
    %v3890 = vunpack.c.l.b16 %v2811
    %v3891 = vunpack.c.h.b16 %v2811
    %v3892 = vunpack.c.l.b16 %v2812
    %v3893 = vunpack.c.h.b16 %v2812
    %v3894 = vunpack.c.l.b16 %v2813
    %v3895 = vunpack.c.h.b16 %v2813
    %v3896 = vunpack.c.l.b16 %v2814
    %v3897 = vunpack.c.l.b16 %v2815
    %v3898 = vunpack.c.h.b16 %v2815
    %v3899 = vunpack.c.l.b16 %v2816
    %v3900 = vunpack.c.h.b16 %v2816
    %v3901 = vunpack.c.l.b16 %v2817
    %v3902 = vunpack.c.h.b16 %v2817
    %v3903 = vunpack.c.l.b16 %v2818
    %v3904 = vunpack.c.l.b16 %v2819
    %v3905 = vunpack.c.h.b16 %v2819
    %v3906 = vunpack.c.l.b16 %v2820
    %v3907 = vunpack.c.h.b16 %v2820
    %v3908 = vunpack.c.l.b16 %v2821
    %v3909 = vunpack.c.h.b16 %v2821
    %v3910 = vunpack.c.l.b16 %v2822
    %v3911 = vunpack.c.l.b16 %v2823
    %v3912 = vunpack.c.h.b16 %v2823
    %v3913 = vunpack.c.l.b16 %v2824
    %v3914 = vunpack.c.h.b16 %v2824
    %v3915 = vunpack.c.l.b16 %v2825
    %v3916 = vunpack.c.h.b16 %v2825
    %v3917 = vunpack.c.l.b16 %v2826
    %v3918 = vunpack.c.l.b16 %v2827
    %v3919 = vunpack.c.h.b16 %v2827
    %v3920 = vunpack.c.l.b16 %v2828
    %v3921 = vunpack.c.h.b16 %v2828
    %v3922 = vunpack.c.l.b16 %v2829
    %v3923 = vunpack.c.h.b16 %v2829
    %v3924 = vunpack.c.l.b16 %v2830
    %v3925 = vunpack.c.l.b16 %v2831
    %v3926 = vunpack.c.h.b16 %v2831
    %v3927 = vunpack.c.l.b16 %v2832
    %v3928 = vunpack.c.h.b16 %v2832
    %v3929 = vunpack.c.l.b16 %v2833
    %v3930 = vunpack.c.h.b16 %v2833
    %v3931 = vunpack.c.l.b16 %v2834
    %v3932 = vunpack.c.l.b16 %v2835
    %v3933 = vunpack.c.h.b16 %v2835
    %v3934 = vunpack.c.l.b16 %v2836
    %v3935 = vunpack.c.h.b16 %v2836
    %v3936 = vunpack.c.l.b16 %v2837
    %v3937 = vunpack.c.h.b16 %v2837
    %v3938 = vunpack.c.l.b16 %v2838
    %v3939 = vunpack.c.l.b16 %v2839
    %v3940 = vunpack.c.h.b16 %v2839
    %v3941 = vunpack.c.l.b16 %v2840
    %v3942 = vunpack.c.h.b16 %v2840
    %v3943 = vunpack.c.l.b16 %v2841
    %v3944 = vunpack.c.h.b16 %v2841
    %v3945 = vunpack.c.l.b16 %v2842
    %v3946 = vunpack.c.l.b16 %v2843
    %v3947 = vunpack.c.h.b16 %v2843
    %v3948 = vunpack.c.l.b16 %v2844
    %v3949 = vunpack.c.h.b16 %v2844
    %v3950 = vunpack.c.l.b16 %v2845
    %v3951 = vunpack.c.h.b16 %v2845
    %v3952 = vunpack.c.l.b16 %v2846
    %v3953 = vunpack.c.l.b16 %v2847
    %v3954 = vunpack.c.h.b16 %v2847
    %v3955 = vunpack.c.l.b16 %v2848
    %v3956 = vunpack.c.h.b16 %v2848
    %v3957 = vunpack.c.l.b16 %v2849
    %v3958 = vunpack.c.h.b16 %v2849
    %v3959 = vunpack.c.l.b16 %v2850
    %v3960 = vunpack.c.l.b16 %v2851
    %v3961 = vunpack.c.h.b16 %v2851
    %v3962 = vunpack.c.l.b16 %v2852
    %v3963 = vunpack.c.h.b16 %v2852
    %v3964 = vunpack.c.l.b16 %v2853
    %v3965 = vunpack.c.h.b16 %v2853
    %v3966 = vunpack.c.l.b16 %v2854
    %v3967 = vunpack.c.l.b16 %v2855
    %v3968 = vunpack.c.h.b16 %v2855
    %v3969 = vunpack.c.l.b16 %v2856
    %v3970 = vunpack.c.h.b16 %v2856
    %v3971 = vunpack.c.l.b16 %v2857
    %v3972 = vunpack.c.h.b16 %v2857
    %v3973 = vunpack.c.l.b16 %v2858
    %v3974 = vunpack.c.l.b16 %v2859
    %v3975 = vunpack.c.h.b16 %v2859
    %v3976 = vunpack.c.l.b16 %v2860
    %v3977 = vunpack.c.h.b16 %v2860
    %v3978 = vunpack.c.l.b16 %v2861
    %v3979 = vunpack.c.h.b16 %v2861
    %v3980 = vunpack.c.l.b16 %v2862
    %v3981 = vunpack.c.l.b16 %v2863
    %v3982 = vunpack.c.h.b16 %v2863
    %v3983 = vunpack.c.l.b16 %v2864
    %v3984 = vunpack.c.h.b16 %v2864
    %v3985 = vunpack.c.l.b16 %v2865
    %v3986 = vunpack.c.h.b16 %v2865
    %v3987 = vunpack.c.l.b16 %v2866
    %v3988 = vunpack.c.l.b16 %v2867
    %v3989 = vunpack.c.h.b16 %v2867
    %v3990 = vunpack.c.l.b16 %v2868
    %v3991 = vunpack.c.h.b16 %v2868
    %v3992 = vunpack.c.l.b16 %v2869
    %v3993 = vunpack.c.h.b16 %v2869
    %v3994 = vunpack.c.l.b16 %v2870
    %v3995 = vunpack.c.l.b16 %v2871
    %v3996 = vunpack.c.h.b16 %v2871
    %v3997 = vunpack.c.l.b16 %v2872
    %v3998 = vunpack.c.h.b16 %v2872
    %v3999 = vunpack.c.l.b16 %v2873
    %v4000 = vunpack.c.h.b16 %v2873
    %v4001 = vunpack.c.l.b16 %v2874
    %v4002 = vunpack.c.l.b16 %v2875
    %v4003 = vunpack.c.h.b16 %v2875
    %v4004 = vunpack.c.l.b16 %v2876
    %v4005 = vunpack.c.h.b16 %v2876
    %v4006 = vunpack.c.l.b16 %v2877
    %v4007 = vunpack.c.h.b16 %v2877
    %v4008 = vunpack.c.l.b16 %v2878
    %v4009 = vunpack.c.l.b16 %v2879
    %v4010 = vunpack.c.h.b16 %v2879
    %v4011 = vunpack.c.l.b16 %v2880
    %v4012 = vunpack.c.h.b16 %v2880
    %v4013 = vunpack.c.l.b16 %v2881
    %v4014 = vunpack.c.h.b16 %v2881
    %v4015 = vunpack.c.l.b16 %v2882
    %v4016 = vunpack.c.l.b16 %v2883
    %v4017 = vunpack.c.h.b16 %v2883
    %v4018 = vunpack.c.l.b16 %v2884
    %v4019 = vunpack.c.h.b16 %v2884
    %v4020 = vunpack.c.l.b16 %v2885
    %v4021 = vunpack.c.h.b16 %v2885
    %v4022 = vunpack.c.l.b16 %v2886
    %v4023 = vunpack.c.l.b16 %v2887
    %v4024 = vunpack.c.h.b16 %v2887
    %v4025 = vunpack.c.l.b16 %v2888
    %v4026 = vunpack.c.h.b16 %v2888
    %v4027 = vunpack.c.l.b16 %v2889
    %v4028 = vunpack.c.h.b16 %v2889
    %v4029 = vunpack.c.l.b16 %v2890
    %v4030 = vunpack.c.l.b16 %v2891
    %v4031 = vunpack.c.h.b16 %v2891
    %v4032 = vunpack.c.l.b16 %v2892
    %v4033 = vunpack.c.h.b16 %v2892
    %v4034 = vunpack.c.l.b16 %v2893
    %v4035 = vunpack.c.h.b16 %v2893
    %v4036 = vunpack.c.l.b16 %v2894
    %v4037 = vunpack.c.l.b16 %v2895
    %v4038 = vunpack.c.h.b16 %v2895
    %v4039 = vunpack.c.l.b16 %v2896
    %v4040 = vunpack.c.h.b16 %v2896
    %v4041 = vunpack.c.l.b16 %v2897
    %v4042 = vunpack.c.h.b16 %v2897
    %v4043 = vunpack.c.l.b16 %v2898
    %v4044 = vunpack.c.l.b16 %v2899
    %v4045 = vunpack.c.h.b16 %v2899
    %v4046 = vunpack.c.l.b16 %v2900
    %v4047 = vunpack.c.h.b16 %v2900
    %v4048 = vunpack.c.l.b16 %v2901
    %v4049 = vunpack.c.h.b16 %v2901
    %v4050 = vunpack.c.l.b16 %v2902
    %v4051 = vunpack.c.l.b16 %v2903
    %v4052 = vunpack.c.h.b16 %v2903
    %v4053 = vunpack.c.l.b16 %v2904
    %v4054 = vunpack.c.h.b16 %v2904
    %v4055 = vunpack.c.l.b16 %v2905
    %v4056 = vunpack.c.h.b16 %v2905
    %v4057 = vunpack.c.l.b16 %v2906
    %v4058 = vunpack.c.l.b16 %v2907
    %v4059 = vunpack.c.h.b16 %v2907
    %v4060 = vunpack.c.l.b16 %v2908
    %v4061 = vunpack.c.h.b16 %v2908
    %v4062 = vunpack.c.l.b16 %v2909
    %v4063 = vunpack.c.h.b16 %v2909
    %v4064 = vunpack.c.l.b16 %v2910
    %v4065 = vunpack.c.l.b16 %v2911
    %v4066 = vunpack.c.h.b16 %v2911
    %v4067 = vunpack.c.l.b16 %v2912
    %v4068 = vunpack.c.h.b16 %v2912
    %v4069 = vunpack.c.l.b16 %v2913
    %v4070 = vunpack.c.h.b16 %v2913
    %v4071 = vunpack.c.l.b16 %v2914
    %v4072 = vunpack.c.l.b16 %v2915
    %v4073 = vunpack.c.h.b16 %v2915
    %v4074 = vunpack.c.l.b16 %v2916
    %v4075 = vunpack.c.h.b16 %v2916
    %v4076 = vunpack.c.l.b16 %v2917
    %v4077 = vunpack.c.h.b16 %v2917
    %v4078 = vunpack.c.l.b16 %v2918
    %v4079 = vunpack.c.l.b16 %v2919
    %v4080 = vunpack.c.h.b16 %v2919
    %v4081 = vunpack.c.l.b16 %v2920
    %v4082 = vunpack.c.h.b16 %v2920
    %v4083 = vunpack.c.l.b16 %v2921
    %v4084 = vunpack.c.h.b16 %v2921
    %v4085 = vunpack.c.l.b16 %v2922
    %v4086 = vunpack.c.l.b16 %v2923
    %v4087 = vunpack.c.h.b16 %v2923
    %v4088 = vunpack.c.l.b16 %v2924
    %v4089 = vunpack.c.h.b16 %v2924
    %v4090 = vunpack.c.l.b16 %v2925
    %v4091 = vunpack.c.h.b16 %v2925
    %v4092 = vunpack.c.l.b16 %v2926
    %v4093 = vunpack.c.l.b16 %v2927
    %v4094 = vunpack.c.h.b16 %v2927
    %v4095 = vunpack.c.l.b16 %v2928
    %v4096 = vunpack.c.h.b16 %v2928
    %v4097 = vunpack.c.l.b16 %v2929
    %v4098 = vunpack.c.h.b16 %v2929
    %v4099 = vunpack.c.l.b16 %v2930
    %v4100 = vunpack.c.l.b16 %v2931
    %v4101 = vunpack.c.h.b16 %v2931
    %v4102 = vunpack.c.l.b16 %v2932
    %v4103 = vunpack.c.h.b16 %v2932
    %v4104 = vunpack.c.l.b16 %v2933
    %v4105 = vunpack.c.h.b16 %v2933
    %v4106 = vunpack.c.l.b16 %v2934
    %v4107 = vunpack.c.l.b16 %v2935
    %v4108 = vunpack.c.h.b16 %v2935
    %v4109 = vunpack.c.l.b16 %v2936
    %v4110 = vunpack.c.h.b16 %v2936
    %v4111 = vunpack.c.l.b16 %v2937
    %v4112 = vunpack.c.h.b16 %v2937
    %v4113 = vunpack.c.l.b16 %v2938
    %v4114 = vunpack.c.l.b16 %v2939
    %v4115 = vunpack.c.h.b16 %v2939
    %v4116 = vunpack.c.l.b16 %v2940
    %v4117 = vunpack.c.h.b16 %v2940
    %v4118 = vunpack.c.l.b16 %v2941
    %v4119 = vunpack.c.h.b16 %v2941
    %v4120 = vunpack.c.l.b16 %v2942
    %v4121 = vunpack.c.l.b16 %v2943
    %v4122 = vunpack.c.h.b16 %v2943
    %v4123 = vunpack.c.l.b16 %v2944
    %v4124 = vunpack.c.h.b16 %v2944
    %v4125 = vunpack.c.l.b16 %v2945
    %v4126 = vunpack.c.h.b16 %v2945
    %v4127 = vunpack.c.l.b16 %v2946
    %v4128 = vunpack.c.l.b16 %v2947
    %v4129 = vunpack.c.h.b16 %v2947
    %v4130 = vunpack.c.l.b16 %v2948
    %v4131 = vunpack.c.h.b16 %v2948
    %v4132 = vunpack.c.l.b16 %v2949
    %v4133 = vunpack.c.h.b16 %v2949
    %v4134 = vunpack.c.l.b16 %v2950
    %v4135 = vunpack.c.l.b16 %v2951
    %v4136 = vunpack.c.h.b16 %v2951
    %v4137 = vunpack.c.l.b16 %v2952
    %v4138 = vunpack.c.h.b16 %v2952
    %v4139 = vunpack.c.l.b16 %v2953
    %v4140 = vunpack.c.h.b16 %v2953
    %v4141 = vunpack.c.l.b16 %v2954
    %v4142 = vunpack.c.l.b16 %v2955
    %v4143 = vunpack.c.h.b16 %v2955
    %v4144 = vunpack.c.l.b16 %v2956
    %v4145 = vunpack.c.h.b16 %v2956
    %v4146 = vunpack.c.l.b16 %v2957
    %v4147 = vunpack.c.h.b16 %v2957
    %v4148 = vunpack.c.l.b16 %v2958
    %v4149 = vunpack.c.l.b16 %v2959
    %v4150 = vunpack.c.h.b16 %v2959
    %v4151 = vunpack.c.l.b16 %v2960
    %v4152 = vunpack.c.h.b16 %v2960
    %v4153 = vunpack.c.l.b16 %v2961
    %v4154 = vunpack.c.h.b16 %v2961
    %v4155 = vunpack.c.l.b16 %v2962
    %v4156 = vunpack.c.l.b16 %v2963
    %v4157 = vunpack.c.h.b16 %v2963
    %v4158 = vunpack.c.l.b16 %v2964
    %v4159 = vunpack.c.h.b16 %v2964
    %v4160 = vunpack.c.l.b16 %v2965
    %v4161 = vunpack.c.h.b16 %v2965
    %v4162 = vunpack.c.l.b16 %v2966
    %v4163 = vunpack.c.l.b16 %v2967
    %v4164 = vunpack.c.h.b16 %v2967
    %v4165 = vunpack.c.l.b16 %v2968
    %v4166 = vunpack.c.h.b16 %v2968
    %v4167 = vunpack.c.l.b16 %v2969
    %v4168 = vunpack.c.h.b16 %v2969
    %v4169 = vunpack.c.l.b16 %v2970
    %v4170 = vunpack.c.l.b16 %v2971
    %v4171 = vunpack.c.h.b16 %v2971
    %v4172 = vunpack.c.l.b16 %v2972
    %v4173 = vunpack.c.h.b16 %v2972
    %v4174 = vunpack.c.l.b16 %v2973
    %v4175 = vunpack.c.h.b16 %v2973
    %v4176 = vunpack.c.l.b16 %v2974
    %v4177 = vunpack.c.l.b16 %v2975
    %v4178 = vunpack.c.h.b16 %v2975
    %v4179 = vunpack.c.l.b16 %v2976
    %v4180 = vunpack.c.h.b16 %v2976
    %v4181 = vunpack.c.l.b16 %v2977
    %v4182 = vunpack.c.h.b16 %v2977
    %v4183 = vunpack.c.l.b16 %v2978
    %v4184 = vunpack.c.l.b16 %v2979
    %v4185 = vunpack.c.h.b16 %v2979
    %v4186 = vunpack.c.l.b16 %v2980
    %v4187 = vunpack.c.h.b16 %v2980
    %v4188 = vunpack.c.l.b16 %v2981
    %v4189 = vunpack.c.h.b16 %v2981
    %v4190 = vunpack.c.l.b16 %v2982
    %v4191 = vunpack.c.l.b16 %v2983
    %v4192 = vunpack.c.h.b16 %v2983
    %v4193 = vunpack.c.l.b16 %v2984
    %v4194 = vunpack.c.h.b16 %v2984
    %v4195 = vunpack.c.l.b16 %v2985
    %v4196 = vunpack.c.h.b16 %v2985
    %v4197 = vunpack.c.l.b16 %v2986
    %v4198 = vunpack.c.l.b16 %v2987
    %v4199 = vunpack.c.h.b16 %v2987
    %v4200 = vunpack.c.l.b16 %v2988
    %v4201 = vunpack.c.h.b16 %v2988
    %v4202 = vunpack.c.l.b16 %v2989
    %v4203 = vunpack.c.h.b16 %v2989
    %v4204 = vunpack.c.l.b16 %v2990
    %v4205 = vunpack.c.l.b16 %v2991
    %v4206 = vunpack.c.h.b16 %v2991
    %v4207 = vunpack.c.l.b16 %v2992
    %v4208 = vunpack.c.h.b16 %v2992
    %v4209 = vunpack.c.l.b16 %v2993
    %v4210 = vunpack.c.h.b16 %v2993
    %v4211 = vunpack.c.l.b16 %v2994
    %v4212 = vunpack.c.l.b16 %v2995
    %v4213 = vunpack.c.h.b16 %v2995
    %v4214 = vunpack.c.l.b16 %v2996
    %v4215 = vunpack.c.h.b16 %v2996
    %v4216 = vunpack.c.l.b16 %v2997
    %v4217 = vunpack.c.h.b16 %v2997
    %v4218 = vunpack.c.l.b16 %v2998
    %v4219 = vunpack.c.l.b16 %v2999
    %v4220 = vunpack.c.h.b16 %v2999
    %v4221 = vunpack.c.l.b16 %v3000
    %v4222 = vunpack.c.h.b16 %v3000
    %v4223 = vunpack.c.l.b16 %v3001
    %v4224 = vunpack.c.h.b16 %v3001
    %v4225 = vunpack.c.l.b16 %v3002
    %v4226 = vunpack.c.l.b16 %v3003
    %v4227 = vunpack.c.h.b16 %v3003
    %v4228 = vunpack.c.l.b16 %v3004
    %v4229 = vunpack.c.h.b16 %v3004
    %v4230 = vunpack.c.l.b16 %v3005
    %v4231 = vunpack.c.h.b16 %v3005
    %v4232 = vunpack.c.l.b16 %v3006
    %v4233 = vunpack.c.l.b16 %v3007
    %v4234 = vunpack.c.h.b16 %v3007
    %v4235 = vunpack.c.l.b16 %v3008
    %v4236 = vunpack.c.h.b16 %v3008
    %v4237 = vunpack.c.l.b16 %v3009
    %v4238 = vunpack.c.h.b16 %v3009
    %v4239 = vunpack.c.l.b16 %v3010
    %v4240 = vunpack.c.l.b16 %v3011
    %v4241 = vunpack.c.h.b16 %v3011
    %v4242 = vunpack.c.l.b16 %v3012
    %v4243 = vunpack.c.h.b16 %v3012
    %v4244 = vunpack.c.l.b16 %v3013
    %v4245 = vunpack.c.h.b16 %v3013
    %v4246 = vunpack.c.l.b16 %v3014
    %v4247 = vunpack.c.l.b16 %v3015
    %v4248 = vunpack.c.h.b16 %v3015
    %v4249 = vunpack.c.l.b16 %v3016
    %v4250 = vunpack.c.h.b16 %v3016
    %v4251 = vunpack.c.l.b16 %v3017
    %v4252 = vunpack.c.h.b16 %v3017
    %v4253 = vunpack.c.l.b16 %v3018
    %v4254 = vunpack.c.l.b16 %v3019
    %v4255 = vunpack.c.h.b16 %v3019
    %v4256 = vunpack.c.l.b16 %v3020
    %v4257 = vunpack.c.h.b16 %v3020
    %v4258 = vunpack.c.l.b16 %v3021
    %v4259 = vunpack.c.h.b16 %v3021
    %v4260 = vunpack.c.l.b16 %v3022
    %v4261 = vunpack.c.l.b16 %v3023
    %v4262 = vunpack.c.h.b16 %v3023
    %v4263 = vunpack.c.l.b16 %v3024
    %v4264 = vunpack.c.h.b16 %v3024
    %v4265 = vunpack.c.l.b16 %v3025
    %v4266 = vunpack.c.h.b16 %v3025
    %v4267 = vunpack.c.l.b16 %v3026
    %v4268 = vunpack.c.l.b16 %v3027
    %v4269 = vunpack.c.h.b16 %v3027
    %v4270 = vunpack.c.l.b16 %v3028
    %v4271 = vunpack.c.h.b16 %v3028
    %v4272 = vunpack.c.l.b16 %v3029
    %v4273 = vunpack.c.h.b16 %v3029
    %v4274 = vunpack.c.l.b16 %v3030
    %v4275 = vunpack.c.l.b16 %v3031
    %v4276 = vunpack.c.h.b16 %v3031
    %v4277 = vunpack.c.l.b16 %v3032
    %v4278 = vunpack.c.h.b16 %v3032
    %v4279 = vunpack.c.l.b16 %v3033
    %v4280 = vunpack.c.h.b16 %v3033
    %v4281 = vunpack.c.l.b16 %v3034
    %v4282 = vunpack.c.l.b16 %v3035
    %v4283 = vunpack.c.h.b16 %v3035
    %v4284 = vunpack.c.l.b16 %v3036
    %v4285 = vunpack.c.h.b16 %v3036
    %v4286 = vunpack.c.l.b16 %v3037
    %v4287 = vunpack.c.h.b16 %v3037
    %v4288 = vunpack.c.l.b16 %v3038
    %v4289 = vunpack.c.l.b16 %v3039
    %v4290 = vunpack.c.h.b16 %v3039
    %v4291 = vunpack.c.l.b16 %v3040
    %v4292 = vunpack.c.h.b16 %v3040
    %v4293 = vunpack.c.l.b16 %v3041
    %v4294 = vunpack.c.h.b16 %v3041
    %v4295 = vunpack.c.l.b16 %v3042
    %v4296 = vunpack.c.l.b16 %v3043
    %v4297 = vunpack.c.h.b16 %v3043
    %v4298 = vunpack.c.l.b16 %v3044
    %v4299 = vunpack.c.h.b16 %v3044
    %v4300 = vunpack.c.l.b16 %v3045
    %v4301 = vunpack.c.h.b16 %v3045
    %v4302 = vunpack.c.l.b16 %v3046
    %v4303 = vunpack.c.l.b16 %v3047
    %v4304 = vunpack.c.h.b16 %v3047
    %v4305 = vunpack.c.l.b16 %v3048
    %v4306 = vunpack.c.h.b16 %v3048
    %v4307 = vunpack.c.l.b16 %v3049
    %v4308 = vunpack.c.h.b16 %v3049
    %v4309 = vunpack.c.l.b16 %v3050
    %v4310 = vunpack.c.l.b16 %v3051
    %v4311 = vunpack.c.h.b16 %v3051
    %v4312 = vunpack.c.l.b16 %v3052
    %v4313 = vunpack.c.h.b16 %v3052
    %v4314 = vunpack.c.l.b16 %v3053
    %v4315 = vunpack.c.h.b16 %v3053
    %v4316 = vunpack.c.l.b16 %v3054
    %v4317 = vunpack.c.l.b16 %v3055
    %v4318 = vunpack.c.h.b16 %v3055
    %v4319 = vunpack.c.l.b16 %v3056
    %v4320 = vunpack.c.h.b16 %v3056
    %v4321 = vunpack.c.l.b16 %v3057
    %v4322 = vunpack.c.h.b16 %v3057
    %v4323 = vunpack.c.l.b16 %v3058
    %v4324 = vunpack.c.l.b16 %v3059
    %v4325 = vunpack.c.h.b16 %v3059
    %v4326 = vunpack.c.l.b16 %v3060
    %v4327 = vunpack.c.h.b16 %v3060
    %v4328 = vunpack.c.l.b16 %v3061
    %v4329 = vunpack.c.h.b16 %v3061
    %v4330 = vunpack.c.l.b16 %v3062
    %v4331 = vunpack.c.l.b16 %v3063
    %v4332 = vunpack.c.h.b16 %v3063
    %v4333 = vunpack.c.l.b16 %v3064
    %v4334 = vunpack.c.h.b16 %v3064
    %v4335 = vunpack.c.l.b16 %v3065
    %v4336 = vunpack.c.h.b16 %v3065
    %v4337 = vunpack.c.l.b16 %v3066
    %v4338 = vunpack.c.l.b16 %v3067
    %v4339 = vunpack.c.h.b16 %v3067
    %v4340 = vunpack.c.l.b16 %v3068
    %v4341 = vunpack.c.h.b16 %v3068
    %v4342 = vunpack.c.l.b16 %v3069
    %v4343 = vunpack.c.h.b16 %v3069
    %v4344 = vunpack.c.l.b16 %v3070
    %v4345 = vunpack.c.l.b16 %v3071
    %v4346 = vunpack.c.h.b16 %v3071
    %v4347 = vunpack.c.l.b16 %v3072
    %v4348 = vunpack.c.h.b16 %v3072
    %v4349 = vunpack.c.l.b16 %v3073
    %v4350 = vunpack.c.h.b16 %v3073
    %v4351 = vunpack.c.l.b16 %v3074
    %v4352 = vunpack.c.l.b16 %v3075
    %v4353 = vunpack.c.h.b16 %v3075
    %v4354 = vunpack.c.l.b16 %v3076
    %v4355 = vunpack.c.h.b16 %v3076
    %v4356 = vunpack.c.l.b16 %v3077
    %v4357 = vunpack.c.h.b16 %v3077
    %v4358 = vunpack.c.l.b16 %v3078
    %v4359 = vunpack.c.l.b16 %v3079
    %v4360 = vunpack.c.h.b16 %v3079
    %v4361 = vunpack.c.l.b16 %v3080
    %v4362 = vunpack.c.h.b16 %v3080
    %v4363 = vunpack.c.l.b16 %v3081
    %v4364 = vunpack.c.h.b16 %v3081
    %v4365 = vunpack.c.l.b16 %v3082
    %v4366 = vunpack.c.l.b16 %v3083
    %v4367 = vunpack.c.h.b16 %v3083
    %v4368 = vunpack.c.l.b16 %v3084
    %v4369 = vunpack.c.h.b16 %v3084
    %v4370 = vunpack.c.l.b16 %v3085
    %v4371 = vunpack.c.h.b16 %v3085
    %v4372 = vunpack.c.l.b16 %v3086
    %v4373 = vunpack.c.l.b16 %v3087
    %v4374 = vunpack.c.h.b16 %v3087
    %v4375 = vunpack.c.l.b16 %v3088
    %v4376 = vunpack.c.h.b16 %v3088
    %v4377 = vunpack.c.l.b16 %v3089
    %v4378 = vunpack.c.h.b16 %v3089
    %v4379 = vunpack.c.l.b16 %v3090
    %v4380 = vunpack.c.l.b16 %v3091
    %v4381 = vunpack.c.h.b16 %v3091
    %v4382 = vunpack.c.l.b16 %v3092
    %v4383 = vunpack.c.h.b16 %v3092
    %v4384 = vunpack.c.l.b16 %v3093
    %v4385 = vunpack.c.h.b16 %v3093
    %v4386 = vunpack.c.l.b16 %v3094
    %v4387 = vunpack.c.l.b16 %v3095
    %v4388 = vunpack.c.h.b16 %v3095
    %v4389 = vunpack.c.l.b16 %v3096
    %v4390 = vunpack.c.h.b16 %v3096
    %v4391 = vunpack.c.l.b16 %v3097
    %v4392 = vunpack.c.h.b16 %v3097
    %v4393 = vunpack.c.l.b16 %v3098
    %v4394 = vunpack.c.l.b16 %v3099
    %v4395 = vunpack.c.h.b16 %v3099
    %v4396 = vunpack.c.l.b16 %v3100
    %v4397 = vunpack.c.h.b16 %v3100
    %v4398 = vunpack.c.l.b16 %v3101
    %v4399 = vunpack.c.h.b16 %v3101
    %v4400 = vunpack.c.l.b16 %v3102
    %v4401 = vunpack.c.l.b16 %v3103
    %v4402 = vunpack.c.h.b16 %v3103
    %v4403 = vunpack.c.l.b16 %v3104
    %v4404 = vunpack.c.h.b16 %v3104
    %v4405 = vunpack.c.l.b16 %v3105
    %v4406 = vunpack.c.h.b16 %v3105
    %v4407 = vunpack.c.l.b16 %v3106
    %v4408 = vunpack.c.l.b16 %v3107
    %v4409 = vunpack.c.h.b16 %v3107
    %v4410 = vunpack.c.l.b16 %v3108
    %v4411 = vunpack.c.h.b16 %v3108
    %v4412 = vunpack.c.l.b16 %v3109
    %v4413 = vunpack.c.h.b16 %v3109
    %v4414 = vunpack.c.l.b16 %v3110
    %v4415 = vunpack.c.l.b16 %v3111
    %v4416 = vunpack.c.h.b16 %v3111
    %v4417 = vunpack.c.l.b16 %v3112
    %v4418 = vunpack.c.h.b16 %v3112
    %v4419 = vunpack.c.l.b16 %v3113
    %v4420 = vunpack.c.h.b16 %v3113
    %v4421 = vunpack.c.l.b16 %v3114
    %v4422 = vunpack.c.l.b16 %v3115
    %v4423 = vunpack.c.h.b16 %v3115
    %v4424 = vunpack.c.l.b16 %v3116
    %v4425 = vunpack.c.h.b16 %v3116
    %v4426 = vunpack.c.l.b16 %v3117
    %v4427 = vunpack.c.h.b16 %v3117
    %v4428 = vunpack.c.l.b16 %v3118
    %v4429 = vunpack.c.l.b16 %v3119
    %v4430 = vunpack.c.h.b16 %v3119
    %v4431 = vunpack.c.l.b16 %v3120
    %v4432 = vunpack.c.h.b16 %v3120
    %v4433 = vunpack.c.l.b16 %v3121
    %v4434 = vunpack.c.h.b16 %v3121
    %v4435 = vunpack.c.l.b16 %v3122
    %v4436 = vunpack.c.l.b16 %v3123
    %v4437 = vunpack.c.h.b16 %v3123
    %v4438 = vunpack.c.l.b16 %v3124
    %v4439 = vunpack.c.h.b16 %v3124
    %v4440 = vunpack.c.l.b16 %v3125
    %v4441 = vunpack.c.h.b16 %v3125
    %v4442 = vunpack.c.l.b16 %v3126
    %v4443 = vunpack.c.l.b16 %v3127
    %v4444 = vunpack.c.h.b16 %v3127
    %v4445 = vunpack.c.l.b16 %v3128
    %v4446 = vunpack.c.h.b16 %v3128
    %v4447 = vunpack.c.l.b16 %v3129
    %v4448 = vunpack.c.h.b16 %v3129
    %v4449 = vunpack.c.l.b16 %v3130
    %v4450 = vunpack.c.l.b16 %v3131
    %v4451 = vunpack.c.h.b16 %v3131
    %v4452 = vunpack.c.l.b16 %v3132
    %v4453 = vunpack.c.h.b16 %v3132
    %v4454 = vunpack.c.l.b16 %v3133
    %v4455 = vunpack.c.h.b16 %v3133
    %v4456 = vunpack.c.l.b16 %v3134
    %v4457 = vunpack.c.l.b16 %v3135
    %v4458 = vunpack.c.h.b16 %v3135
    %v4459 = vunpack.c.l.b16 %v3136
    %v4460 = vunpack.c.h.b16 %v3136
    %v4461 = vunpack.c.l.b16 %v3137
    %v4462 = vunpack.c.h.b16 %v3137
    %v4463 = vunpack.c.l.b16 %v3138
    %v4464 = vunpack.c.l.b16 %v3139
    %v4465 = vunpack.c.h.b16 %v3139
    %v4466 = vunpack.c.l.b16 %v3140
    %v4467 = vunpack.c.h.b16 %v3140
    %v4468 = vunpack.c.l.b16 %v3141
    %v4469 = vunpack.c.h.b16 %v3141
    %v4470 = vunpack.c.l.b16 %v3142
    %v4471 = vunpack.c.l.b16 %v3143
    %v4472 = vunpack.c.h.b16 %v3143
    %v4473 = vunpack.c.l.b16 %v3144
    %v4474 = vunpack.c.h.b16 %v3144
    %v4475 = vunpack.c.l.b16 %v3145
    %v4476 = vunpack.c.h.b16 %v3145
    %v4477 = vunpack.c.l.b16 %v3146
    %v4478 = vunpack.c.l.b16 %v3147
    %v4479 = vunpack.c.h.b16 %v3147
    %v4480 = vunpack.c.l.b16 %v3148
    %v4481 = vunpack.c.h.b16 %v3148
    %v4482 = vunpack.c.l.b16 %v3149
    %v4483 = vunpack.c.h.b16 %v3149
    %v4484 = vunpack.c.l.b16 %v3150
    %v4485 = vunpack.c.l.b16 %v3151
    %v4486 = vunpack.c.h.b16 %v3151
    %v4487 = vunpack.c.l.b16 %v3152
    %v4488 = vunpack.c.h.b16 %v3152
    %v4489 = vunpack.c.l.b16 %v3153
    %v4490 = vunpack.c.h.b16 %v3153
    %v4491 = vunpack.c.l.b16 %v3154
    %v4492 = vunpack.c.l.b16 %v3155
    %v4493 = vunpack.c.h.b16 %v3155
    %v4494 = vunpack.c.l.b16 %v3156
    %v4495 = vunpack.c.h.b16 %v3156
    %v4496 = vunpack.c.l.b16 %v3157
    %v4497 = vunpack.c.h.b16 %v3157
    %v4498 = vunpack.c.l.b16 %v3158
    %v4499 = vunpack.c.l.b16 %v3159
    %v4500 = vunpack.c.h.b16 %v3159
    %v4501 = vunpack.c.l.b16 %v3160
    %v4502 = vunpack.c.h.b16 %v3160
    %v4503 = vunpack.c.l.b16 %v3161
    %v4504 = vunpack.c.h.b16 %v3161
    %v4505 = vunpack.c.l.b16 %v3162
    %v4506 = vunpack.c.l.b16 %v3163
    %v4507 = vunpack.c.h.b16 %v3163
    %v4508 = vunpack.c.l.b16 %v3164
    %v4509 = vunpack.c.h.b16 %v3164
    %v4510 = vunpack.c.l.b16 %v3165
    %v4511 = vunpack.c.h.b16 %v3165
    %v4512 = vunpack.c.l.b16 %v3166
    %v4513 = vunpack.c.l.b16 %v3167
    %v4514 = vunpack.c.h.b16 %v3167
    %v4515 = vunpack.c.l.b16 %v3168
    %v4516 = vunpack.c.h.b16 %v3168
    %v4517 = vunpack.c.l.b16 %v3169
    %v4518 = vunpack.c.h.b16 %v3169
    %v4519 = vunpack.c.l.b16 %v3170
    %v4520 = vunpack.c.l.b16 %v3171
    %v4521 = vunpack.c.h.b16 %v3171
    %v4522 = vunpack.c.l.b16 %v3172
    %v4523 = vunpack.c.h.b16 %v3172
    %v4524 = vunpack.c.l.b16 %v3173
    %v4525 = vunpack.c.h.b16 %v3173
    %v4526 = vunpack.c.l.b16 %v3174
    %v4527 = vunpack.c.l.b16 %v3175
    %v4528 = vunpack.c.h.b16 %v3175
    %v4529 = vunpack.c.l.b16 %v3176
    %v4530 = vunpack.c.h.b16 %v3176
    %v4531 = vunpack.c.l.b16 %v3177
    %v4532 = vunpack.c.h.b16 %v3177
    %v4533 = vunpack.c.l.b16 %v3178
    %v4534 = vunpack.c.l.b16 %v3179
    %v4535 = vunpack.c.h.b16 %v3179
    %v4536 = vunpack.c.l.b16 %v3180
    %v4537 = vunpack.c.h.b16 %v3180
    %v4538 = vunpack.c.l.b16 %v3181
    %v4539 = vunpack.c.h.b16 %v3181
    %v4540 = vunpack.c.l.b16 %v3182
    %v4541 = vunpack.c.l.b16 %v3183
    %v4542 = vunpack.c.h.b16 %v3183
    %v4543 = vunpack.c.l.b16 %v3184
    %v4544 = vunpack.c.h.b16 %v3184
    %v4545 = vunpack.c.l.b16 %v3185
    %v4546 = vunpack.c.h.b16 %v3185
    %v4547 = vunpack.c.l.b16 %v3186
    %v4548 = vunpack.c.l.b16 %v3187
    %v4549 = vunpack.c.h.b16 %v3187
    %v4550 = vunpack.c.l.b16 %v3188
    %v4551 = vunpack.c.h.b16 %v3188
    %v4552 = vunpack.c.l.b16 %v3189
    %v4553 = vunpack.c.h.b16 %v3189
    %v4554 = vunpack.c.l.b16 %v3190
    %v4555 = vunpack.c.l.b16 %v3191
    %v4556 = vunpack.c.h.b16 %v3191
    %v4557 = vunpack.c.l.b16 %v3192
    %v4558 = vunpack.c.h.b16 %v3192
    %v4559 = vunpack.c.l.b16 %v3193
    %v4560 = vunpack.c.h.b16 %v3193
    %v4561 = vunpack.c.l.b16 %v3194
    %v4562 = vunpack.c.l.b16 %v3195
    %v4563 = vunpack.c.h.b16 %v3195
    %v4564 = vunpack.c.l.b16 %v3196
    %v4565 = vunpack.c.h.b16 %v3196
    %v4566 = vunpack.c.l.b16 %v3197
    %v4567 = vunpack.c.h.b16 %v3197
    %v4568 = vunpack.c.l.b16 %v3198
    %v4569 = vunpack.c.l.b16 %v3199
    %v4570 = vunpack.c.h.b16 %v3199
    %v4571 = vunpack.c.l.b16 %v3200
    %v4572 = vunpack.c.h.b16 %v3200
    %v4573 = vunpack.c.l.b16 %v3201
    %v4574 = vunpack.c.h.b16 %v3201
    %v4575 = vunpack.c.l.b16 %v3202
    %v4576 = vunpack.c.l.b16 %v3203
    %v4577 = vunpack.c.h.b16 %v3203
    %v4578 = vunpack.c.l.b16 %v3204
    %v4579 = vunpack.c.h.b16 %v3204
    %v4580 = vunpack.c.l.b16 %v3205
    %v4581 = vunpack.c.h.b16 %v3205
    %v4582 = vunpack.c.l.b16 %v3206
    %v4583 = vunpack.c.l.b16 %v3207
    %v4584 = vunpack.c.h.b16 %v3207
    %v4585 = vunpack.c.l.b16 %v3208
    %v4586 = vunpack.c.h.b16 %v3208
    %v4587 = vunpack.c.l.b16 %v3209
    %v4588 = vunpack.c.h.b16 %v3209
    %v4589 = vunpack.c.l.b16 %v3210
    %v4590 = vunpack.c.l.b16 %v3211
    %v4591 = vunpack.c.h.b16 %v3211
    %v4592 = vunpack.c.l.b16 %v3212
    %v4593 = vunpack.c.h.b16 %v3212
    %v4594 = vunpack.c.l.b16 %v3213
    %v4595 = vunpack.c.h.b16 %v3213
    %v4596 = vunpack.c.l.b16 %v3214
    %v4597 = vunpack.c.l.b16 %v3215
    %v4598 = vunpack.c.h.b16 %v3215
    %v4599 = vunpack.c.l.b16 %v3216
    %v4600 = vunpack.c.h.b16 %v3216
    %v4601 = vunpack.c.l.b16 %v3217
    %v4602 = vunpack.c.h.b16 %v3217
    %v4603 = vunpack.c.l.b16 %v3218
    %v4604 = vunpack.c.l.b16 %v3219
    %v4605 = vunpack.c.h.b16 %v3219
    %v4606 = vunpack.c.l.b16 %v3220
    %v4607 = vunpack.c.h.b16 %v3220
    %v4608 = vunpack.c.l.b16 %v3221
    %v4609 = vunpack.c.h.b16 %v3221
    %v4610 = vunpack.c.l.b16 %v3222
    %v4611 = vunpack.c.l.b16 %v3223
    %v4612 = vunpack.c.h.b16 %v3223
    %v4613 = vunpack.c.l.b16 %v3224
    %v4614 = vunpack.c.h.b16 %v3224
    %v4615 = vunpack.c.l.b16 %v3225
    %v4616 = vunpack.c.h.b16 %v3225
    %v4617 = vunpack.c.l.b16 %v3226
    %v4618 = vunpack.c.l.b16 %v3227
    %v4619 = vunpack.c.h.b16 %v3227
    %v4620 = vunpack.c.l.b16 %v3228
    %v4621 = vunpack.c.h.b16 %v3228
    %v4622 = vunpack.c.l.b16 %v3229
    %v4623 = vunpack.c.h.b16 %v3229
    %v4624 = vunpack.c.l.b16 %v3230
    %v4625 = vunpack.c.l.b16 %v3231
    %v4626 = vunpack.c.h.b16 %v3231
    %v4627 = vunpack.c.l.b16 %v3232
    %v4628 = vunpack.c.h.b16 %v3232
    %v4629 = vunpack.c.l.b16 %v3233
    %v4630 = vunpack.c.h.b16 %v3233
    %v4631 = vunpack.c.l.b16 %v3234
    %v4632 = vunpack.c.l.b16 %v3235
    %v4633 = vunpack.c.h.b16 %v3235
    %v4634 = vunpack.c.l.b16 %v3236
    %v4635 = vunpack.c.h.b16 %v3236
    %v4636 = vunpack.c.l.b16 %v3237
    %v4637 = vunpack.c.h.b16 %v3237
    %v4638 = vunpack.c.l.b16 %v3238
    %v4639 = vunpack.c.l.b16 %v3239
    %v4640 = vunpack.c.h.b16 %v3239
    %v4641 = vunpack.c.l.b16 %v3240
    %v4642 = vunpack.c.h.b16 %v3240
    %v4643 = vunpack.c.l.b16 %v3241
    %v4644 = vunpack.c.h.b16 %v3241
    %v4645 = vunpack.c.l.b16 %v3242
    %v4646 = vunpack.c.l.b16 %v3243
    %v4647 = vunpack.c.h.b16 %v3243
    %v4648 = vunpack.c.l.b16 %v3244
    %v4649 = vunpack.c.h.b16 %v3244
    %v4650 = vunpack.c.l.b16 %v3245
    %v4651 = vunpack.c.h.b16 %v3245
    %v4652 = vunpack.c.l.b16 %v3246
    %v4653 = vunpack.c.l.b16 %v3247
    %v4654 = vunpack.c.h.b16 %v3247
    %v4655 = vunpack.c.l.b16 %v3248
    %v4656 = vunpack.c.h.b16 %v3248
    %v4657 = vunpack.c.l.b16 %v3249
    %v4658 = vunpack.c.h.b16 %v3249
    %v4659 = vunpack.c.l.b16 %v3250
    %v4660 = vunpack.c.l.b16 %v3251
    %v4661 = vunpack.c.h.b16 %v3251
    %v4662 = vunpack.c.l.b16 %v3252
    %v4663 = vunpack.c.h.b16 %v3252
    %v4664 = vunpack.c.l.b16 %v3253
    %v4665 = vunpack.c.h.b16 %v3253
    %v4666 = vunpack.c.l.b16 %v3254
    %v4667 = vunpack.c.l.b16 %v3255
    %v4668 = vunpack.c.h.b16 %v3255
    %v4669 = vunpack.c.l.b16 %v3256
    %v4670 = vunpack.c.h.b16 %v3256
    %v4671 = vunpack.c.l.b16 %v3257
    %v4672 = vunpack.c.h.b16 %v3257
    %v4673 = vunpack.c.l.b16 %v3258
    %v4674 = vunpack.c.l.b16 %v3259
    %v4675 = vunpack.c.h.b16 %v3259
    %v4676 = vunpack.c.l.b16 %v3260
    %v4677 = vunpack.c.h.b16 %v3260
    %v4678 = vunpack.c.l.b16 %v3261
    %v4679 = vunpack.c.h.b16 %v3261
    %v4680 = vunpack.c.l.b16 %v3262
    %v4681 = vunpack.c.l.b16 %v3263
    %v4682 = vunpack.c.h.b16 %v3263
    %v4683 = vunpack.c.l.b16 %v3264
    %v4684 = vunpack.c.h.b16 %v3264
    %v4685 = vunpack.c.l.b16 %v3265
    %v4686 = vunpack.c.h.b16 %v3265
    %v4687 = vunpack.c.l.b16 %v3266
    %v4688 = vunpack.c.l.b16 %v3267
    %v4689 = vunpack.c.h.b16 %v3267
    %v4690 = vunpack.c.l.b16 %v3268
    %v4691 = vunpack.c.h.b16 %v3268
    %v4692 = vunpack.c.l.b16 %v3269
    %v4693 = vunpack.c.h.b16 %v3269
    %v4694 = vunpack.c.l.b16 %v3270
    %v4695 = vpack.c.b16 %v3806, %v3799
    %v4696 = vpack.c.b16 %v3807, %v3800
    %v4697 = vpack.c.b16 %v3808, %v3801
    %v4698 = vpack.c.b16 %v3809, %v3802
    %v4699 = vpack.c.b16 %v3810, %v3803
    %v4700 = vpack.c.b16 %v3811, %v3804
    %v4701 = vpack.c.b16 %v3812, %v3805
    %v4702 = vpack.c.b16 %v3820, %v3813
    %v4703 = vpack.c.b16 %v3821, %v3814
    %v4704 = vpack.c.b16 %v3822, %v3815
    %v4705 = vpack.c.b16 %v3823, %v3816
    %v4706 = vpack.c.b16 %v3824, %v3817
    %v4707 = vpack.c.b16 %v3825, %v3818
    %v4708 = vpack.c.b16 %v3826, %v3819
    %v4709 = vpack.c.b16 %v3834, %v3827
    %v4710 = vpack.c.b16 %v3835, %v3828
    %v4711 = vpack.c.b16 %v3836, %v3829
    %v4712 = vpack.c.b16 %v3837, %v3830
    %v4713 = vpack.c.b16 %v3838, %v3831
    %v4714 = vpack.c.b16 %v3839, %v3832
    %v4715 = vpack.c.b16 %v3840, %v3833
    %v4716 = vpack.c.b16 %v3848, %v3841
    %v4717 = vpack.c.b16 %v3849, %v3842
    %v4718 = vpack.c.b16 %v3850, %v3843
    %v4719 = vpack.c.b16 %v3851, %v3844
    %v4720 = vpack.c.b16 %v3852, %v3845
    %v4721 = vpack.c.b16 %v3853, %v3846
    %v4722 = vpack.c.b16 %v3854, %v3847
    %v4723 = vpack.c.b16 %v3862, %v3855
    %v4724 = vpack.c.b16 %v3863, %v3856
    %v4725 = vpack.c.b16 %v3864, %v3857
    %v4726 = vpack.c.b16 %v3865, %v3858
    %v4727 = vpack.c.b16 %v3866, %v3859
    %v4728 = vpack.c.b16 %v3867, %v3860
    %v4729 = vpack.c.b16 %v3868, %v3861
    %v4730 = vpack.c.b16 %v3876, %v3869
    %v4731 = vpack.c.b16 %v3877, %v3870
    %v4732 = vpack.c.b16 %v3878, %v3871
    %v4733 = vpack.c.b16 %v3879, %v3872
    %v4734 = vpack.c.b16 %v3880, %v3873
    %v4735 = vpack.c.b16 %v3881, %v3874
    %v4736 = vpack.c.b16 %v3882, %v3875
    %v4737 = vpack.c.b16 %v3890, %v3883
    %v4738 = vpack.c.b16 %v3891, %v3884
    %v4739 = vpack.c.b16 %v3892, %v3885
    %v4740 = vpack.c.b16 %v3893, %v3886
    %v4741 = vpack.c.b16 %v3894, %v3887
    %v4742 = vpack.c.b16 %v3895, %v3888
    %v4743 = vpack.c.b16 %v3896, %v3889
    %v4744 = vpack.c.b16 %v3904, %v3897
    %v4745 = vpack.c.b16 %v3905, %v3898
    %v4746 = vpack.c.b16 %v3906, %v3899
    %v4747 = vpack.c.b16 %v3907, %v3900
    %v4748 = vpack.c.b16 %v3908, %v3901
    %v4749 = vpack.c.b16 %v3909, %v3902
    %v4750 = vpack.c.b16 %v3910, %v3903
    %v4751 = vpack.c.b16 %v3918, %v3911
    %v4752 = vpack.c.b16 %v3919, %v3912
    %v4753 = vpack.c.b16 %v3920, %v3913
    %v4754 = vpack.c.b16 %v3921, %v3914
    %v4755 = vpack.c.b16 %v3922, %v3915
    %v4756 = vpack.c.b16 %v3923, %v3916
    %v4757 = vpack.c.b16 %v3924, %v3917
    %v4758 = vpack.c.b16 %v3932, %v3925
    %v4759 = vpack.c.b16 %v3933, %v3926
    %v4760 = vpack.c.b16 %v3934, %v3927
    %v4761 = vpack.c.b16 %v3935, %v3928
    %v4762 = vpack.c.b16 %v3936, %v3929
    %v4763 = vpack.c.b16 %v3937, %v3930
    %v4764 = vpack.c.b16 %v3938, %v3931
    %v4765 = vpack.c.b16 %v3946, %v3939
    %v4766 = vpack.c.b16 %v3947, %v3940
    %v4767 = vpack.c.b16 %v3948, %v3941
    %v4768 = vpack.c.b16 %v3949, %v3942
    %v4769 = vpack.c.b16 %v3950, %v3943
    %v4770 = vpack.c.b16 %v3951, %v3944
    %v4771 = vpack.c.b16 %v3952, %v3945
    %v4772 = vpack.c.b16 %v3960, %v3953
    %v4773 = vpack.c.b16 %v3961, %v3954
    %v4774 = vpack.c.b16 %v3962, %v3955
    %v4775 = vpack.c.b16 %v3963, %v3956
    %v4776 = vpack.c.b16 %v3964, %v3957
    %v4777 = vpack.c.b16 %v3965, %v3958
    %v4778 = vpack.c.b16 %v3966, %v3959
    %v4779 = vpack.c.b16 %v3974, %v3967
    %v4780 = vpack.c.b16 %v3975, %v3968
    %v4781 = vpack.c.b16 %v3976, %v3969
    %v4782 = vpack.c.b16 %v3977, %v3970
    %v4783 = vpack.c.b16 %v3978, %v3971
    %v4784 = vpack.c.b16 %v3979, %v3972
    %v4785 = vpack.c.b16 %v3980, %v3973
    %v4786 = vpack.c.b16 %v3988, %v3981
    %v4787 = vpack.c.b16 %v3989, %v3982
    %v4788 = vpack.c.b16 %v3990, %v3983
    %v4789 = vpack.c.b16 %v3991, %v3984
    %v4790 = vpack.c.b16 %v3992, %v3985
    %v4791 = vpack.c.b16 %v3993, %v3986
    %v4792 = vpack.c.b16 %v3994, %v3987
    %v4793 = vpack.c.b16 %v4002, %v3995
    %v4794 = vpack.c.b16 %v4003, %v3996
    %v4795 = vpack.c.b16 %v4004, %v3997
    %v4796 = vpack.c.b16 %v4005, %v3998
    %v4797 = vpack.c.b16 %v4006, %v3999
    %v4798 = vpack.c.b16 %v4007, %v4000
    %v4799 = vpack.c.b16 %v4008, %v4001
    %v4800 = vpack.c.b16 %v4016, %v4009
    %v4801 = vpack.c.b16 %v4017, %v4010
    %v4802 = vpack.c.b16 %v4018, %v4011
    %v4803 = vpack.c.b16 %v4019, %v4012
    %v4804 = vpack.c.b16 %v4020, %v4013
    %v4805 = vpack.c.b16 %v4021, %v4014
    %v4806 = vpack.c.b16 %v4022, %v4015
    %v4807 = vpack.c.b16 %v4030, %v4023
    %v4808 = vpack.c.b16 %v4031, %v4024
    %v4809 = vpack.c.b16 %v4032, %v4025
    %v4810 = vpack.c.b16 %v4033, %v4026
    %v4811 = vpack.c.b16 %v4034, %v4027
    %v4812 = vpack.c.b16 %v4035, %v4028
    %v4813 = vpack.c.b16 %v4036, %v4029
    %v4814 = vpack.c.b16 %v4044, %v4037
    %v4815 = vpack.c.b16 %v4045, %v4038
    %v4816 = vpack.c.b16 %v4046, %v4039
    %v4817 = vpack.c.b16 %v4047, %v4040
    %v4818 = vpack.c.b16 %v4048, %v4041
    %v4819 = vpack.c.b16 %v4049, %v4042
    %v4820 = vpack.c.b16 %v4050, %v4043
    %v4821 = vpack.c.b16 %v4058, %v4051
    %v4822 = vpack.c.b16 %v4059, %v4052
    %v4823 = vpack.c.b16 %v4060, %v4053
    %v4824 = vpack.c.b16 %v4061, %v4054
    %v4825 = vpack.c.b16 %v4062, %v4055
    %v4826 = vpack.c.b16 %v4063, %v4056
    %v4827 = vpack.c.b16 %v4064, %v4057
    %v4828 = vpack.c.b16 %v4072, %v4065
    %v4829 = vpack.c.b16 %v4073, %v4066
    %v4830 = vpack.c.b16 %v4074, %v4067
    %v4831 = vpack.c.b16 %v4075, %v4068
    %v4832 = vpack.c.b16 %v4076, %v4069
    %v4833 = vpack.c.b16 %v4077, %v4070
    %v4834 = vpack.c.b16 %v4078, %v4071
    %v4835 = vpack.c.b16 %v4086, %v4079
    %v4836 = vpack.c.b16 %v4087, %v4080
    %v4837 = vpack.c.b16 %v4088, %v4081
    %v4838 = vpack.c.b16 %v4089, %v4082
    %v4839 = vpack.c.b16 %v4090, %v4083
    %v4840 = vpack.c.b16 %v4091, %v4084
    %v4841 = vpack.c.b16 %v4092, %v4085
    %v4842 = vpack.c.b16 %v4100, %v4093
    %v4843 = vpack.c.b16 %v4101, %v4094
    %v4844 = vpack.c.b16 %v4102, %v4095
    %v4845 = vpack.c.b16 %v4103, %v4096
    %v4846 = vpack.c.b16 %v4104, %v4097
    %v4847 = vpack.c.b16 %v4105, %v4098
    %v4848 = vpack.c.b16 %v4106, %v4099
    %v4849 = vpack.c.b16 %v4114, %v4107
    %v4850 = vpack.c.b16 %v4115, %v4108
    %v4851 = vpack.c.b16 %v4116, %v4109
    %v4852 = vpack.c.b16 %v4117, %v4110
    %v4853 = vpack.c.b16 %v4118, %v4111
    %v4854 = vpack.c.b16 %v4119, %v4112
    %v4855 = vpack.c.b16 %v4120, %v4113
    %v4856 = vpack.c.b16 %v4128, %v4121
    %v4857 = vpack.c.b16 %v4129, %v4122
    %v4858 = vpack.c.b16 %v4130, %v4123
    %v4859 = vpack.c.b16 %v4131, %v4124
    %v4860 = vpack.c.b16 %v4132, %v4125
    %v4861 = vpack.c.b16 %v4133, %v4126
    %v4862 = vpack.c.b16 %v4134, %v4127
    %v4863 = vpack.c.b16 %v4142, %v4135
    %v4864 = vpack.c.b16 %v4143, %v4136
    %v4865 = vpack.c.b16 %v4144, %v4137
    %v4866 = vpack.c.b16 %v4145, %v4138
    %v4867 = vpack.c.b16 %v4146, %v4139
    %v4868 = vpack.c.b16 %v4147, %v4140
    %v4869 = vpack.c.b16 %v4148, %v4141
    %v4870 = vpack.c.b16 %v4156, %v4149
    %v4871 = vpack.c.b16 %v4157, %v4150
    %v4872 = vpack.c.b16 %v4158, %v4151
    %v4873 = vpack.c.b16 %v4159, %v4152
    %v4874 = vpack.c.b16 %v4160, %v4153
    %v4875 = vpack.c.b16 %v4161, %v4154
    %v4876 = vpack.c.b16 %v4162, %v4155
    %v4877 = vpack.c.b16 %v4170, %v4163
    %v4878 = vpack.c.b16 %v4171, %v4164
    %v4879 = vpack.c.b16 %v4172, %v4165
    %v4880 = vpack.c.b16 %v4173, %v4166
    %v4881 = vpack.c.b16 %v4174, %v4167
    %v4882 = vpack.c.b16 %v4175, %v4168
    %v4883 = vpack.c.b16 %v4176, %v4169
    %v4884 = vpack.c.b16 %v4184, %v4177
    %v4885 = vpack.c.b16 %v4185, %v4178
    %v4886 = vpack.c.b16 %v4186, %v4179
    %v4887 = vpack.c.b16 %v4187, %v4180
    %v4888 = vpack.c.b16 %v4188, %v4181
    %v4889 = vpack.c.b16 %v4189, %v4182
    %v4890 = vpack.c.b16 %v4190, %v4183
    %v4891 = vpack.c.b16 %v4198, %v4191
    %v4892 = vpack.c.b16 %v4199, %v4192
    %v4893 = vpack.c.b16 %v4200, %v4193
    %v4894 = vpack.c.b16 %v4201, %v4194
    %v4895 = vpack.c.b16 %v4202, %v4195
    %v4896 = vpack.c.b16 %v4203, %v4196
    %v4897 = vpack.c.b16 %v4204, %v4197
    %v4898 = vpack.c.b16 %v4212, %v4205
    %v4899 = vpack.c.b16 %v4213, %v4206
    %v4900 = vpack.c.b16 %v4214, %v4207
    %v4901 = vpack.c.b16 %v4215, %v4208
    %v4902 = vpack.c.b16 %v4216, %v4209
    %v4903 = vpack.c.b16 %v4217, %v4210
    %v4904 = vpack.c.b16 %v4218, %v4211
    %v4905 = vpack.c.b16 %v4226, %v4219
    %v4906 = vpack.c.b16 %v4227, %v4220
    %v4907 = vpack.c.b16 %v4228, %v4221
    %v4908 = vpack.c.b16 %v4229, %v4222
    %v4909 = vpack.c.b16 %v4230, %v4223
    %v4910 = vpack.c.b16 %v4231, %v4224
    %v4911 = vpack.c.b16 %v4232, %v4225
    %v4912 = vpack.c.b16 %v4240, %v4233
    %v4913 = vpack.c.b16 %v4241, %v4234
    %v4914 = vpack.c.b16 %v4242, %v4235
    %v4915 = vpack.c.b16 %v4243, %v4236
    %v4916 = vpack.c.b16 %v4244, %v4237
    %v4917 = vpack.c.b16 %v4245, %v4238
    %v4918 = vpack.c.b16 %v4246, %v4239
    %v4919 = vpack.c.b16 %v4254, %v4247
    %v4920 = vpack.c.b16 %v4255, %v4248
    %v4921 = vpack.c.b16 %v4256, %v4249
    %v4922 = vpack.c.b16 %v4257, %v4250
    %v4923 = vpack.c.b16 %v4258, %v4251
    %v4924 = vpack.c.b16 %v4259, %v4252
    %v4925 = vpack.c.b16 %v4260, %v4253
    %v4926 = vpack.c.b16 %v4268, %v4261
    %v4927 = vpack.c.b16 %v4269, %v4262
    %v4928 = vpack.c.b16 %v4270, %v4263
    %v4929 = vpack.c.b16 %v4271, %v4264
    %v4930 = vpack.c.b16 %v4272, %v4265
    %v4931 = vpack.c.b16 %v4273, %v4266
    %v4932 = vpack.c.b16 %v4274, %v4267
    %v4933 = vpack.c.b16 %v4282, %v4275
    %v4934 = vpack.c.b16 %v4283, %v4276
    %v4935 = vpack.c.b16 %v4284, %v4277
    %v4936 = vpack.c.b16 %v4285, %v4278
    %v4937 = vpack.c.b16 %v4286, %v4279
    %v4938 = vpack.c.b16 %v4287, %v4280
    %v4939 = vpack.c.b16 %v4288, %v4281
    %v4940 = vpack.c.b16 %v4296, %v4289
    %v4941 = vpack.c.b16 %v4297, %v4290
    %v4942 = vpack.c.b16 %v4298, %v4291
    %v4943 = vpack.c.b16 %v4299, %v4292
    %v4944 = vpack.c.b16 %v4300, %v4293
    %v4945 = vpack.c.b16 %v4301, %v4294
    %v4946 = vpack.c.b16 %v4302, %v4295
    %v4947 = vpack.c.b16 %v4310, %v4303
    %v4948 = vpack.c.b16 %v4311, %v4304
    %v4949 = vpack.c.b16 %v4312, %v4305
    %v4950 = vpack.c.b16 %v4313, %v4306
    %v4951 = vpack.c.b16 %v4314, %v4307
    %v4952 = vpack.c.b16 %v4315, %v4308
    %v4953 = vpack.c.b16 %v4316, %v4309
    %v4954 = vpack.c.b16 %v4324, %v4317
    %v4955 = vpack.c.b16 %v4325, %v4318
    %v4956 = vpack.c.b16 %v4326, %v4319
    %v4957 = vpack.c.b16 %v4327, %v4320
    %v4958 = vpack.c.b16 %v4328, %v4321
    %v4959 = vpack.c.b16 %v4329, %v4322
    %v4960 = vpack.c.b16 %v4330, %v4323
    %v4961 = vpack.c.b16 %v4338, %v4331
    %v4962 = vpack.c.b16 %v4339, %v4332
    %v4963 = vpack.c.b16 %v4340, %v4333
    %v4964 = vpack.c.b16 %v4341, %v4334
    %v4965 = vpack.c.b16 %v4342, %v4335
    %v4966 = vpack.c.b16 %v4343, %v4336
    %v4967 = vpack.c.b16 %v4344, %v4337
    %v4968 = vpack.c.b16 %v4352, %v4345
    %v4969 = vpack.c.b16 %v4353, %v4346
    %v4970 = vpack.c.b16 %v4354, %v4347
    %v4971 = vpack.c.b16 %v4355, %v4348
    %v4972 = vpack.c.b16 %v4356, %v4349
    %v4973 = vpack.c.b16 %v4357, %v4350
    %v4974 = vpack.c.b16 %v4358, %v4351
    %v4975 = vpack.c.b16 %v4366, %v4359
    %v4976 = vpack.c.b16 %v4367, %v4360
    %v4977 = vpack.c.b16 %v4368, %v4361
    %v4978 = vpack.c.b16 %v4369, %v4362
    %v4979 = vpack.c.b16 %v4370, %v4363
    %v4980 = vpack.c.b16 %v4371, %v4364
    %v4981 = vpack.c.b16 %v4372, %v4365
    %v4982 = vpack.c.b16 %v4380, %v4373
    %v4983 = vpack.c.b16 %v4381, %v4374
    %v4984 = vpack.c.b16 %v4382, %v4375
    %v4985 = vpack.c.b16 %v4383, %v4376
    %v4986 = vpack.c.b16 %v4384, %v4377
    %v4987 = vpack.c.b16 %v4385, %v4378
    %v4988 = vpack.c.b16 %v4386, %v4379
    %v4989 = vpack.c.b16 %v4394, %v4387
    %v4990 = vpack.c.b16 %v4395, %v4388
    %v4991 = vpack.c.b16 %v4396, %v4389
    %v4992 = vpack.c.b16 %v4397, %v4390
    %v4993 = vpack.c.b16 %v4398, %v4391
    %v4994 = vpack.c.b16 %v4399, %v4392
    %v4995 = vpack.c.b16 %v4400, %v4393
    %v4996 = vpack.c.b16 %v4408, %v4401
    %v4997 = vpack.c.b16 %v4409, %v4402
    %v4998 = vpack.c.b16 %v4410, %v4403
    %v4999 = vpack.c.b16 %v4411, %v4404
    %v5000 = vpack.c.b16 %v4412, %v4405
    %v5001 = vpack.c.b16 %v4413, %v4406
    %v5002 = vpack.c.b16 %v4414, %v4407
    %v5003 = vpack.c.b16 %v4422, %v4415
    %v5004 = vpack.c.b16 %v4423, %v4416
    %v5005 = vpack.c.b16 %v4424, %v4417
    %v5006 = vpack.c.b16 %v4425, %v4418
    %v5007 = vpack.c.b16 %v4426, %v4419
    %v5008 = vpack.c.b16 %v4427, %v4420
    %v5009 = vpack.c.b16 %v4428, %v4421
    %v5010 = vpack.c.b16 %v4436, %v4429
    %v5011 = vpack.c.b16 %v4437, %v4430
    %v5012 = vpack.c.b16 %v4438, %v4431
    %v5013 = vpack.c.b16 %v4439, %v4432
    %v5014 = vpack.c.b16 %v4440, %v4433
    %v5015 = vpack.c.b16 %v4441, %v4434
    %v5016 = vpack.c.b16 %v4442, %v4435
    %v5017 = vpack.c.b16 %v4450, %v4443
    %v5018 = vpack.c.b16 %v4451, %v4444
    %v5019 = vpack.c.b16 %v4452, %v4445
    %v5020 = vpack.c.b16 %v4453, %v4446
    %v5021 = vpack.c.b16 %v4454, %v4447
    %v5022 = vpack.c.b16 %v4455, %v4448
    %v5023 = vpack.c.b16 %v4456, %v4449
    %v5024 = vpack.c.b16 %v4464, %v4457
    %v5025 = vpack.c.b16 %v4465, %v4458
    %v5026 = vpack.c.b16 %v4466, %v4459
    %v5027 = vpack.c.b16 %v4467, %v4460
    %v5028 = vpack.c.b16 %v4468, %v4461
    %v5029 = vpack.c.b16 %v4469, %v4462
    %v5030 = vpack.c.b16 %v4470, %v4463
    %v5031 = vpack.c.b16 %v4478, %v4471
    %v5032 = vpack.c.b16 %v4479, %v4472
    %v5033 = vpack.c.b16 %v4480, %v4473
    %v5034 = vpack.c.b16 %v4481, %v4474
    %v5035 = vpack.c.b16 %v4482, %v4475
    %v5036 = vpack.c.b16 %v4483, %v4476
    %v5037 = vpack.c.b16 %v4484, %v4477
    %v5038 = vpack.c.b16 %v4492, %v4485
    %v5039 = vpack.c.b16 %v4493, %v4486
    %v5040 = vpack.c.b16 %v4494, %v4487
    %v5041 = vpack.c.b16 %v4495, %v4488
    %v5042 = vpack.c.b16 %v4496, %v4489
    %v5043 = vpack.c.b16 %v4497, %v4490
    %v5044 = vpack.c.b16 %v4498, %v4491
    %v5045 = vpack.c.b16 %v4506, %v4499
    %v5046 = vpack.c.b16 %v4507, %v4500
    %v5047 = vpack.c.b16 %v4508, %v4501
    %v5048 = vpack.c.b16 %v4509, %v4502
    %v5049 = vpack.c.b16 %v4510, %v4503
    %v5050 = vpack.c.b16 %v4511, %v4504
    %v5051 = vpack.c.b16 %v4512, %v4505
    %v5052 = vpack.c.b16 %v4520, %v4513
    %v5053 = vpack.c.b16 %v4521, %v4514
    %v5054 = vpack.c.b16 %v4522, %v4515
    %v5055 = vpack.c.b16 %v4523, %v4516
    %v5056 = vpack.c.b16 %v4524, %v4517
    %v5057 = vpack.c.b16 %v4525, %v4518
    %v5058 = vpack.c.b16 %v4526, %v4519
    %v5059 = vpack.c.b16 %v4534, %v4527
    %v5060 = vpack.c.b16 %v4535, %v4528
    %v5061 = vpack.c.b16 %v4536, %v4529
    %v5062 = vpack.c.b16 %v4537, %v4530
    %v5063 = vpack.c.b16 %v4538, %v4531
    %v5064 = vpack.c.b16 %v4539, %v4532
    %v5065 = vpack.c.b16 %v4540, %v4533
    %v5066 = vpack.c.b16 %v4548, %v4541
    %v5067 = vpack.c.b16 %v4549, %v4542
    %v5068 = vpack.c.b16 %v4550, %v4543
    %v5069 = vpack.c.b16 %v4551, %v4544
    %v5070 = vpack.c.b16 %v4552, %v4545
    %v5071 = vpack.c.b16 %v4553, %v4546
    %v5072 = vpack.c.b16 %v4554, %v4547
    %v5073 = vpack.c.b16 %v4562, %v4555
    %v5074 = vpack.c.b16 %v4563, %v4556
    %v5075 = vpack.c.b16 %v4564, %v4557
    %v5076 = vpack.c.b16 %v4565, %v4558
    %v5077 = vpack.c.b16 %v4566, %v4559
    %v5078 = vpack.c.b16 %v4567, %v4560
    %v5079 = vpack.c.b16 %v4568, %v4561
    %v5080 = vpack.c.b16 %v4576, %v4569
    %v5081 = vpack.c.b16 %v4577, %v4570
    %v5082 = vpack.c.b16 %v4578, %v4571
    %v5083 = vpack.c.b16 %v4579, %v4572
    %v5084 = vpack.c.b16 %v4580, %v4573
    %v5085 = vpack.c.b16 %v4581, %v4574
    %v5086 = vpack.c.b16 %v4582, %v4575
    %v5087 = vpack.c.b16 %v4590, %v4583
    %v5088 = vpack.c.b16 %v4591, %v4584
    %v5089 = vpack.c.b16 %v4592, %v4585
    %v5090 = vpack.c.b16 %v4593, %v4586
    %v5091 = vpack.c.b16 %v4594, %v4587
    %v5092 = vpack.c.b16 %v4595, %v4588
    %v5093 = vpack.c.b16 %v4596, %v4589
    %v5094 = vpack.c.b16 %v4604, %v4597
    %v5095 = vpack.c.b16 %v4605, %v4598
    %v5096 = vpack.c.b16 %v4606, %v4599
    %v5097 = vpack.c.b16 %v4607, %v4600
    %v5098 = vpack.c.b16 %v4608, %v4601
    %v5099 = vpack.c.b16 %v4609, %v4602
    %v5100 = vpack.c.b16 %v4610, %v4603
    %v5101 = vpack.c.b16 %v4618, %v4611
    %v5102 = vpack.c.b16 %v4619, %v4612
    %v5103 = vpack.c.b16 %v4620, %v4613
    %v5104 = vpack.c.b16 %v4621, %v4614
    %v5105 = vpack.c.b16 %v4622, %v4615
    %v5106 = vpack.c.b16 %v4623, %v4616
    %v5107 = vpack.c.b16 %v4624, %v4617
    %v5108 = vpack.c.b16 %v4632, %v4625
    %v5109 = vpack.c.b16 %v4633, %v4626
    %v5110 = vpack.c.b16 %v4634, %v4627
    %v5111 = vpack.c.b16 %v4635, %v4628
    %v5112 = vpack.c.b16 %v4636, %v4629
    %v5113 = vpack.c.b16 %v4637, %v4630
    %v5114 = vpack.c.b16 %v4638, %v4631
    %v5115 = vpack.c.b16 %v4646, %v4639
    %v5116 = vpack.c.b16 %v4647, %v4640
    %v5117 = vpack.c.b16 %v4648, %v4641
    %v5118 = vpack.c.b16 %v4649, %v4642
    %v5119 = vpack.c.b16 %v4650, %v4643
    %v5120 = vpack.c.b16 %v4651, %v4644
    %v5121 = vpack.c.b16 %v4652, %v4645
    %v5122 = vpack.c.b16 %v4660, %v4653
    %v5123 = vpack.c.b16 %v4661, %v4654
    %v5124 = vpack.c.b16 %v4662, %v4655
    %v5125 = vpack.c.b16 %v4663, %v4656
    %v5126 = vpack.c.b16 %v4664, %v4657
    %v5127 = vpack.c.b16 %v4665, %v4658
    %v5128 = vpack.c.b16 %v4666, %v4659
    %v5129 = vpack.c.b16 %v4674, %v4667
    %v5130 = vpack.c.b16 %v4675, %v4668
    %v5131 = vpack.c.b16 %v4676, %v4669
    %v5132 = vpack.c.b16 %v4677, %v4670
    %v5133 = vpack.c.b16 %v4678, %v4671
    %v5134 = vpack.c.b16 %v4679, %v4672
    %v5135 = vpack.c.b16 %v4680, %v4673
    %v5136 = vpack.c.b16 %v4688, %v4681
    %v5137 = vpack.c.b16 %v4689, %v4682
    %v5138 = vpack.c.b16 %v4690, %v4683
    %v5139 = vpack.c.b16 %v4691, %v4684
    %v5140 = vpack.c.b16 %v4692, %v4685
    %v5141 = vpack.c.b16 %v4693, %v4686
    %v5142 = vpack.c.b16 %v4694, %v4687
    %5591 = vmatpush.bf16.msra.mxu0 %v4744
    %5592 = vmatpush.bf16.msra.mxu0 %v4737
    %5593 = vmatpush.bf16.msra.mxu0 %v4730
    %5594 = vmatpush.bf16.msra.mxu0 %v4723
    %5595 = vmatpush.bf16.msra.mxu0 %v4716
    %5596 = vmatpush.bf16.msra.mxu0 %v4709
    %5597 = vmatpush.bf16.msra.mxu0 %v4702
    %5598 = vmatpush.bf16.msra.mxu0 %v4695
    %5599 = vmatmul.bf16.gmra.mxu0 %v2751
    %v5600 = vpop.f32.mrf.mxu0
    %v5601 = vadd.f32 %v3273, %v5600
    %v5602 = vpop.f32.mrf.mxu0
    %5603 = vdwg.mxu0
    %5604 = vmatpush.bf16.msra.mxu0 %v4800
    %5605 = vmatpush.bf16.msra.mxu0 %v4793
    %5606 = vmatpush.bf16.msra.mxu0 %v4786
    %5607 = vmatpush.bf16.msra.mxu0 %v4779
    %5608 = vmatpush.bf16.msra.mxu0 %v4772
    %5609 = vmatpush.bf16.msra.mxu0 %v4765
    %5610 = vmatpush.bf16.msra.mxu0 %v4758
    %5611 = vmatpush.bf16.msra.mxu0 %v4751
    %5612 = vmatmul.bf16.gmra.mxu0 %v2752
    %v5613 = vpop.f32.mrf.mxu0
    %v5614 = vadd.f32 %v5601, %v5613
    %v5615 = vpop.f32.mrf.mxu0
    %5616 = vdwg.mxu0
    %5617 = vmatpush.bf16.msra.mxu0 %v4856
    %5618 = vmatpush.bf16.msra.mxu0 %v4849
    %5619 = vmatpush.bf16.msra.mxu0 %v4842
    %5620 = vmatpush.bf16.msra.mxu0 %v4835
    %5621 = vmatpush.bf16.msra.mxu0 %v4828
    %5622 = vmatpush.bf16.msra.mxu0 %v4821
    %5623 = vmatpush.bf16.msra.mxu0 %v4814
    %5624 = vmatpush.bf16.msra.mxu0 %v4807
    %5625 = vmatmul.bf16.gmra.mxu0 %v2753
    %v5626 = vpop.f32.mrf.mxu0
    %v5627 = vadd.f32 %v5614, %v5626
    %v5628 = vpop.f32.mrf.mxu0
    %5629 = vdwg.mxu0
    %5630 = vmatpush.bf16.msra.mxu0 %v4912
    %5631 = vmatpush.bf16.msra.mxu0 %v4905
    %5632 = vmatpush.bf16.msra.mxu0 %v4898
    %5633 = vmatpush.bf16.msra.mxu0 %v4891
    %5634 = vmatpush.bf16.msra.mxu0 %v4884
    %5635 = vmatpush.bf16.msra.mxu0 %v4877
    %5636 = vmatpush.bf16.msra.mxu0 %v4870
    %5637 = vmatpush.bf16.msra.mxu0 %v4863
    %5638 = vmatmul.bf16.gmra.mxu0 %v2754
    %v5639 = vpop.f32.mrf.mxu0
    %v5640 = vadd.f32 %v5627, %v5639
    %v5641 = vpop.f32.mrf.mxu0
    %5642 = vdwg.mxu0
    %5643 = vmatpush.bf16.msra.mxu0 %v4968
    %5644 = vmatpush.bf16.msra.mxu0 %v4961
    %5645 = vmatpush.bf16.msra.mxu0 %v4954
    %5646 = vmatpush.bf16.msra.mxu0 %v4947
    %5647 = vmatpush.bf16.msra.mxu0 %v4940
    %5648 = vmatpush.bf16.msra.mxu0 %v4933
    %5649 = vmatpush.bf16.msra.mxu0 %v4926
    %5650 = vmatpush.bf16.msra.mxu0 %v4919
    %5651 = vmatmul.bf16.gmra.mxu0 %v2755
    %v5652 = vpop.f32.mrf.mxu0
    %v5653 = vadd.f32 %v5640, %v5652
    %v5654 = vpop.f32.mrf.mxu0
    %5655 = vdwg.mxu0
    %5656 = vmatpush.bf16.msra.mxu0 %v5024
    %5657 = vmatpush.bf16.msra.mxu0 %v5017
    %5658 = vmatpush.bf16.msra.mxu0 %v5010
    %5659 = vmatpush.bf16.msra.mxu0 %v5003
    %5660 = vmatpush.bf16.msra.mxu0 %v4996
    %5661 = vmatpush.bf16.msra.mxu0 %v4989
    %5662 = vmatpush.bf16.msra.mxu0 %v4982
    %5663 = vmatpush.bf16.msra.mxu0 %v4975
    %5664 = vmatmul.bf16.gmra.mxu0 %v2756
    %v5665 = vpop.f32.mrf.mxu0
    %v5666 = vadd.f32 %v5653, %v5665
    %v5667 = vpop.f32.mrf.mxu0
    %5668 = vdwg.mxu0
    %5669 = vmatpush.bf16.msra.mxu0 %v5080
    %5670 = vmatpush.bf16.msra.mxu0 %v5073
    %5671 = vmatpush.bf16.msra.mxu0 %v5066
    %5672 = vmatpush.bf16.msra.mxu0 %v5059
    %5673 = vmatpush.bf16.msra.mxu0 %v5052
    %5674 = vmatpush.bf16.msra.mxu0 %v5045
    %5675 = vmatpush.bf16.msra.mxu0 %v5038
    %5676 = vmatpush.bf16.msra.mxu0 %v5031
    %5677 = vmatmul.bf16.gmra.mxu0 %v2757
    %v5678 = vpop.f32.mrf.mxu0
    %v5679 = vadd.f32 %v5666, %v5678
    %v5680 = vpop.f32.mrf.mxu0
    %5681 = vdwg.mxu0
    %5682 = vmatpush.bf16.msra.mxu0 %v5136
    %5683 = vmatpush.bf16.msra.mxu0 %v5129
    %5684 = vmatpush.bf16.msra.mxu0 %v5122
    %5685 = vmatpush.bf16.msra.mxu0 %v5115
    %5686 = vmatpush.bf16.msra.mxu0 %v5108
    %5687 = vmatpush.bf16.msra.mxu0 %v5101
    %5688 = vmatpush.bf16.msra.mxu0 %v5094
    %5689 = vmatpush.bf16.msra.mxu0 %v5087
    %5690 = vmatmul.bf16.gmra.mxu0 %v2758
    %v5691 = vpop.f32.mrf.mxu0
    %v5692 = vadd.f32 %v5679, %v5691
    %v5693 = vpop.f32.mrf.mxu0
    %5694 = vdwg.mxu0
    %5695 = vmatpush.bf16.msra.mxu0 %v4745
    %5696 = vmatpush.bf16.msra.mxu0 %v4738
    %5697 = vmatpush.bf16.msra.mxu0 %v4731
    %5698 = vmatpush.bf16.msra.mxu0 %v4724
    %5699 = vmatpush.bf16.msra.mxu0 %v4717
    %5700 = vmatpush.bf16.msra.mxu0 %v4710
    %5701 = vmatpush.bf16.msra.mxu0 %v4703
    %5702 = vmatpush.bf16.msra.mxu0 %v4696
    %5703 = vmatmul.bf16.gmra.mxu0 %v2751
    %v5704 = vpop.f32.mrf.mxu0
    %v5705 = vadd.f32 %v3274, %v5704
    %v5706 = vpop.f32.mrf.mxu0
    %5707 = vdwg.mxu0
    %5708 = vmatpush.bf16.msra.mxu0 %v4801
    %5709 = vmatpush.bf16.msra.mxu0 %v4794
    %5710 = vmatpush.bf16.msra.mxu0 %v4787
    %5711 = vmatpush.bf16.msra.mxu0 %v4780
    %5712 = vmatpush.bf16.msra.mxu0 %v4773
    %5713 = vmatpush.bf16.msra.mxu0 %v4766
    %5714 = vmatpush.bf16.msra.mxu0 %v4759
    %5715 = vmatpush.bf16.msra.mxu0 %v4752
    %5716 = vmatmul.bf16.gmra.mxu0 %v2752
    %v5717 = vpop.f32.mrf.mxu0
    %v5718 = vadd.f32 %v5705, %v5717
    %v5719 = vpop.f32.mrf.mxu0
    %5720 = vdwg.mxu0
    %5721 = vmatpush.bf16.msra.mxu0 %v4857
    %5722 = vmatpush.bf16.msra.mxu0 %v4850
    %5723 = vmatpush.bf16.msra.mxu0 %v4843
    %5724 = vmatpush.bf16.msra.mxu0 %v4836
    %5725 = vmatpush.bf16.msra.mxu0 %v4829
    %5726 = vmatpush.bf16.msra.mxu0 %v4822
    %5727 = vmatpush.bf16.msra.mxu0 %v4815
    %5728 = vmatpush.bf16.msra.mxu0 %v4808
    %5729 = vmatmul.bf16.gmra.mxu0 %v2753
    %v5730 = vpop.f32.mrf.mxu0
    %v5731 = vadd.f32 %v5718, %v5730
    %v5732 = vpop.f32.mrf.mxu0
    %5733 = vdwg.mxu0
    %5734 = vmatpush.bf16.msra.mxu0 %v4913
    %5735 = vmatpush.bf16.msra.mxu0 %v4906
    %5736 = vmatpush.bf16.msra.mxu0 %v4899
    %5737 = vmatpush.bf16.msra.mxu0 %v4892
    %5738 = vmatpush.bf16.msra.mxu0 %v4885
    %5739 = vmatpush.bf16.msra.mxu0 %v4878
    %5740 = vmatpush.bf16.msra.mxu0 %v4871
    %5741 = vmatpush.bf16.msra.mxu0 %v4864
    %5742 = vmatmul.bf16.gmra.mxu0 %v2754
    %v5743 = vpop.f32.mrf.mxu0
    %v5744 = vadd.f32 %v5731, %v5743
    %v5745 = vpop.f32.mrf.mxu0
    %5746 = vdwg.mxu0
    %5747 = vmatpush.bf16.msra.mxu0 %v4969
    %5748 = vmatpush.bf16.msra.mxu0 %v4962
    %5749 = vmatpush.bf16.msra.mxu0 %v4955
    %5750 = vmatpush.bf16.msra.mxu0 %v4948
    %5751 = vmatpush.bf16.msra.mxu0 %v4941
    %5752 = vmatpush.bf16.msra.mxu0 %v4934
    %5753 = vmatpush.bf16.msra.mxu0 %v4927
    %5754 = vmatpush.bf16.msra.mxu0 %v4920
    %5755 = vmatmul.bf16.gmra.mxu0 %v2755
    %v5756 = vpop.f32.mrf.mxu0
    %v5757 = vadd.f32 %v5744, %v5756
    %v5758 = vpop.f32.mrf.mxu0
    %5759 = vdwg.mxu0
    %5760 = vmatpush.bf16.msra.mxu0 %v5025
    %5761 = vmatpush.bf16.msra.mxu0 %v5018
    %5762 = vmatpush.bf16.msra.mxu0 %v5011
    %5763 = vmatpush.bf16.msra.mxu0 %v5004
    %5764 = vmatpush.bf16.msra.mxu0 %v4997
    %5765 = vmatpush.bf16.msra.mxu0 %v4990
    %5766 = vmatpush.bf16.msra.mxu0 %v4983
    %5767 = vmatpush.bf16.msra.mxu0 %v4976
    %5768 = vmatmul.bf16.gmra.mxu0 %v2756
    %v5769 = vpop.f32.mrf.mxu0
    %v5770 = vadd.f32 %v5757, %v5769
    %v5771 = vpop.f32.mrf.mxu0
    %5772 = vdwg.mxu0
    %5773 = vmatpush.bf16.msra.mxu0 %v5081
    %5774 = vmatpush.bf16.msra.mxu0 %v5074
    %5775 = vmatpush.bf16.msra.mxu0 %v5067
    %5776 = vmatpush.bf16.msra.mxu0 %v5060
    %5777 = vmatpush.bf16.msra.mxu0 %v5053
    %5778 = vmatpush.bf16.msra.mxu0 %v5046
    %5779 = vmatpush.bf16.msra.mxu0 %v5039
    %5780 = vmatpush.bf16.msra.mxu0 %v5032
    %5781 = vmatmul.bf16.gmra.mxu0 %v2757
    %v5782 = vpop.f32.mrf.mxu0
    %v5783 = vadd.f32 %v5770, %v5782
    %v5784 = vpop.f32.mrf.mxu0
    %5785 = vdwg.mxu0
    %5786 = vmatpush.bf16.msra.mxu0 %v5137
    %5787 = vmatpush.bf16.msra.mxu0 %v5130
    %5788 = vmatpush.bf16.msra.mxu0 %v5123
    %5789 = vmatpush.bf16.msra.mxu0 %v5116
    %5790 = vmatpush.bf16.msra.mxu0 %v5109
    %5791 = vmatpush.bf16.msra.mxu0 %v5102
    %5792 = vmatpush.bf16.msra.mxu0 %v5095
    %5793 = vmatpush.bf16.msra.mxu0 %v5088
    %5794 = vmatmul.bf16.gmra.mxu0 %v2758
    %v5795 = vpop.f32.mrf.mxu0
    %v5796 = vadd.f32 %v5783, %v5795
    %v5797 = vpop.f32.mrf.mxu0
    %5798 = vdwg.mxu0
    %5799 = vmatpush.bf16.msra.mxu0 %v4746
    %5800 = vmatpush.bf16.msra.mxu0 %v4739
    %5801 = vmatpush.bf16.msra.mxu0 %v4732
    %5802 = vmatpush.bf16.msra.mxu0 %v4725
    %5803 = vmatpush.bf16.msra.mxu0 %v4718
    %5804 = vmatpush.bf16.msra.mxu0 %v4711
    %5805 = vmatpush.bf16.msra.mxu0 %v4704
    %5806 = vmatpush.bf16.msra.mxu0 %v4697
    %5807 = vmatmul.bf16.gmra.mxu0 %v2751
    %v5808 = vpop.f32.mrf.mxu0
    %v5809 = vadd.f32 %v3275, %v5808
    %v5810 = vpop.f32.mrf.mxu0
    %5811 = vdwg.mxu0
    %5812 = vmatpush.bf16.msra.mxu0 %v4802
    %5813 = vmatpush.bf16.msra.mxu0 %v4795
    %5814 = vmatpush.bf16.msra.mxu0 %v4788
    %5815 = vmatpush.bf16.msra.mxu0 %v4781
    %5816 = vmatpush.bf16.msra.mxu0 %v4774
    %5817 = vmatpush.bf16.msra.mxu0 %v4767
    %5818 = vmatpush.bf16.msra.mxu0 %v4760
    %5819 = vmatpush.bf16.msra.mxu0 %v4753
    %5820 = vmatmul.bf16.gmra.mxu0 %v2752
    %v5821 = vpop.f32.mrf.mxu0
    %v5822 = vadd.f32 %v5809, %v5821
    %v5823 = vpop.f32.mrf.mxu0
    %5824 = vdwg.mxu0
    %5825 = vmatpush.bf16.msra.mxu0 %v4858
    %5826 = vmatpush.bf16.msra.mxu0 %v4851
    %5827 = vmatpush.bf16.msra.mxu0 %v4844
    %5828 = vmatpush.bf16.msra.mxu0 %v4837
    %5829 = vmatpush.bf16.msra.mxu0 %v4830
    %5830 = vmatpush.bf16.msra.mxu0 %v4823
    %5831 = vmatpush.bf16.msra.mxu0 %v4816
    %5832 = vmatpush.bf16.msra.mxu0 %v4809
    %5833 = vmatmul.bf16.gmra.mxu0 %v2753
    %v5834 = vpop.f32.mrf.mxu0
    %v5835 = vadd.f32 %v5822, %v5834
    %v5836 = vpop.f32.mrf.mxu0
    %5837 = vdwg.mxu0
    %5838 = vmatpush.bf16.msra.mxu0 %v4914
    %5839 = vmatpush.bf16.msra.mxu0 %v4907
    %5840 = vmatpush.bf16.msra.mxu0 %v4900
    %5841 = vmatpush.bf16.msra.mxu0 %v4893
    %5842 = vmatpush.bf16.msra.mxu0 %v4886
    %5843 = vmatpush.bf16.msra.mxu0 %v4879
    %5844 = vmatpush.bf16.msra.mxu0 %v4872
    %5845 = vmatpush.bf16.msra.mxu0 %v4865
    %5846 = vmatmul.bf16.gmra.mxu0 %v2754
    %v5847 = vpop.f32.mrf.mxu0
    %v5848 = vadd.f32 %v5835, %v5847
    %v5849 = vpop.f32.mrf.mxu0
    %5850 = vdwg.mxu0
    %5851 = vmatpush.bf16.msra.mxu0 %v4970
    %5852 = vmatpush.bf16.msra.mxu0 %v4963
    %5853 = vmatpush.bf16.msra.mxu0 %v4956
    %5854 = vmatpush.bf16.msra.mxu0 %v4949
    %5855 = vmatpush.bf16.msra.mxu0 %v4942
    %5856 = vmatpush.bf16.msra.mxu0 %v4935
    %5857 = vmatpush.bf16.msra.mxu0 %v4928
    %5858 = vmatpush.bf16.msra.mxu0 %v4921
    %5859 = vmatmul.bf16.gmra.mxu0 %v2755
    %v5860 = vpop.f32.mrf.mxu0
    %v5861 = vadd.f32 %v5848, %v5860
    %v5862 = vpop.f32.mrf.mxu0
    %5863 = vdwg.mxu0
    %5864 = vmatpush.bf16.msra.mxu0 %v5026
    %5865 = vmatpush.bf16.msra.mxu0 %v5019
    %5866 = vmatpush.bf16.msra.mxu0 %v5012
    %5867 = vmatpush.bf16.msra.mxu0 %v5005
    %5868 = vmatpush.bf16.msra.mxu0 %v4998
    %5869 = vmatpush.bf16.msra.mxu0 %v4991
    %5870 = vmatpush.bf16.msra.mxu0 %v4984
    %5871 = vmatpush.bf16.msra.mxu0 %v4977
    %5872 = vmatmul.bf16.gmra.mxu0 %v2756
    %v5873 = vpop.f32.mrf.mxu0
    %v5874 = vadd.f32 %v5861, %v5873
    %v5875 = vpop.f32.mrf.mxu0
    %5876 = vdwg.mxu0
    %5877 = vmatpush.bf16.msra.mxu0 %v5082
    %5878 = vmatpush.bf16.msra.mxu0 %v5075
    %5879 = vmatpush.bf16.msra.mxu0 %v5068
    %5880 = vmatpush.bf16.msra.mxu0 %v5061
    %5881 = vmatpush.bf16.msra.mxu0 %v5054
    %5882 = vmatpush.bf16.msra.mxu0 %v5047
    %5883 = vmatpush.bf16.msra.mxu0 %v5040
    %5884 = vmatpush.bf16.msra.mxu0 %v5033
    %5885 = vmatmul.bf16.gmra.mxu0 %v2757
    %v5886 = vpop.f32.mrf.mxu0
    %v5887 = vadd.f32 %v5874, %v5886
    %v5888 = vpop.f32.mrf.mxu0
    %5889 = vdwg.mxu0
    %5890 = vmatpush.bf16.msra.mxu0 %v5138
    %5891 = vmatpush.bf16.msra.mxu0 %v5131
    %5892 = vmatpush.bf16.msra.mxu0 %v5124
    %5893 = vmatpush.bf16.msra.mxu0 %v5117
    %5894 = vmatpush.bf16.msra.mxu0 %v5110
    %5895 = vmatpush.bf16.msra.mxu0 %v5103
    %5896 = vmatpush.bf16.msra.mxu0 %v5096
    %5897 = vmatpush.bf16.msra.mxu0 %v5089
    %5898 = vmatmul.bf16.gmra.mxu0 %v2758
    %v5899 = vpop.f32.mrf.mxu0
    %v5900 = vadd.f32 %v5887, %v5899
    %v5901 = vpop.f32.mrf.mxu0
    %5902 = vdwg.mxu0
    %5903 = vmatpush.bf16.msra.mxu0 %v4747
    %5904 = vmatpush.bf16.msra.mxu0 %v4740
    %5905 = vmatpush.bf16.msra.mxu0 %v4733
    %5906 = vmatpush.bf16.msra.mxu0 %v4726
    %5907 = vmatpush.bf16.msra.mxu0 %v4719
    %5908 = vmatpush.bf16.msra.mxu0 %v4712
    %5909 = vmatpush.bf16.msra.mxu0 %v4705
    %5910 = vmatpush.bf16.msra.mxu0 %v4698
    %5911 = vmatmul.bf16.gmra.mxu0 %v2751
    %v5912 = vpop.f32.mrf.mxu0
    %v5913 = vadd.f32 %v3276, %v5912
    %v5914 = vpop.f32.mrf.mxu0
    %5915 = vdwg.mxu0
    %5916 = vmatpush.bf16.msra.mxu0 %v4803
    %5917 = vmatpush.bf16.msra.mxu0 %v4796
    %5918 = vmatpush.bf16.msra.mxu0 %v4789
    %5919 = vmatpush.bf16.msra.mxu0 %v4782
    %5920 = vmatpush.bf16.msra.mxu0 %v4775
    %5921 = vmatpush.bf16.msra.mxu0 %v4768
    %5922 = vmatpush.bf16.msra.mxu0 %v4761
    %5923 = vmatpush.bf16.msra.mxu0 %v4754
    %5924 = vmatmul.bf16.gmra.mxu0 %v2752
    %v5925 = vpop.f32.mrf.mxu0
    %v5926 = vadd.f32 %v5913, %v5925
    %v5927 = vpop.f32.mrf.mxu0
    %5928 = vdwg.mxu0
    %5929 = vmatpush.bf16.msra.mxu0 %v4859
    %5930 = vmatpush.bf16.msra.mxu0 %v4852
    %5931 = vmatpush.bf16.msra.mxu0 %v4845
    %5932 = vmatpush.bf16.msra.mxu0 %v4838
    %5933 = vmatpush.bf16.msra.mxu0 %v4831
    %5934 = vmatpush.bf16.msra.mxu0 %v4824
    %5935 = vmatpush.bf16.msra.mxu0 %v4817
    %5936 = vmatpush.bf16.msra.mxu0 %v4810
    %5937 = vmatmul.bf16.gmra.mxu0 %v2753
    %v5938 = vpop.f32.mrf.mxu0
    %v5939 = vadd.f32 %v5926, %v5938
    %v5940 = vpop.f32.mrf.mxu0
    %5941 = vdwg.mxu0
    %5942 = vmatpush.bf16.msra.mxu0 %v4915
    %5943 = vmatpush.bf16.msra.mxu0 %v4908
    %5944 = vmatpush.bf16.msra.mxu0 %v4901
    %5945 = vmatpush.bf16.msra.mxu0 %v4894
    %5946 = vmatpush.bf16.msra.mxu0 %v4887
    %5947 = vmatpush.bf16.msra.mxu0 %v4880
    %5948 = vmatpush.bf16.msra.mxu0 %v4873
    %5949 = vmatpush.bf16.msra.mxu0 %v4866
    %5950 = vmatmul.bf16.gmra.mxu0 %v2754
    %v5951 = vpop.f32.mrf.mxu0
    %v5952 = vadd.f32 %v5939, %v5951
    %v5953 = vpop.f32.mrf.mxu0
    %5954 = vdwg.mxu0
    %5955 = vmatpush.bf16.msra.mxu0 %v4971
    %5956 = vmatpush.bf16.msra.mxu0 %v4964
    %5957 = vmatpush.bf16.msra.mxu0 %v4957
    %5958 = vmatpush.bf16.msra.mxu0 %v4950
    %5959 = vmatpush.bf16.msra.mxu0 %v4943
    %5960 = vmatpush.bf16.msra.mxu0 %v4936
    %5961 = vmatpush.bf16.msra.mxu0 %v4929
    %5962 = vmatpush.bf16.msra.mxu0 %v4922
    %5963 = vmatmul.bf16.gmra.mxu0 %v2755
    %v5964 = vpop.f32.mrf.mxu0
    %v5965 = vadd.f32 %v5952, %v5964
    %v5966 = vpop.f32.mrf.mxu0
    %5967 = vdwg.mxu0
    %5968 = vmatpush.bf16.msra.mxu0 %v5027
    %5969 = vmatpush.bf16.msra.mxu0 %v5020
    %5970 = vmatpush.bf16.msra.mxu0 %v5013
    %5971 = vmatpush.bf16.msra.mxu0 %v5006
    %5972 = vmatpush.bf16.msra.mxu0 %v4999
    %5973 = vmatpush.bf16.msra.mxu0 %v4992
    %5974 = vmatpush.bf16.msra.mxu0 %v4985
    %5975 = vmatpush.bf16.msra.mxu0 %v4978
    %5976 = vmatmul.bf16.gmra.mxu0 %v2756
    %v5977 = vpop.f32.mrf.mxu0
    %v5978 = vadd.f32 %v5965, %v5977
    %v5979 = vpop.f32.mrf.mxu0
    %5980 = vdwg.mxu0
    %5981 = vmatpush.bf16.msra.mxu0 %v5083
    %5982 = vmatpush.bf16.msra.mxu0 %v5076
    %5983 = vmatpush.bf16.msra.mxu0 %v5069
    %5984 = vmatpush.bf16.msra.mxu0 %v5062
    %5985 = vmatpush.bf16.msra.mxu0 %v5055
    %5986 = vmatpush.bf16.msra.mxu0 %v5048
    %5987 = vmatpush.bf16.msra.mxu0 %v5041
    %5988 = vmatpush.bf16.msra.mxu0 %v5034
    %5989 = vmatmul.bf16.gmra.mxu0 %v2757
    %v5990 = vpop.f32.mrf.mxu0
    %v5991 = vadd.f32 %v5978, %v5990
    %v5992 = vpop.f32.mrf.mxu0
    %5993 = vdwg.mxu0
    %5994 = vmatpush.bf16.msra.mxu0 %v5139
    %5995 = vmatpush.bf16.msra.mxu0 %v5132
    %5996 = vmatpush.bf16.msra.mxu0 %v5125
    %5997 = vmatpush.bf16.msra.mxu0 %v5118
    %5998 = vmatpush.bf16.msra.mxu0 %v5111
    %5999 = vmatpush.bf16.msra.mxu0 %v5104
    %6000 = vmatpush.bf16.msra.mxu0 %v5097
    %6001 = vmatpush.bf16.msra.mxu0 %v5090
    %6002 = vmatmul.bf16.gmra.mxu0 %v2758
    %v6003 = vpop.f32.mrf.mxu0
    %v6004 = vadd.f32 %v5991, %v6003
    %v6005 = vpop.f32.mrf.mxu0
    %6006 = vdwg.mxu0
    %6007 = vmatpush.bf16.msra.mxu0 %v4748
    %6008 = vmatpush.bf16.msra.mxu0 %v4741
    %6009 = vmatpush.bf16.msra.mxu0 %v4734
    %6010 = vmatpush.bf16.msra.mxu0 %v4727
    %6011 = vmatpush.bf16.msra.mxu0 %v4720
    %6012 = vmatpush.bf16.msra.mxu0 %v4713
    %6013 = vmatpush.bf16.msra.mxu0 %v4706
    %6014 = vmatpush.bf16.msra.mxu0 %v4699
    %6015 = vmatmul.bf16.gmra.mxu0 %v2751
    %v6016 = vpop.f32.mrf.mxu0
    %v6017 = vadd.f32 %v3277, %v6016
    %v6018 = vpop.f32.mrf.mxu0
    %6019 = vdwg.mxu0
    %6020 = vmatpush.bf16.msra.mxu0 %v4804
    %6021 = vmatpush.bf16.msra.mxu0 %v4797
    %6022 = vmatpush.bf16.msra.mxu0 %v4790
    %6023 = vmatpush.bf16.msra.mxu0 %v4783
    %6024 = vmatpush.bf16.msra.mxu0 %v4776
    %6025 = vmatpush.bf16.msra.mxu0 %v4769
    %6026 = vmatpush.bf16.msra.mxu0 %v4762
    %6027 = vmatpush.bf16.msra.mxu0 %v4755
    %6028 = vmatmul.bf16.gmra.mxu0 %v2752
    %v6029 = vpop.f32.mrf.mxu0
    %v6030 = vadd.f32 %v6017, %v6029
    %v6031 = vpop.f32.mrf.mxu0
    %6032 = vdwg.mxu0
    %6033 = vmatpush.bf16.msra.mxu0 %v4860
    %6034 = vmatpush.bf16.msra.mxu0 %v4853
    %6035 = vmatpush.bf16.msra.mxu0 %v4846
    %6036 = vmatpush.bf16.msra.mxu0 %v4839
    %6037 = vmatpush.bf16.msra.mxu0 %v4832
    %6038 = vmatpush.bf16.msra.mxu0 %v4825
    %6039 = vmatpush.bf16.msra.mxu0 %v4818
    %6040 = vmatpush.bf16.msra.mxu0 %v4811
    %6041 = vmatmul.bf16.gmra.mxu0 %v2753
    %v6042 = vpop.f32.mrf.mxu0
    %v6043 = vadd.f32 %v6030, %v6042
    %v6044 = vpop.f32.mrf.mxu0
    %6045 = vdwg.mxu0
    %6046 = vmatpush.bf16.msra.mxu0 %v4916
    %6047 = vmatpush.bf16.msra.mxu0 %v4909
    %6048 = vmatpush.bf16.msra.mxu0 %v4902
    %6049 = vmatpush.bf16.msra.mxu0 %v4895
    %6050 = vmatpush.bf16.msra.mxu0 %v4888
    %6051 = vmatpush.bf16.msra.mxu0 %v4881
    %6052 = vmatpush.bf16.msra.mxu0 %v4874
    %6053 = vmatpush.bf16.msra.mxu0 %v4867
    %6054 = vmatmul.bf16.gmra.mxu0 %v2754
    %v6055 = vpop.f32.mrf.mxu0
    %v6056 = vadd.f32 %v6043, %v6055
    %v6057 = vpop.f32.mrf.mxu0
    %6058 = vdwg.mxu0
    %6059 = vmatpush.bf16.msra.mxu0 %v4972
    %6060 = vmatpush.bf16.msra.mxu0 %v4965
    %6061 = vmatpush.bf16.msra.mxu0 %v4958
    %6062 = vmatpush.bf16.msra.mxu0 %v4951
    %6063 = vmatpush.bf16.msra.mxu0 %v4944
    %6064 = vmatpush.bf16.msra.mxu0 %v4937
    %6065 = vmatpush.bf16.msra.mxu0 %v4930
    %6066 = vmatpush.bf16.msra.mxu0 %v4923
    %6067 = vmatmul.bf16.gmra.mxu0 %v2755
    %v6068 = vpop.f32.mrf.mxu0
    %v6069 = vadd.f32 %v6056, %v6068
    %v6070 = vpop.f32.mrf.mxu0
    %6071 = vdwg.mxu0
    %6072 = vmatpush.bf16.msra.mxu0 %v5028
    %6073 = vmatpush.bf16.msra.mxu0 %v5021
    %6074 = vmatpush.bf16.msra.mxu0 %v5014
    %6075 = vmatpush.bf16.msra.mxu0 %v5007
    %6076 = vmatpush.bf16.msra.mxu0 %v5000
    %6077 = vmatpush.bf16.msra.mxu0 %v4993
    %6078 = vmatpush.bf16.msra.mxu0 %v4986
    %6079 = vmatpush.bf16.msra.mxu0 %v4979
    %6080 = vmatmul.bf16.gmra.mxu0 %v2756
    %v6081 = vpop.f32.mrf.mxu0
    %v6082 = vadd.f32 %v6069, %v6081
    %v6083 = vpop.f32.mrf.mxu0
    %6084 = vdwg.mxu0
    %6085 = vmatpush.bf16.msra.mxu0 %v5084
    %6086 = vmatpush.bf16.msra.mxu0 %v5077
    %6087 = vmatpush.bf16.msra.mxu0 %v5070
    %6088 = vmatpush.bf16.msra.mxu0 %v5063
    %6089 = vmatpush.bf16.msra.mxu0 %v5056
    %6090 = vmatpush.bf16.msra.mxu0 %v5049
    %6091 = vmatpush.bf16.msra.mxu0 %v5042
    %6092 = vmatpush.bf16.msra.mxu0 %v5035
    %6093 = vmatmul.bf16.gmra.mxu0 %v2757
    %v6094 = vpop.f32.mrf.mxu0
    %v6095 = vadd.f32 %v6082, %v6094
    %v6096 = vpop.f32.mrf.mxu0
    %6097 = vdwg.mxu0
    %6098 = vmatpush.bf16.msra.mxu0 %v5140
    %6099 = vmatpush.bf16.msra.mxu0 %v5133
    %6100 = vmatpush.bf16.msra.mxu0 %v5126
    %6101 = vmatpush.bf16.msra.mxu0 %v5119
    %6102 = vmatpush.bf16.msra.mxu0 %v5112
    %6103 = vmatpush.bf16.msra.mxu0 %v5105
    %6104 = vmatpush.bf16.msra.mxu0 %v5098
    %6105 = vmatpush.bf16.msra.mxu0 %v5091
    %6106 = vmatmul.bf16.gmra.mxu0 %v2758
    %v6107 = vpop.f32.mrf.mxu0
    %v6108 = vadd.f32 %v6095, %v6107
    %v6109 = vpop.f32.mrf.mxu0
    %6110 = vdwg.mxu0
    %6111 = vmatpush.bf16.msra.mxu0 %v4749
    %6112 = vmatpush.bf16.msra.mxu0 %v4742
    %6113 = vmatpush.bf16.msra.mxu0 %v4735
    %6114 = vmatpush.bf16.msra.mxu0 %v4728
    %6115 = vmatpush.bf16.msra.mxu0 %v4721
    %6116 = vmatpush.bf16.msra.mxu0 %v4714
    %6117 = vmatpush.bf16.msra.mxu0 %v4707
    %6118 = vmatpush.bf16.msra.mxu0 %v4700
    %6119 = vmatmul.bf16.gmra.mxu0 %v2751
    %v6120 = vpop.f32.mrf.mxu0
    %v6121 = vadd.f32 %v3278, %v6120
    %v6122 = vpop.f32.mrf.mxu0
    %6123 = vdwg.mxu0
    %6124 = vmatpush.bf16.msra.mxu0 %v4805
    %6125 = vmatpush.bf16.msra.mxu0 %v4798
    %6126 = vmatpush.bf16.msra.mxu0 %v4791
    %6127 = vmatpush.bf16.msra.mxu0 %v4784
    %6128 = vmatpush.bf16.msra.mxu0 %v4777
    %6129 = vmatpush.bf16.msra.mxu0 %v4770
    %6130 = vmatpush.bf16.msra.mxu0 %v4763
    %6131 = vmatpush.bf16.msra.mxu0 %v4756
    %6132 = vmatmul.bf16.gmra.mxu0 %v2752
    %v6133 = vpop.f32.mrf.mxu0
    %v6134 = vadd.f32 %v6121, %v6133
    %v6135 = vpop.f32.mrf.mxu0
    %6136 = vdwg.mxu0
    %6137 = vmatpush.bf16.msra.mxu0 %v4861
    %6138 = vmatpush.bf16.msra.mxu0 %v4854
    %6139 = vmatpush.bf16.msra.mxu0 %v4847
    %6140 = vmatpush.bf16.msra.mxu0 %v4840
    %6141 = vmatpush.bf16.msra.mxu0 %v4833
    %6142 = vmatpush.bf16.msra.mxu0 %v4826
    %6143 = vmatpush.bf16.msra.mxu0 %v4819
    %6144 = vmatpush.bf16.msra.mxu0 %v4812
    %6145 = vmatmul.bf16.gmra.mxu0 %v2753
    %v6146 = vpop.f32.mrf.mxu0
    %v6147 = vadd.f32 %v6134, %v6146
    %v6148 = vpop.f32.mrf.mxu0
    %6149 = vdwg.mxu0
    %6150 = vmatpush.bf16.msra.mxu0 %v4917
    %6151 = vmatpush.bf16.msra.mxu0 %v4910
    %6152 = vmatpush.bf16.msra.mxu0 %v4903
    %6153 = vmatpush.bf16.msra.mxu0 %v4896
    %6154 = vmatpush.bf16.msra.mxu0 %v4889
    %6155 = vmatpush.bf16.msra.mxu0 %v4882
    %6156 = vmatpush.bf16.msra.mxu0 %v4875
    %6157 = vmatpush.bf16.msra.mxu0 %v4868
    %6158 = vmatmul.bf16.gmra.mxu0 %v2754
    %v6159 = vpop.f32.mrf.mxu0
    %v6160 = vadd.f32 %v6147, %v6159
    %v6161 = vpop.f32.mrf.mxu0
    %6162 = vdwg.mxu0
    %6163 = vmatpush.bf16.msra.mxu0 %v4973
    %6164 = vmatpush.bf16.msra.mxu0 %v4966
    %6165 = vmatpush.bf16.msra.mxu0 %v4959
    %6166 = vmatpush.bf16.msra.mxu0 %v4952
    %6167 = vmatpush.bf16.msra.mxu0 %v4945
    %6168 = vmatpush.bf16.msra.mxu0 %v4938
    %6169 = vmatpush.bf16.msra.mxu0 %v4931
    %6170 = vmatpush.bf16.msra.mxu0 %v4924
    %6171 = vmatmul.bf16.gmra.mxu0 %v2755
    %v6172 = vpop.f32.mrf.mxu0
    %v6173 = vadd.f32 %v6160, %v6172
    %v6174 = vpop.f32.mrf.mxu0
    %6175 = vdwg.mxu0
    %6176 = vmatpush.bf16.msra.mxu0 %v5029
    %6177 = vmatpush.bf16.msra.mxu0 %v5022
    %6178 = vmatpush.bf16.msra.mxu0 %v5015
    %6179 = vmatpush.bf16.msra.mxu0 %v5008
    %6180 = vmatpush.bf16.msra.mxu0 %v5001
    %6181 = vmatpush.bf16.msra.mxu0 %v4994
    %6182 = vmatpush.bf16.msra.mxu0 %v4987
    %6183 = vmatpush.bf16.msra.mxu0 %v4980
    %6184 = vmatmul.bf16.gmra.mxu0 %v2756
    %v6185 = vpop.f32.mrf.mxu0
    %v6186 = vadd.f32 %v6173, %v6185
    %v6187 = vpop.f32.mrf.mxu0
    %6188 = vdwg.mxu0
    %6189 = vmatpush.bf16.msra.mxu0 %v5085
    %6190 = vmatpush.bf16.msra.mxu0 %v5078
    %6191 = vmatpush.bf16.msra.mxu0 %v5071
    %6192 = vmatpush.bf16.msra.mxu0 %v5064
    %6193 = vmatpush.bf16.msra.mxu0 %v5057
    %6194 = vmatpush.bf16.msra.mxu0 %v5050
    %6195 = vmatpush.bf16.msra.mxu0 %v5043
    %6196 = vmatpush.bf16.msra.mxu0 %v5036
    %6197 = vmatmul.bf16.gmra.mxu0 %v2757
    %v6198 = vpop.f32.mrf.mxu0
    %v6199 = vadd.f32 %v6186, %v6198
    %v6200 = vpop.f32.mrf.mxu0
    %6201 = vdwg.mxu0
    %6202 = vmatpush.bf16.msra.mxu0 %v5141
    %6203 = vmatpush.bf16.msra.mxu0 %v5134
    %6204 = vmatpush.bf16.msra.mxu0 %v5127
    %6205 = vmatpush.bf16.msra.mxu0 %v5120
    %6206 = vmatpush.bf16.msra.mxu0 %v5113
    %6207 = vmatpush.bf16.msra.mxu0 %v5106
    %6208 = vmatpush.bf16.msra.mxu0 %v5099
    %6209 = vmatpush.bf16.msra.mxu0 %v5092
    %6210 = vmatmul.bf16.gmra.mxu0 %v2758
    %v6211 = vpop.f32.mrf.mxu0
    %v6212 = vadd.f32 %v6199, %v6211
    %v6213 = vpop.f32.mrf.mxu0
    %6214 = vdwg.mxu0
    %6215 = vmatpush.bf16.msra.mxu0 %v4750
    %6216 = vmatpush.bf16.msra.mxu0 %v4743
    %6217 = vmatpush.bf16.msra.mxu0 %v4736
    %6218 = vmatpush.bf16.msra.mxu0 %v4729
    %6219 = vmatpush.bf16.msra.mxu0 %v4722
    %6220 = vmatpush.bf16.msra.mxu0 %v4715
    %6221 = vmatpush.bf16.msra.mxu0 %v4708
    %6222 = vmatpush.bf16.msra.mxu0 %v4701
    %6223 = vmatmul.bf16.gmra.mxu0 %v2751
    %v6224 = vpop.f32.mrf.mxu0
    %v6225 = vadd.f32 %v3279, %v6224
    %v6226 = vpop.f32.mrf.mxu0
    %6227 = vdwg.mxu0
    %6228 = vmatpush.bf16.msra.mxu0 %v4806
    %6229 = vmatpush.bf16.msra.mxu0 %v4799
    %6230 = vmatpush.bf16.msra.mxu0 %v4792
    %6231 = vmatpush.bf16.msra.mxu0 %v4785
    %6232 = vmatpush.bf16.msra.mxu0 %v4778
    %6233 = vmatpush.bf16.msra.mxu0 %v4771
    %6234 = vmatpush.bf16.msra.mxu0 %v4764
    %6235 = vmatpush.bf16.msra.mxu0 %v4757
    %6236 = vmatmul.bf16.gmra.mxu0 %v2752
    %v6237 = vpop.f32.mrf.mxu0
    %v6238 = vadd.f32 %v6225, %v6237
    %v6239 = vpop.f32.mrf.mxu0
    %6240 = vdwg.mxu0
    %6241 = vmatpush.bf16.msra.mxu0 %v4862
    %6242 = vmatpush.bf16.msra.mxu0 %v4855
    %6243 = vmatpush.bf16.msra.mxu0 %v4848
    %6244 = vmatpush.bf16.msra.mxu0 %v4841
    %6245 = vmatpush.bf16.msra.mxu0 %v4834
    %6246 = vmatpush.bf16.msra.mxu0 %v4827
    %6247 = vmatpush.bf16.msra.mxu0 %v4820
    %6248 = vmatpush.bf16.msra.mxu0 %v4813
    %6249 = vmatmul.bf16.gmra.mxu0 %v2753
    %v6250 = vpop.f32.mrf.mxu0
    %v6251 = vadd.f32 %v6238, %v6250
    %v6252 = vpop.f32.mrf.mxu0
    %6253 = vdwg.mxu0
    %6254 = vmatpush.bf16.msra.mxu0 %v4918
    %6255 = vmatpush.bf16.msra.mxu0 %v4911
    %6256 = vmatpush.bf16.msra.mxu0 %v4904
    %6257 = vmatpush.bf16.msra.mxu0 %v4897
    %6258 = vmatpush.bf16.msra.mxu0 %v4890
    %6259 = vmatpush.bf16.msra.mxu0 %v4883
    %6260 = vmatpush.bf16.msra.mxu0 %v4876
    %6261 = vmatpush.bf16.msra.mxu0 %v4869
    %6262 = vmatmul.bf16.gmra.mxu0 %v2754
    %v6263 = vpop.f32.mrf.mxu0
    %v6264 = vadd.f32 %v6251, %v6263
    %v6265 = vpop.f32.mrf.mxu0
    %6266 = vdwg.mxu0
    %6267 = vmatpush.bf16.msra.mxu0 %v4974
    %6268 = vmatpush.bf16.msra.mxu0 %v4967
    %6269 = vmatpush.bf16.msra.mxu0 %v4960
    %6270 = vmatpush.bf16.msra.mxu0 %v4953
    %6271 = vmatpush.bf16.msra.mxu0 %v4946
    %6272 = vmatpush.bf16.msra.mxu0 %v4939
    %6273 = vmatpush.bf16.msra.mxu0 %v4932
    %6274 = vmatpush.bf16.msra.mxu0 %v4925
    %6275 = vmatmul.bf16.gmra.mxu0 %v2755
    %v6276 = vpop.f32.mrf.mxu0
    %v6277 = vadd.f32 %v6264, %v6276
    %v6278 = vpop.f32.mrf.mxu0
    %6279 = vdwg.mxu0
    %6280 = vmatpush.bf16.msra.mxu0 %v5030
    %6281 = vmatpush.bf16.msra.mxu0 %v5023
    %6282 = vmatpush.bf16.msra.mxu0 %v5016
    %6283 = vmatpush.bf16.msra.mxu0 %v5009
    %6284 = vmatpush.bf16.msra.mxu0 %v5002
    %6285 = vmatpush.bf16.msra.mxu0 %v4995
    %6286 = vmatpush.bf16.msra.mxu0 %v4988
    %6287 = vmatpush.bf16.msra.mxu0 %v4981
    %6288 = vmatmul.bf16.gmra.mxu0 %v2756
    %v6289 = vpop.f32.mrf.mxu0
    %v6290 = vadd.f32 %v6277, %v6289
    %v6291 = vpop.f32.mrf.mxu0
    %6292 = vdwg.mxu0
    %6293 = vmatpush.bf16.msra.mxu0 %v5086
    %6294 = vmatpush.bf16.msra.mxu0 %v5079
    %6295 = vmatpush.bf16.msra.mxu0 %v5072
    %6296 = vmatpush.bf16.msra.mxu0 %v5065
    %6297 = vmatpush.bf16.msra.mxu0 %v5058
    %6298 = vmatpush.bf16.msra.mxu0 %v5051
    %6299 = vmatpush.bf16.msra.mxu0 %v5044
    %6300 = vmatpush.bf16.msra.mxu0 %v5037
    %6301 = vmatmul.bf16.gmra.mxu0 %v2757
    %v6302 = vpop.f32.mrf.mxu0
    %v6303 = vadd.f32 %v6290, %v6302
    %v6304 = vpop.f32.mrf.mxu0
    %6305 = vdwg.mxu0
    %6306 = vmatpush.bf16.msra.mxu0 %v5142
    %6307 = vmatpush.bf16.msra.mxu0 %v5135
    %6308 = vmatpush.bf16.msra.mxu0 %v5128
    %6309 = vmatpush.bf16.msra.mxu0 %v5121
    %6310 = vmatpush.bf16.msra.mxu0 %v5114
    %6311 = vmatpush.bf16.msra.mxu0 %v5107
    %6312 = vmatpush.bf16.msra.mxu0 %v5100
    %6313 = vmatpush.bf16.msra.mxu0 %v5093
    %6314 = vmatmul.bf16.gmra.mxu0 %v2758
    %v6315 = vpop.f32.mrf.mxu0
    %v6316 = vadd.f32 %v6303, %v6315
    %v6317 = vpop.f32.mrf.mxu0
    %6318 = vdwg.mxu0
    %v6319 = vtanh.pop %v5692
    %v6320 = vtanh.pop %v5796
    %v6321 = vtanh.pop %v5900
    %v6322 = vtanh.pop %v6004
    %v6323 = vtanh.pop %v6108
    %v6324 = vtanh.pop %v6212
    %v6325 = vtanh.pop %v6316
    %6326 = vst [vmem:[#allocation17] sm:$0xff] %v6319
    %6327 = vst [vmem:[#allocation17 + $0x8] sm:$0xff] %v6320
    %6328 = vst [vmem:[#allocation17 + $0x10] sm:$0xff] %v6321
    %6329 = vst [vmem:[#allocation17 + $0x18] sm:$0xff] %v6322
    %6330 = vst [vmem:[#allocation17 + $0x20] sm:$0xff] %v6323
    %6331 = vst [vmem:[#allocation17 + $0x28] sm:$0xff] %v6324
    %6332 = vst [vmem:[#allocation17 + $0x30] sm:$0xff] %v6325
    // Predicated region
    $region74: #{tpu_custom_call.1} parent=1 // pred_check
      _
    $region75: #{tpu_custom_call.1} parent=1 // pred_check_branch
      %6334 = sbr.rel (0) target = $region77
    $region76: #{tpu_custom_call.1} parent=1 // pred_region
      %6336 = vsyncadd [#allocation4], 0
      %s6338 = sshll.u32 [#allocation17], 4
      %s6339 = int_to_ptr.vmem [resolvable:$true] %s6338
      %s6340 = sshll.u32 %s9, 4
      %s6341 = int_to_ptr.hbm [resolvable:$true] %s6340
      %6343 = dma.vmem_to_hbm [thread:$0]  %s6339, 896, %s6341, [#allocation4]
    $region77: #{tpu_custom_call.1} parent=1 // pred_fallthru
      _
    // Predicated region
    $region78: #{tpu_custom_call.1} parent=1 // pred_check
      _
    $region79: #{tpu_custom_call.1} parent=1 // pred_check_branch
      %6345 = sbr.rel (0) target = $region81
    $region80: #{tpu_custom_call.1} parent=1 // pred_region
      %6347 = dma.done [#allocation4], 896
    $region81: #{tpu_custom_call.1} parent=1 // pred_fallthru
      _
    %6348 = vsyncpa [#allocation3], 1
    %6349 = vsyncpa [#allocation6], 1
    %6350 = vsyncpa [#allocation9], 1
    %6351 = vsyncpa [#allocation12], 1
    %6352 = vsyncpa [#allocation15], 1
    %6353 = vsyncpa [#allocation4], 1

</llo_original>
